<compile_context>
chip_gen: v7x
topology: tpu7x:2x2x1
jax: 0.10.0
libtpu: 0.0.40
codegen_flags: <defaults>
</compile_context>

<pallas_src>
import functools

import jax
import jax.numpy as jnp
import numpy as np
from jax.experimental import pallas as pl
from jax.experimental.pallas import tpu as pltpu

# ----- fixed (data-driven in the original module) architecture constants -----
E0 = 8            # embedding dim of feature 0 (state == 0)
H1 = 16           # constructor hidden_size           -> rnn1 hidden
FIN = 8           # fnnf2 output width (state 3/4)    -> rnn2 input
H2 = 2 * FIN      # rnn2 hidden
HC = H1 + H2      # fused rnn1(+)rnn2 hidden = 32; also rnnA input/hidden
HA = HC           # rnnA hidden
HH = HA // 2      # fnnR / fnnE / fnnD hidden
NG = 4            # LSTM gates (i, f, g, o)
GW = NG * HC      # 128: all four gates concatenated along the lane axis

# ----- kernel tiling constants -----
T = 16            # sequence length handled by the kernel (fixed)
KIN = 16          # stage-1 input width: [emb(8) | x2(1) | zero-pad(7)]
OUT_LANES = 128   # lane-padded output width (lanes 0..2 = outR, outE, outD)

_PARAM_ORDER = ("w12", "b12", "whh12", "wA", "bA",
                "wfnn", "bfnn", "wout", "bout")


# --------------------------------- kernel ---------------------------------
def _build_kernel(bt):
    rows = T * bt

    def kernel(xin_ref, w12_ref, b12_ref, whh12_ref, wA_ref, bA_ref,
               wfnn_ref, bfnn_ref, wout_ref, bout_ref,
               out_ref, xp12_ref, hAseq_ref):
        # Token rows are time-major: row = t*bt + b_local.

        # -- stage 1: ONE slab matmul for the fused rnn1(+)rnn2 input
        #    projection of all 4 gates (fnnf2 + both W_ih + biases are folded
        #    into w12/b12 host-side).  Lane-dense (rows,128) store to scratch.
        xin = xin_ref[0]                                          # (rows, KIN)
        xp12_ref[...] = (
            jnp.dot(xin, w12_ref[...], preferred_element_type=jnp.float32)
            + b12_ref[...])

        # hoisted loop invariants (don't re-broadcast / re-iota per step)
        lane = jax.lax.broadcasted_iota(jnp.int32, (bt, GW), 1)
        is_g = (lane >= 2 * HC) & (lane < 3 * HC)                 # tanh gate lanes
        bA_row = jnp.broadcast_to(bA_ref[...], (bt, GW))

        def gate_acts(pre):
            # i/f/o via sigmoid(x) = 0.5*tanh(x/2)+0.5 (EUP, divide-free);
            # g via tanh.  Two full-vreg EUP ops + a lane select; gate
            # extraction is static lane slicing (XLU slot).
            sig = 0.5 * jnp.tanh(0.5 * pre) + 0.5
            act = jnp.where(is_g, jnp.tanh(pre), sig)
            return (act[:, 0:HC], act[:, HC:2 * HC],
                    act[:, 2 * HC:3 * HC], act[:, 3 * HC:4 * HC])

        h12 = jnp.zeros((bt, HC), jnp.float32)
        c12 = jnp.zeros((bt, HC), jnp.float32)
        hA = jnp.zeros((bt, HA), jnp.float32)
        cA = jnp.zeros((bt, HA), jnp.float32)

        # -- stages 2-4 interleaved: fused rnn1/rnn2 step t, then rnnA step t.
        for t in range(T):                    # static unroll: T small & fixed
            r = t * bt                        # 8-aligned sublane offset
            # fused rnn1/rnn2: one (bt,32)@(32,128) recurrent matmul
            pre12 = xp12_ref[r:r + bt, :] + jnp.dot(
                h12, whh12_ref[...], preferred_element_type=jnp.float32)
            i, f, g, o = gate_acts(pre12)
            c12 = f * c12 + i * g
            h12 = o * jnp.tanh(c12)

            # rnnA: input projection (from h12_t) and recurrence fused into a
            # single (bt,64)@(64,128) matmul on [h12_t | hA_{t-1}]
            xA = jnp.concatenate([h12, hA], axis=-1)
            preA = jnp.dot(xA, wA_ref[...],
                           preferred_element_type=jnp.float32) + bA_row
            iA, fA, gA, oA = gate_acts(preA)
            cA = fA * cA + iA * gA
            hA = oA * jnp.tanh(cA)
            hAseq_ref[r:r + bt, :] = hA       # aligned 8-row store

        # -- stage 5: the three heads fused into two slab matmuls.  wout is a
        #    lane-padded block-diagonal (48,128) matrix so lanes {0,1,2} of
        #    the result are outR/outE/outD and the store is lane-dense.
        hAs = hAseq_ref[...]                                      # (rows, HA)
        hid = jnp.dot(hAs, wfnn_ref[...],
                      preferred_element_type=jnp.float32) + bfnn_ref[...]
        out_ref[0] = jnp.dot(hid, wout_ref[...],
                             preferred_element_type=jnp.float32) + bout_ref[...]

    return kernel


# --------------------------- host-side weight packing ---------------------------
def pack_params(p):
    """Re-layout PyTorch-style parameters for the kernel. Call ONCE at init."""
    def gsplit(w, h):
        w = np.asarray(w, np.float32)
        return [w[k * h:(k + 1) * h] for k in range(NG)]

    wih1_g = gsplit(p['rnn1_wih'], H1)
    whh1_g = gsplit(p['rnn1_whh'], H1)
    b1_g = gsplit(np.asarray(p['rnn1_bih']) + np.asarray(p['rnn1_bhh']), H1)

    wih2_g = gsplit(p['rnn2_wih'], H2)
    whh2_g = gsplit(p['rnn2_whh'], H2)
    b2_g = gsplit(np.asarray(p['rnn2_bih']) + np.asarray(p['rnn2_bhh']), H2)

    wihA_g = gsplit(p['rnnA_wih'], HA)
    whhA_g = gsplit(p['rnnA_whh'], HA)
    bA_g = gsplit(np.asarray(p['rnnA_bih']) + np.asarray(p['rnnA_bhh']), HA)

    f2w = np.asarray(p['f2_w'], np.float32)[:, 0]       # (FIN,)
    f2b = np.asarray(p['f2_b'], np.float32)             # (FIN,)

    w12 = np.zeros((KIN, GW), np.float32)     # [emb | x2 | pad] -> 4 gates (lanes)
    b12 = np.zeros((1, GW), np.float32)
    whh12 = np.zeros((HC, GW), np.float32)    # block-diagonal fused W_hh
    wA = np.zeros((HC + HA, GW), np.float32)  # [W_ihA ; W_hhA] stacked on K
    bA = np.zeros((1, GW), np.float32)
    for k in range(NG):
        c0 = k * HC
        # gate k lanes: [c0, c0+H1) = rnn1 part, [c0+H1, c0+HC) = rnn2 part
        w12[:E0, c0:c0 + H1] = wih1_g[k].T                  # emb -> rnn1
        w12[E0, c0 + H1:c0 + HC] = f2w @ wih2_g[k].T        # fnnf2 weight folded
        b12[0, c0:c0 + H1] = b1_g[k]
        b12[0, c0 + H1:c0 + HC] = b2_g[k] + f2b @ wih2_g[k].T   # fnnf2 bias folded
        whh12[:H1, c0:c0 + H1] = whh1_g[k].T                # block-diagonal W_hh
        whh12[H1:, c0 + H1:c0 + HC] = whh2_g[k].T
        wA[:HC, c0:c0 + HA] = wihA_g[k].T                   # h12_t input rows
        wA[HC:, c0:c0 + HA] = whhA_g[k].T                   # hA_{t-1} recurrent rows
        bA[0, c0:c0 + HA] = bA_g[k]

    wfnn = np.concatenate([np.asarray(p['fnnR_w']).T,
                           np.asarray(p['fnnE_w']).T,
                           np.asarray(p['fnnD_w']).T], axis=1).astype(np.float32)
    bfnn = np.concatenate([np.asarray(p['fnnR_b']),
                           np.asarray(p['fnnE_b']),
                           np.asarray(p['fnnD_b'])]).astype(np.float32)[None, :]
    wout = np.zeros((3 * HH, OUT_LANES), np.float32)        # lane-padded block diag
    bout = np.zeros((1, OUT_LANES), np.float32)
    wout[0 * HH:1 * HH, 0] = np.asarray(p['outR_w'])[0]
    wout[1 * HH:2 * HH, 1] = np.asarray(p['outE_w'])[0]
    wout[2 * HH:3 * HH, 2] = np.asarray(p['outD_w'])[0]
    bout[0, 0] = np.asarray(p['outR_b'])[0]
    bout[0, 1] = np.asarray(p['outE_b'])[0]
    bout[0, 2] = np.asarray(p['outD_b'])[0]

    packed = dict(w12=w12, b12=b12, whh12=whh12, wA=wA, bA=bA,
                  wfnn=wfnn, bfnn=bfnn, wout=wout, bout=bout)
    return {k: jnp.asarray(v) for k, v in packed.items()}


# --------------------------------- wrapper ---------------------------------
@functools.partial(jax.jit, static_argnames=("bt",))
def multinn_forward(x, emb_table, packed, *, bt=8):
    """x: (B, T, 2) — feature 0 holds integer category ids, feature 1 is continuous."""
    B, Tx, _ = x.shape
    assert Tx == T, "kernel is built for the fixed sequence length T"
    assert bt % 8 == 0 and B % bt == 0, "bt must be a multiple of 8 dividing B"
    nb = B // bt
    rows = T * bt

    # plain-JAX glue (inside jit): embedding gather + stage-1 input assembly
    tok = x[..., 0].astype(jnp.int32)
    emb = emb_table[tok].astype(jnp.float32)                  # (B, T, E0)
    x2 = x[..., 1:2].astype(jnp.float32)                      # (B, T, 1)
    pad = jnp.zeros((B, T, KIN - E0 - 1), jnp.float32)
    xin = jnp.concatenate([emb, x2, pad], axis=-1)            # (B, T, KIN)
    # time-major blocking: (B,T,KIN) -> (nb, rows, KIN), row = t*bt + b_local
    xinb = (xin.reshape(nb, bt, T, KIN).transpose(0, 2, 1, 3)
               .reshape(nb, rows, KIN))

    params = [packed[k] for k in _PARAM_ORDER]

    def full_spec(a):
        nd = a.ndim
        return pl.BlockSpec(a.shape, lambda bb, nd=nd: (0,) * nd)

    in_specs = [pl.BlockSpec((1, rows, KIN), lambda bb: (bb, 0, 0))]
    in_specs += [full_spec(a) for a in params]
    out_spec = pl.BlockSpec((1, rows, OUT_LANES), lambda bb: (bb, 0, 0))

    padded = pl.pallas_call(
        _build_kernel(bt),
        out_shape=jax.ShapeDtypeStruct((nb, rows, OUT_LANES), jnp.float32),
        grid_spec=pltpu.PrefetchScalarGridSpec(
            num_scalar_prefetch=0,
            grid=(nb,),
            in_specs=in_specs,
            out_specs=out_spec,
            scratch_shapes=[
                pltpu.VMEM((rows, GW), jnp.float32),   # xp12: fused input-proj slab
                pltpu.VMEM((rows, HA), jnp.float32),   # hA sequence
            ]),
        compiler_params=pltpu.CompilerParams(
            dimension_semantics=("parallel",)),
    )(xinb, *params)

    # slice the 3 real lanes FIRST, then un-block (cheap transpose)
    out = (padded[..., :3].reshape(nb, T, bt, 3)
                 .transpose(0, 2, 1, 3).reshape(B, T, 3))
    return out, [out[..., 0:1], out[..., 1:2], out[..., 2:3]]


# ----------------- pure-JAX reference (mirrors the PyTorch module) -----------------
def _lstm_ref(x, w_ih, w_hh, b_ih, b_hh):
    bx = x.shape[0]
    h_dim = w_hh.shape[1]

    def step(carry, xt):
        h, c = carry
        gates = xt @ w_ih.T + b_ih + h @ w_hh.T + b_hh
        i, f, g, o = jnp.split(gates, 4, axis=-1)
        i, f, o = jax.nn.sigmoid(i), jax.nn.sigmoid(f), jax.nn.sigmoid(o)
        g = jnp.tanh(g)
        c = f * c + i * g
        h = o * jnp.tanh(c)
        return (h, c), h

    init = (jnp.zeros((bx, h_dim), jnp.float32), jnp.zeros((bx, h_dim), jnp.float32))
    _, hs = jax.lax.scan(step, init, jnp.transpose(x, (1, 0, 2)))
    return jnp.transpose(hs, (1, 0, 2))


def reference_forward(x, emb_table, p):
    tok = x[..., 0].astype(jnp.int32)
    emb = emb_table[tok]                                                   # embed1
    h1 = _lstm_ref(emb, p['rnn1_wih'], p['rnn1_whh'], p['rnn1_bih'], p['rnn1_bhh'])
    xi2 = x[..., 1:2] @ p['f2_w'].T + p['f2_b']                            # fnnf2
    h2 = _lstm_ref(xi2, p['rnn2_wih'], p['rnn2_whh'], p['rnn2_bih'], p['rnn2_bhh'])
    nn_out = jnp.concatenate([h1, h2], axis=-1)
    hA = _lstm_ref(nn_out, p['rnnA_wih'], p['rnnA_whh'], p['rnnA_bih'], p['rnnA_bhh'])
    outR = (hA @ p['fnnR_w'].T + p['fnnR_b']) @ p['outR_w'].T + p['outR_b']
    outE = (hA @ p['fnnE_w'].T + p['fnnE_b']) @ p['outE_w'].T + p['outE_b']
    outD = (hA @ p['fnnD_w'].T + p['fnnD_b']) @ p['outD_w'].T + p['outD_b']
    return jnp.concatenate([outR, outE, outD], axis=-1)


def init_params(key):
    ks = iter(jax.random.split(key, 28))

    def w(shape, scale=0.25):
        return (scale * jax.random.normal(next(ks), shape)).astype(jnp.float32)

    return {
        # feature 0 (state 0): rnn1 = LSTM(E0 -> H1)
        'rnn1_wih': w((4 * H1, E0)), 'rnn1_whh': w((4 * H1, H1)),
        'rnn1_bih': w((4 * H1,), 0.1), 'rnn1_bhh': w((4 * H1,), 0.1),
        # feature 1 (state 3): fnnf2 = Linear(1, FIN), rnn2 = LSTM(FIN -> H2)
        'f2_w': w((FIN, 1)), 'f2_b': w((FIN,), 0.1),
        'rnn2_wih': w((4 * H2, FIN)), 'rnn2_whh': w((4 * H2, H2)),
        'rnn2_bih': w((4 * H2,), 0.1), 'rnn2_bhh': w((4 * H2,), 0.1),
        # rnnA = LSTM(HA -> HA)
        'rnnA_wih': w((4 * HA, HA)), 'rnnA_whh': w((4 * HA, HA)),
        'rnnA_bih': w((4 * HA,), 0.1), 'rnnA_bhh': w((4 * HA,), 0.1),
        # heads
        'fnnR_w': w((HH, HA)), 'fnnR_b': w((HH,), 0.1),
        'outR_w': w((1, HH)), 'outR_b': w((1,), 0.1),
        'fnnE_w': w((HH, HA)), 'fnnE_b': w((HH,), 0.1),
        'outE_w': w((1, HH)), 'outE_b': w((1,), 0.1),
        'fnnD_w': w((HH, HA)), 'fnnD_b': w((HH,), 0.1),
        'outD_w': w((1, HH)), 'outD_b': w((1,), 0.1),
    }


if __name__ == "__main__":
    key = jax.random.PRNGKey(0)
    kp, ke, k0, k1 = jax.random.split(key, 4)

    B = 16
    VOCAB = 32
    # bt=8 -> nb=2 blocks: both v7x TensorCores get work; on single-TC
    # v5e/v6e the extra grid step is ~0.35us (negligible).
    BT = 8

    params = init_params(kp)
    emb_table = (0.5 * jax.random.normal(ke, (VOCAB, E0))).astype(jnp.float32)
    packed = pack_params(params)          # host-side packing, ONCE, off the hot path

    feat0 = jax.random.randint(k0, (B, T), 0, VOCAB).astype(jnp.float32)   # category ids
    feat1 = jax.random.normal(k1, (B, T), dtype=jnp.float32)               # continuous
    x = jnp.stack([feat0, feat1], axis=-1)                                 # (B, T, input_size=2)

    out, head_list = multinn_forward(x, emb_table, packed, bt=BT)
    out = jax.block_until_ready(out)

    ref = reference_forward(x, emb_table, params)
    np.testing.assert_allclose(np.asarray(out), np.asarray(ref), rtol=2e-3, atol=2e-3)
    assert out.shape == (B, T, 3) and len(head_list) == 3
    print("KERNEL_OK")
</pallas_src>

<mosaic_0001>
module attributes {stable_mosaic.version = 11 : i64} {
  func.func @kernel(%arg0: i32, %arg1: memref<1x128x16xf32, #tpu.memory_space<vmem>>, %arg2: memref<16x128xf32, #tpu.memory_space<vmem>>, %arg3: memref<1x128xf32, #tpu.memory_space<vmem>>, %arg4: memref<32x128xf32, #tpu.memory_space<vmem>>, %arg5: memref<64x128xf32, #tpu.memory_space<vmem>>, %arg6: memref<1x128xf32, #tpu.memory_space<vmem>>, %arg7: memref<32x48xf32, #tpu.memory_space<vmem>>, %arg8: memref<1x48xf32, #tpu.memory_space<vmem>>, %arg9: memref<48x128xf32, #tpu.memory_space<vmem>>, %arg10: memref<1x128xf32, #tpu.memory_space<vmem>>, %arg11: memref<1x128x128xf32, #tpu.memory_space<vmem>>, %arg12: memref<128x128xf32, #tpu.memory_space<vmem>>, %arg13: memref<128x32xf32, #tpu.memory_space<vmem>>) attributes {dimension_semantics = [#tpu.dimension_semantics<parallel>], iteration_bounds = array<i64: 2>, scalar_prefetch = 0 : i64, scratch_operands = 2 : i64, tpu.core_type = #tpu.core_type<tc>, window_params = [{transform_indices = @transform_0, window_bounds = array<i64: 1, 128, 16>}, {pipeline_mode = #tpu.pipeline_mode<synchronous>, transform_indices = @transform_1, window_bounds = array<i64: 16, 128>}, {pipeline_mode = #tpu.pipeline_mode<synchronous>, transform_indices = @transform_2, window_bounds = array<i64: 1, 128>}, {pipeline_mode = #tpu.pipeline_mode<synchronous>, transform_indices = @transform_3, window_bounds = array<i64: 32, 128>}, {pipeline_mode = #tpu.pipeline_mode<synchronous>, transform_indices = @transform_4, window_bounds = array<i64: 64, 128>}, {pipeline_mode = #tpu.pipeline_mode<synchronous>, transform_indices = @transform_5, window_bounds = array<i64: 1, 128>}, {pipeline_mode = #tpu.pipeline_mode<synchronous>, transform_indices = @transform_6, window_bounds = array<i64: 32, 48>}, {pipeline_mode = #tpu.pipeline_mode<synchronous>, transform_indices = @transform_7, window_bounds = array<i64: 1, 48>}, {pipeline_mode = #tpu.pipeline_mode<synchronous>, transform_indices = @transform_8, window_bounds = array<i64: 48, 128>}, {pipeline_mode = #tpu.pipeline_mode<synchronous>, transform_indices = @transform_9, window_bounds = array<i64: 1, 128>}, {transform_indices = @transform_10, window_bounds = array<i64: 1, 128, 128>}]} {
    %c0 = arith.constant 0 : index
    %c0_0 = arith.constant 0 : index
    %c0_1 = arith.constant 0 : index
    %0 = vector.load %arg1[%c0, %c0_0, %c0_1] : memref<1x128x16xf32, #tpu.memory_space<vmem>>, vector<1x128x16xf32>
    %1 = vector.shape_cast %0 : vector<1x128x16xf32> to vector<128x16xf32>
    %c0_2 = arith.constant 0 : index
    %c0_3 = arith.constant 0 : index
    %2 = vector.load %arg2[%c0_2, %c0_3] : memref<16x128xf32, #tpu.memory_space<vmem>>, vector<16x128xf32>
    %cst = arith.constant dense<0.000000e+00> : vector<128x128xf32>
    %3 = tpu.matmul %1, %2, %cst {dimension_numbers = #tpu.dot_dimension_numbers<[1], [0], [0], [1], [0, 0, 1, 1], [], []>} : vector<128x16xf32>, vector<16x128xf32>, vector<128x128xf32> -> vector<128x128xf32>
    %c0_4 = arith.constant 0 : index
    %c0_5 = arith.constant 0 : index
    %4 = vector.load %arg3[%c0_4, %c0_5] : memref<1x128xf32, #tpu.memory_space<vmem>>, vector<1x128xf32>
    %5 = vector.broadcast %4 : vector<1x128xf32> to vector<128x128xf32>
    %6 = arith.addf %3, %5 : vector<128x128xf32>
    %c0_6 = arith.constant 0 : index
    %c0_7 = arith.constant 0 : index
    %7 = vector.load %arg12[%c0_6, %c0_7] : memref<128x128xf32, #tpu.memory_space<vmem>>, vector<128x128xf32>
    tpu.vector_store %arg12[%c0_6, %c0_7], %6 {strides = array<i32>} : memref<128x128xf32, #tpu.memory_space<vmem>>, vector<128x128xf32>,
    %8 = tpu.iota {dimensions = array<i32: 1>} : vector<8x128xi32>
    %c64_i32 = arith.constant 64 : i32
    %9 = vector.broadcast %c64_i32 : i32 to vector<8x128xi32>
    %10 = arith.cmpi sge, %8, %9 : vector<8x128xi32>
    %c96_i32 = arith.constant 96 : i32
    %11 = vector.broadcast %c96_i32 : i32 to vector<8x128xi32>
    %12 = arith.cmpi slt, %8, %11 : vector<8x128xi32>
    %13 = arith.andi %10, %12 : vector<8x128xi1>
    %c0_8 = arith.constant 0 : index
    %c0_9 = arith.constant 0 : index
    %14 = vector.load %arg6[%c0_8, %c0_9] : memref<1x128xf32, #tpu.memory_space<vmem>>, vector<1x128xf32>
    %15 = vector.shape_cast %14 : vector<1x128xf32> to vector<1x128xf32>
    %16 = vector.broadcast %15 : vector<1x128xf32> to vector<8x128xf32>
    %cst_10 = arith.constant 0.000000e+00 : f32
    %17 = vector.broadcast %cst_10 : f32 to vector<8x32xf32>
    %cst_11 = arith.constant 0.000000e+00 : f32
    %18 = vector.broadcast %cst_11 : f32 to vector<8x32xf32>
    %cst_12 = arith.constant 0.000000e+00 : f32
    %19 = vector.broadcast %cst_12 : f32 to vector<8x32xf32>
    %cst_13 = arith.constant 0.000000e+00 : f32
    %20 = vector.broadcast %cst_13 : f32 to vector<8x32xf32>
    %c0_14 = arith.constant 0 : index
    %c0_15 = arith.constant 0 : index
    %21 = vector.load %arg12[%c0_14, %c0_15] : memref<128x128xf32, #tpu.memory_space<vmem>>, vector<8x128xf32>
    %c0_16 = arith.constant 0 : index
    %c0_17 = arith.constant 0 : index
    %22 = vector.load %arg4[%c0_16, %c0_17] : memref<32x128xf32, #tpu.memory_space<vmem>>, vector<32x128xf32>
    %cst_18 = arith.constant dense<0.000000e+00> : vector<8x128xf32>
    %23 = tpu.matmul %17, %22, %cst_18 {dimension_numbers = #tpu.dot_dimension_numbers<[1], [0], [0], [1], [0, 0, 1, 1], [], []>} : vector<8x32xf32>, vector<32x128xf32>, vector<8x128xf32> -> vector<8x128xf32>
    %24 = arith.addf %21, %23 : vector<8x128xf32>
    %cst_19 = arith.constant 5.000000e-01 : f32
    %25 = vector.broadcast %cst_19 : f32 to vector<8x128xf32>
    %26 = arith.mulf %25, %24 : vector<8x128xf32>
    %27 = math.tanh %26 : vector<8x128xf32>
    %cst_20 = arith.constant 5.000000e-01 : f32
    %28 = vector.broadcast %cst_20 : f32 to vector<8x128xf32>
    %29 = arith.mulf %28, %27 : vector<8x128xf32>
    %cst_21 = arith.constant 5.000000e-01 : f32
    %30 = vector.broadcast %cst_21 : f32 to vector<8x128xf32>
    %31 = arith.addf %29, %30 : vector<8x128xf32>
    %32 = math.tanh %24 : vector<8x128xf32>
    %33 = arith.select %13, %32, %31 : vector<8x128xi1>, vector<8x128xf32>
    %34 = vector.extract_strided_slice %33 {offsets = [0, 0], sizes = [8, 32], strides = [1, 1]} : vector<8x128xf32> to vector<8x32xf32>
    %35 = vector.extract_strided_slice %33 {offsets = [0, 32], sizes = [8, 32], strides = [1, 1]} : vector<8x128xf32> to vector<8x32xf32>
    %36 = vector.extract_strided_slice %33 {offsets = [0, 64], sizes = [8, 32], strides = [1, 1]} : vector<8x128xf32> to vector<8x32xf32>
    %37 = vector.extract_strided_slice %33 {offsets = [0, 96], sizes = [8, 32], strides = [1, 1]} : vector<8x128xf32> to vector<8x32xf32>
    %38 = arith.mulf %35, %18 : vector<8x32xf32>
    %39 = arith.mulf %34, %36 : vector<8x32xf32>
    %40 = arith.addf %38, %39 : vector<8x32xf32>
    %41 = math.tanh %40 : vector<8x32xf32>
    %42 = arith.mulf %37, %41 : vector<8x32xf32>
    %43 = tpu.concatenate %42, %19 in 1 : vector<8x32xf32>, vector<8x32xf32> -> vector<8x64xf32>
    %c0_22 = arith.constant 0 : index
    %c0_23 = arith.constant 0 : index
    %44 = vector.load %arg5[%c0_22, %c0_23] : memref<64x128xf32, #tpu.memory_space<vmem>>, vector<64x128xf32>
    %cst_24 = arith.constant dense<0.000000e+00> : vector<8x128xf32>
    %45 = tpu.matmul %43, %44, %cst_24 {dimension_numbers = #tpu.dot_dimension_numbers<[1], [0], [0], [1], [0, 0, 1, 1], [], []>} : vector<8x64xf32>, vector<64x128xf32>, vector<8x128xf32> -> vector<8x128xf32>
    %46 = arith.addf %45, %16 : vector<8x128xf32>
    %cst_25 = arith.constant 5.000000e-01 : f32
    %47 = vector.broadcast %cst_25 : f32 to vector<8x128xf32>
    %48 = arith.mulf %47, %46 : vector<8x128xf32>
    %49 = math.tanh %48 : vector<8x128xf32>
    %cst_26 = arith.constant 5.000000e-01 : f32
    %50 = vector.broadcast %cst_26 : f32 to vector<8x128xf32>
    %51 = arith.mulf %50, %49 : vector<8x128xf32>
    %cst_27 = arith.constant 5.000000e-01 : f32
    %52 = vector.broadcast %cst_27 : f32 to vector<8x128xf32>
    %53 = arith.addf %51, %52 : vector<8x128xf32>
    %54 = math.tanh %46 : vector<8x128xf32>
    %55 = arith.select %13, %54, %53 : vector<8x128xi1>, vector<8x128xf32>
    %56 = vector.extract_strided_slice %55 {offsets = [0, 0], sizes = [8, 32], strides = [1, 1]} : vector<8x128xf32> to vector<8x32xf32>
    %57 = vector.extract_strided_slice %55 {offsets = [0, 32], sizes = [8, 32], strides = [1, 1]} : vector<8x128xf32> to vector<8x32xf32>
    %58 = vector.extract_strided_slice %55 {offsets = [0, 64], sizes = [8, 32], strides = [1, 1]} : vector<8x128xf32> to vector<8x32xf32>
    %59 = vector.extract_strided_slice %55 {offsets = [0, 96], sizes = [8, 32], strides = [1, 1]} : vector<8x128xf32> to vector<8x32xf32>
    %60 = arith.mulf %57, %20 : vector<8x32xf32>
    %61 = arith.mulf %56, %58 : vector<8x32xf32>
    %62 = arith.addf %60, %61 : vector<8x32xf32>
    %63 = math.tanh %62 : vector<8x32xf32>
    %64 = arith.mulf %59, %63 : vector<8x32xf32>
    %c0_28 = arith.constant 0 : index
    %c0_29 = arith.constant 0 : index
    %65 = vector.load %arg13[%c0_28, %c0_29] : memref<128x32xf32, #tpu.memory_space<vmem>>, vector<8x32xf32>
    tpu.vector_store %arg13[%c0_28, %c0_29], %64 {strides = array<i32>} : memref<128x32xf32, #tpu.memory_space<vmem>>, vector<8x32xf32>,
    %c8 = arith.constant 8 : index
    %c0_30 = arith.constant 0 : index
    %66 = vector.load %arg12[%c8, %c0_30] : memref<128x128xf32, #tpu.memory_space<vmem>>, vector<8x128xf32>
    %c0_31 = arith.constant 0 : index
    %c0_32 = arith.constant 0 : index
    %67 = vector.load %arg4[%c0_31, %c0_32] : memref<32x128xf32, #tpu.memory_space<vmem>>, vector<32x128xf32>
    %cst_33 = arith.constant dense<0.000000e+00> : vector<8x128xf32>
    %68 = tpu.matmul %42, %67, %cst_33 {dimension_numbers = #tpu.dot_dimension_numbers<[1], [0], [0], [1], [0, 0, 1, 1], [], []>} : vector<8x32xf32>, vector<32x128xf32>, vector<8x128xf32> -> vector<8x128xf32>
    %69 = arith.addf %66, %68 : vector<8x128xf32>
    %cst_34 = arith.constant 5.000000e-01 : f32
    %70 = vector.broadcast %cst_34 : f32 to vector<8x128xf32>
    %71 = arith.mulf %70, %69 : vector<8x128xf32>
    %72 = math.tanh %71 : vector<8x128xf32>
    %cst_35 = arith.constant 5.000000e-01 : f32
    %73 = vector.broadcast %cst_35 : f32 to vector<8x128xf32>
    %74 = arith.mulf %73, %72 : vector<8x128xf32>
    %cst_36 = arith.constant 5.000000e-01 : f32
    %75 = vector.broadcast %cst_36 : f32 to vector<8x128xf32>
    %76 = arith.addf %74, %75 : vector<8x128xf32>
    %77 = math.tanh %69 : vector<8x128xf32>
    %78 = arith.select %13, %77, %76 : vector<8x128xi1>, vector<8x128xf32>
    %79 = vector.extract_strided_slice %78 {offsets = [0, 0], sizes = [8, 32], strides = [1, 1]} : vector<8x128xf32> to vector<8x32xf32>
    %80 = vector.extract_strided_slice %78 {offsets = [0, 32], sizes = [8, 32], strides = [1, 1]} : vector<8x128xf32> to vector<8x32xf32>
    %81 = vector.extract_strided_slice %78 {offsets = [0, 64], sizes = [8, 32], strides = [1, 1]} : vector<8x128xf32> to vector<8x32xf32>
    %82 = vector.extract_strided_slice %78 {offsets = [0, 96], sizes = [8, 32], strides = [1, 1]} : vector<8x128xf32> to vector<8x32xf32>
    %83 = arith.mulf %80, %40 : vector<8x32xf32>
    %84 = arith.mulf %79, %81 : vector<8x32xf32>
    %85 = arith.addf %83, %84 : vector<8x32xf32>
    %86 = math.tanh %85 : vector<8x32xf32>
    %87 = arith.mulf %82, %86 : vector<8x32xf32>
    %88 = tpu.concatenate %87, %64 in 1 : vector<8x32xf32>, vector<8x32xf32> -> vector<8x64xf32>
    %c0_37 = arith.constant 0 : index
    %c0_38 = arith.constant 0 : index
    %89 = vector.load %arg5[%c0_37, %c0_38] : memref<64x128xf32, #tpu.memory_space<vmem>>, vector<64x128xf32>
    %cst_39 = arith.constant dense<0.000000e+00> : vector<8x128xf32>
    %90 = tpu.matmul %88, %89, %cst_39 {dimension_numbers = #tpu.dot_dimension_numbers<[1], [0], [0], [1], [0, 0, 1, 1], [], []>} : vector<8x64xf32>, vector<64x128xf32>, vector<8x128xf32> -> vector<8x128xf32>
    %91 = arith.addf %90, %16 : vector<8x128xf32>
    %cst_40 = arith.constant 5.000000e-01 : f32
    %92 = vector.broadcast %cst_40 : f32 to vector<8x128xf32>
    %93 = arith.mulf %92, %91 : vector<8x128xf32>
    %94 = math.tanh %93 : vector<8x128xf32>
    %cst_41 = arith.constant 5.000000e-01 : f32
    %95 = vector.broadcast %cst_41 : f32 to vector<8x128xf32>
    %96 = arith.mulf %95, %94 : vector<8x128xf32>
    %cst_42 = arith.constant 5.000000e-01 : f32
    %97 = vector.broadcast %cst_42 : f32 to vector<8x128xf32>
    %98 = arith.addf %96, %97 : vector<8x128xf32>
    %99 = math.tanh %91 : vector<8x128xf32>
    %100 = arith.select %13, %99, %98 : vector<8x128xi1>, vector<8x128xf32>
    %101 = vector.extract_strided_slice %100 {offsets = [0, 0], sizes = [8, 32], strides = [1, 1]} : vector<8x128xf32> to vector<8x32xf32>
    %102 = vector.extract_strided_slice %100 {offsets = [0, 32], sizes = [8, 32], strides = [1, 1]} : vector<8x128xf32> to vector<8x32xf32>
    %103 = vector.extract_strided_slice %100 {offsets = [0, 64], sizes = [8, 32], strides = [1, 1]} : vector<8x128xf32> to vector<8x32xf32>
    %104 = vector.extract_strided_slice %100 {offsets = [0, 96], sizes = [8, 32], strides = [1, 1]} : vector<8x128xf32> to vector<8x32xf32>
    %105 = arith.mulf %102, %62 : vector<8x32xf32>
    %106 = arith.mulf %101, %103 : vector<8x32xf32>
    %107 = arith.addf %105, %106 : vector<8x32xf32>
    %108 = math.tanh %107 : vector<8x32xf32>
    %109 = arith.mulf %104, %108 : vector<8x32xf32>
    %c8_43 = arith.constant 8 : index
    %c0_44 = arith.constant 0 : index
    %110 = vector.load %arg13[%c8_43, %c0_44] : memref<128x32xf32, #tpu.memory_space<vmem>>, vector<8x32xf32>
    tpu.vector_store %arg13[%c8_43, %c0_44], %109 {strides = array<i32>} : memref<128x32xf32, #tpu.memory_space<vmem>>, vector<8x32xf32>,
    %c16 = arith.constant 16 : index
    %c0_45 = arith.constant 0 : index
    %111 = vector.load %arg12[%c16, %c0_45] : memref<128x128xf32, #tpu.memory_space<vmem>>, vector<8x128xf32>
    %c0_46 = arith.constant 0 : index
    %c0_47 = arith.constant 0 : index
    %112 = vector.load %arg4[%c0_46, %c0_47] : memref<32x128xf32, #tpu.memory_space<vmem>>, vector<32x128xf32>
    %cst_48 = arith.constant dense<0.000000e+00> : vector<8x128xf32>
    %113 = tpu.matmul %87, %112, %cst_48 {dimension_numbers = #tpu.dot_dimension_numbers<[1], [0], [0], [1], [0, 0, 1, 1], [], []>} : vector<8x32xf32>, vector<32x128xf32>, vector<8x128xf32> -> vector<8x128xf32>
    %114 = arith.addf %111, %113 : vector<8x128xf32>
    %cst_49 = arith.constant 5.000000e-01 : f32
    %115 = vector.broadcast %cst_49 : f32 to vector<8x128xf32>
    %116 = arith.mulf %115, %114 : vector<8x128xf32>
    %117 = math.tanh %116 : vector<8x128xf32>
    %cst_50 = arith.constant 5.000000e-01 : f32
    %118 = vector.broadcast %cst_50 : f32 to vector<8x128xf32>
    %119 = arith.mulf %118, %117 : vector<8x128xf32>
    %cst_51 = arith.constant 5.000000e-01 : f32
    %120 = vector.broadcast %cst_51 : f32 to vector<8x128xf32>
    %121 = arith.addf %119, %120 : vector<8x128xf32>
    %122 = math.tanh %114 : vector<8x128xf32>
    %123 = arith.select %13, %122, %121 : vector<8x128xi1>, vector<8x128xf32>
    %124 = vector.extract_strided_slice %123 {offsets = [0, 0], sizes = [8, 32], strides = [1, 1]} : vector<8x128xf32> to vector<8x32xf32>
    %125 = vector.extract_strided_slice %123 {offsets = [0, 32], sizes = [8, 32], strides = [1, 1]} : vector<8x128xf32> to vector<8x32xf32>
    %126 = vector.extract_strided_slice %123 {offsets = [0, 64], sizes = [8, 32], strides = [1, 1]} : vector<8x128xf32> to vector<8x32xf32>
    %127 = vector.extract_strided_slice %123 {offsets = [0, 96], sizes = [8, 32], strides = [1, 1]} : vector<8x128xf32> to vector<8x32xf32>
    %128 = arith.mulf %125, %85 : vector<8x32xf32>
    %129 = arith.mulf %124, %126 : vector<8x32xf32>
    %130 = arith.addf %128, %129 : vector<8x32xf32>
    %131 = math.tanh %130 : vector<8x32xf32>
    %132 = arith.mulf %127, %131 : vector<8x32xf32>
    %133 = tpu.concatenate %132, %109 in 1 : vector<8x32xf32>, vector<8x32xf32> -> vector<8x64xf32>
    %c0_52 = arith.constant 0 : index
    %c0_53 = arith.constant 0 : index
    %134 = vector.load %arg5[%c0_52, %c0_53] : memref<64x128xf32, #tpu.memory_space<vmem>>, vector<64x128xf32>
    %cst_54 = arith.constant dense<0.000000e+00> : vector<8x128xf32>
    %135 = tpu.matmul %133, %134, %cst_54 {dimension_numbers = #tpu.dot_dimension_numbers<[1], [0], [0], [1], [0, 0, 1, 1], [], []>} : vector<8x64xf32>, vector<64x128xf32>, vector<8x128xf32> -> vector<8x128xf32>
    %136 = arith.addf %135, %16 : vector<8x128xf32>
    %cst_55 = arith.constant 5.000000e-01 : f32
    %137 = vector.broadcast %cst_55 : f32 to vector<8x128xf32>
    %138 = arith.mulf %137, %136 : vector<8x128xf32>
    %139 = math.tanh %138 : vector<8x128xf32>
    %cst_56 = arith.constant 5.000000e-01 : f32
    %140 = vector.broadcast %cst_56 : f32 to vector<8x128xf32>
    %141 = arith.mulf %140, %139 : vector<8x128xf32>
    %cst_57 = arith.constant 5.000000e-01 : f32
    %142 = vector.broadcast %cst_57 : f32 to vector<8x128xf32>
    %143 = arith.addf %141, %142 : vector<8x128xf32>
    %144 = math.tanh %136 : vector<8x128xf32>
    %145 = arith.select %13, %144, %143 : vector<8x128xi1>, vector<8x128xf32>
    %146 = vector.extract_strided_slice %145 {offsets = [0, 0], sizes = [8, 32], strides = [1, 1]} : vector<8x128xf32> to vector<8x32xf32>
    %147 = vector.extract_strided_slice %145 {offsets = [0, 32], sizes = [8, 32], strides = [1, 1]} : vector<8x128xf32> to vector<8x32xf32>
    %148 = vector.extract_strided_slice %145 {offsets = [0, 64], sizes = [8, 32], strides = [1, 1]} : vector<8x128xf32> to vector<8x32xf32>
    %149 = vector.extract_strided_slice %145 {offsets = [0, 96], sizes = [8, 32], strides = [1, 1]} : vector<8x128xf32> to vector<8x32xf32>
    %150 = arith.mulf %147, %107 : vector<8x32xf32>
    %151 = arith.mulf %146, %148 : vector<8x32xf32>
    %152 = arith.addf %150, %151 : vector<8x32xf32>
    %153 = math.tanh %152 : vector<8x32xf32>
    %154 = arith.mulf %149, %153 : vector<8x32xf32>
    %c16_58 = arith.constant 16 : index
    %c0_59 = arith.constant 0 : index
    %155 = vector.load %arg13[%c16_58, %c0_59] : memref<128x32xf32, #tpu.memory_space<vmem>>, vector<8x32xf32>
    tpu.vector_store %arg13[%c16_58, %c0_59], %154 {strides = array<i32>} : memref<128x32xf32, #tpu.memory_space<vmem>>, vector<8x32xf32>,
    %c24 = arith.constant 24 : index
    %c0_60 = arith.constant 0 : index
    %156 = vector.load %arg12[%c24, %c0_60] : memref<128x128xf32, #tpu.memory_space<vmem>>, vector<8x128xf32>
    %c0_61 = arith.constant 0 : index
    %c0_62 = arith.constant 0 : index
    %157 = vector.load %arg4[%c0_61, %c0_62] : memref<32x128xf32, #tpu.memory_space<vmem>>, vector<32x128xf32>
    %cst_63 = arith.constant dense<0.000000e+00> : vector<8x128xf32>
    %158 = tpu.matmul %132, %157, %cst_63 {dimension_numbers = #tpu.dot_dimension_numbers<[1], [0], [0], [1], [0, 0, 1, 1], [], []>} : vector<8x32xf32>, vector<32x128xf32>, vector<8x128xf32> -> vector<8x128xf32>
    %159 = arith.addf %156, %158 : vector<8x128xf32>
    %cst_64 = arith.constant 5.000000e-01 : f32
    %160 = vector.broadcast %cst_64 : f32 to vector<8x128xf32>
    %161 = arith.mulf %160, %159 : vector<8x128xf32>
    %162 = math.tanh %161 : vector<8x128xf32>
    %cst_65 = arith.constant 5.000000e-01 : f32
    %163 = vector.broadcast %cst_65 : f32 to vector<8x128xf32>
    %164 = arith.mulf %163, %162 : vector<8x128xf32>
    %cst_66 = arith.constant 5.000000e-01 : f32
    %165 = vector.broadcast %cst_66 : f32 to vector<8x128xf32>
    %166 = arith.addf %164, %165 : vector<8x128xf32>
    %167 = math.tanh %159 : vector<8x128xf32>
    %168 = arith.select %13, %167, %166 : vector<8x128xi1>, vector<8x128xf32>
    %169 = vector.extract_strided_slice %168 {offsets = [0, 0], sizes = [8, 32], strides = [1, 1]} : vector<8x128xf32> to vector<8x32xf32>
    %170 = vector.extract_strided_slice %168 {offsets = [0, 32], sizes = [8, 32], strides = [1, 1]} : vector<8x128xf32> to vector<8x32xf32>
    %171 = vector.extract_strided_slice %168 {offsets = [0, 64], sizes = [8, 32], strides = [1, 1]} : vector<8x128xf32> to vector<8x32xf32>
    %172 = vector.extract_strided_slice %168 {offsets = [0, 96], sizes = [8, 32], strides = [1, 1]} : vector<8x128xf32> to vector<8x32xf32>
    %173 = arith.mulf %170, %130 : vector<8x32xf32>
    %174 = arith.mulf %169, %171 : vector<8x32xf32>
    %175 = arith.addf %173, %174 : vector<8x32xf32>
    %176 = math.tanh %175 : vector<8x32xf32>
    %177 = arith.mulf %172, %176 : vector<8x32xf32>
    %178 = tpu.concatenate %177, %154 in 1 : vector<8x32xf32>, vector<8x32xf32> -> vector<8x64xf32>
    %c0_67 = arith.constant 0 : index
    %c0_68 = arith.constant 0 : index
    %179 = vector.load %arg5[%c0_67, %c0_68] : memref<64x128xf32, #tpu.memory_space<vmem>>, vector<64x128xf32>
    %cst_69 = arith.constant dense<0.000000e+00> : vector<8x128xf32>
    %180 = tpu.matmul %178, %179, %cst_69 {dimension_numbers = #tpu.dot_dimension_numbers<[1], [0], [0], [1], [0, 0, 1, 1], [], []>} : vector<8x64xf32>, vector<64x128xf32>, vector<8x128xf32> -> vector<8x128xf32>
    %181 = arith.addf %180, %16 : vector<8x128xf32>
    %cst_70 = arith.constant 5.000000e-01 : f32
    %182 = vector.broadcast %cst_70 : f32 to vector<8x128xf32>
    %183 = arith.mulf %182, %181 : vector<8x128xf32>
    %184 = math.tanh %183 : vector<8x128xf32>
    %cst_71 = arith.constant 5.000000e-01 : f32
    %185 = vector.broadcast %cst_71 : f32 to vector<8x128xf32>
    %186 = arith.mulf %185, %184 : vector<8x128xf32>
    %cst_72 = arith.constant 5.000000e-01 : f32
    %187 = vector.broadcast %cst_72 : f32 to vector<8x128xf32>
    %188 = arith.addf %186, %187 : vector<8x128xf32>
    %189 = math.tanh %181 : vector<8x128xf32>
    %190 = arith.select %13, %189, %188 : vector<8x128xi1>, vector<8x128xf32>
    %191 = vector.extract_strided_slice %190 {offsets = [0, 0], sizes = [8, 32], strides = [1, 1]} : vector<8x128xf32> to vector<8x32xf32>
    %192 = vector.extract_strided_slice %190 {offsets = [0, 32], sizes = [8, 32], strides = [1, 1]} : vector<8x128xf32> to vector<8x32xf32>
    %193 = vector.extract_strided_slice %190 {offsets = [0, 64], sizes = [8, 32], strides = [1, 1]} : vector<8x128xf32> to vector<8x32xf32>
    %194 = vector.extract_strided_slice %190 {offsets = [0, 96], sizes = [8, 32], strides = [1, 1]} : vector<8x128xf32> to vector<8x32xf32>
    %195 = arith.mulf %192, %152 : vector<8x32xf32>
    %196 = arith.mulf %191, %193 : vector<8x32xf32>
    %197 = arith.addf %195, %196 : vector<8x32xf32>
    %198 = math.tanh %197 : vector<8x32xf32>
    %199 = arith.mulf %194, %198 : vector<8x32xf32>
    %c24_73 = arith.constant 24 : index
    %c0_74 = arith.constant 0 : index
    %200 = vector.load %arg13[%c24_73, %c0_74] : memref<128x32xf32, #tpu.memory_space<vmem>>, vector<8x32xf32>
    tpu.vector_store %arg13[%c24_73, %c0_74], %199 {strides = array<i32>} : memref<128x32xf32, #tpu.memory_space<vmem>>, vector<8x32xf32>,
    %c32 = arith.constant 32 : index
    %c0_75 = arith.constant 0 : index
    %201 = vector.load %arg12[%c32, %c0_75] : memref<128x128xf32, #tpu.memory_space<vmem>>, vector<8x128xf32>
    %c0_76 = arith.constant 0 : index
    %c0_77 = arith.constant 0 : index
    %202 = vector.load %arg4[%c0_76, %c0_77] : memref<32x128xf32, #tpu.memory_space<vmem>>, vector<32x128xf32>
    %cst_78 = arith.constant dense<0.000000e+00> : vector<8x128xf32>
    %203 = tpu.matmul %177, %202, %cst_78 {dimension_numbers = #tpu.dot_dimension_numbers<[1], [0], [0], [1], [0, 0, 1, 1], [], []>} : vector<8x32xf32>, vector<32x128xf32>, vector<8x128xf32> -> vector<8x128xf32>
    %204 = arith.addf %201, %203 : vector<8x128xf32>
    %cst_79 = arith.constant 5.000000e-01 : f32
    %205 = vector.broadcast %cst_79 : f32 to vector<8x128xf32>
    %206 = arith.mulf %205, %204 : vector<8x128xf32>
    %207 = math.tanh %206 : vector<8x128xf32>
    %cst_80 = arith.constant 5.000000e-01 : f32
    %208 = vector.broadcast %cst_80 : f32 to vector<8x128xf32>
    %209 = arith.mulf %208, %207 : vector<8x128xf32>
    %cst_81 = arith.constant 5.000000e-01 : f32
    %210 = vector.broadcast %cst_81 : f32 to vector<8x128xf32>
    %211 = arith.addf %209, %210 : vector<8x128xf32>
    %212 = math.tanh %204 : vector<8x128xf32>
    %213 = arith.select %13, %212, %211 : vector<8x128xi1>, vector<8x128xf32>
    %214 = vector.extract_strided_slice %213 {offsets = [0, 0], sizes = [8, 32], strides = [1, 1]} : vector<8x128xf32> to vector<8x32xf32>
    %215 = vector.extract_strided_slice %213 {offsets = [0, 32], sizes = [8, 32], strides = [1, 1]} : vector<8x128xf32> to vector<8x32xf32>
    %216 = vector.extract_strided_slice %213 {offsets = [0, 64], sizes = [8, 32], strides = [1, 1]} : vector<8x128xf32> to vector<8x32xf32>
    %217 = vector.extract_strided_slice %213 {offsets = [0, 96], sizes = [8, 32], strides = [1, 1]} : vector<8x128xf32> to vector<8x32xf32>
    %218 = arith.mulf %215, %175 : vector<8x32xf32>
    %219 = arith.mulf %214, %216 : vector<8x32xf32>
    %220 = arith.addf %218, %219 : vector<8x32xf32>
    %221 = math.tanh %220 : vector<8x32xf32>
    %222 = arith.mulf %217, %221 : vector<8x32xf32>
    %223 = tpu.concatenate %222, %199 in 1 : vector<8x32xf32>, vector<8x32xf32> -> vector<8x64xf32>
    %c0_82 = arith.constant 0 : index
    %c0_83 = arith.constant 0 : index
    %224 = vector.load %arg5[%c0_82, %c0_83] : memref<64x128xf32, #tpu.memory_space<vmem>>, vector<64x128xf32>
    %cst_84 = arith.constant dense<0.000000e+00> : vector<8x128xf32>
    %225 = tpu.matmul %223, %224, %cst_84 {dimension_numbers = #tpu.dot_dimension_numbers<[1], [0], [0], [1], [0, 0, 1, 1], [], []>} : vector<8x64xf32>, vector<64x128xf32>, vector<8x128xf32> -> vector<8x128xf32>
    %226 = arith.addf %225, %16 : vector<8x128xf32>
    %cst_85 = arith.constant 5.000000e-01 : f32
    %227 = vector.broadcast %cst_85 : f32 to vector<8x128xf32>
    %228 = arith.mulf %227, %226 : vector<8x128xf32>
    %229 = math.tanh %228 : vector<8x128xf32>
    %cst_86 = arith.constant 5.000000e-01 : f32
    %230 = vector.broadcast %cst_86 : f32 to vector<8x128xf32>
    %231 = arith.mulf %230, %229 : vector<8x128xf32>
    %cst_87 = arith.constant 5.000000e-01 : f32
    %232 = vector.broadcast %cst_87 : f32 to vector<8x128xf32>
    %233 = arith.addf %231, %232 : vector<8x128xf32>
    %234 = math.tanh %226 : vector<8x128xf32>
    %235 = arith.select %13, %234, %233 : vector<8x128xi1>, vector<8x128xf32>
    %236 = vector.extract_strided_slice %235 {offsets = [0, 0], sizes = [8, 32], strides = [1, 1]} : vector<8x128xf32> to vector<8x32xf32>
    %237 = vector.extract_strided_slice %235 {offsets = [0, 32], sizes = [8, 32], strides = [1, 1]} : vector<8x128xf32> to vector<8x32xf32>
    %238 = vector.extract_strided_slice %235 {offsets = [0, 64], sizes = [8, 32], strides = [1, 1]} : vector<8x128xf32> to vector<8x32xf32>
    %239 = vector.extract_strided_slice %235 {offsets = [0, 96], sizes = [8, 32], strides = [1, 1]} : vector<8x128xf32> to vector<8x32xf32>
    %240 = arith.mulf %237, %197 : vector<8x32xf32>
    %241 = arith.mulf %236, %238 : vector<8x32xf32>
    %242 = arith.addf %240, %241 : vector<8x32xf32>
    %243 = math.tanh %242 : vector<8x32xf32>
    %244 = arith.mulf %239, %243 : vector<8x32xf32>
    %c32_88 = arith.constant 32 : index
    %c0_89 = arith.constant 0 : index
    %245 = vector.load %arg13[%c32_88, %c0_89] : memref<128x32xf32, #tpu.memory_space<vmem>>, vector<8x32xf32>
    tpu.vector_store %arg13[%c32_88, %c0_89], %244 {strides = array<i32>} : memref<128x32xf32, #tpu.memory_space<vmem>>, vector<8x32xf32>,
    %c40 = arith.constant 40 : index
    %c0_90 = arith.constant 0 : index
    %246 = vector.load %arg12[%c40, %c0_90] : memref<128x128xf32, #tpu.memory_space<vmem>>, vector<8x128xf32>
    %c0_91 = arith.constant 0 : index
    %c0_92 = arith.constant 0 : index
    %247 = vector.load %arg4[%c0_91, %c0_92] : memref<32x128xf32, #tpu.memory_space<vmem>>, vector<32x128xf32>
    %cst_93 = arith.constant dense<0.000000e+00> : vector<8x128xf32>
    %248 = tpu.matmul %222, %247, %cst_93 {dimension_numbers = #tpu.dot_dimension_numbers<[1], [0], [0], [1], [0, 0, 1, 1], [], []>} : vector<8x32xf32>, vector<32x128xf32>, vector<8x128xf32> -> vector<8x128xf32>
    %249 = arith.addf %246, %248 : vector<8x128xf32>
    %cst_94 = arith.constant 5.000000e-01 : f32
    %250 = vector.broadcast %cst_94 : f32 to vector<8x128xf32>
    %251 = arith.mulf %250, %249 : vector<8x128xf32>
    %252 = math.tanh %251 : vector<8x128xf32>
    %cst_95 = arith.constant 5.000000e-01 : f32
    %253 = vector.broadcast %cst_95 : f32 to vector<8x128xf32>
    %254 = arith.mulf %253, %252 : vector<8x128xf32>
    %cst_96 = arith.constant 5.000000e-01 : f32
    %255 = vector.broadcast %cst_96 : f32 to vector<8x128xf32>
    %256 = arith.addf %254, %255 : vector<8x128xf32>
    %257 = math.tanh %249 : vector<8x128xf32>
    %258 = arith.select %13, %257, %256 : vector<8x128xi1>, vector<8x128xf32>
    %259 = vector.extract_strided_slice %258 {offsets = [0, 0], sizes = [8, 32], strides = [1, 1]} : vector<8x128xf32> to vector<8x32xf32>
    %260 = vector.extract_strided_slice %258 {offsets = [0, 32], sizes = [8, 32], strides = [1, 1]} : vector<8x128xf32> to vector<8x32xf32>
    %261 = vector.extract_strided_slice %258 {offsets = [0, 64], sizes = [8, 32], strides = [1, 1]} : vector<8x128xf32> to vector<8x32xf32>
    %262 = vector.extract_strided_slice %258 {offsets = [0, 96], sizes = [8, 32], strides = [1, 1]} : vector<8x128xf32> to vector<8x32xf32>
    %263 = arith.mulf %260, %220 : vector<8x32xf32>
    %264 = arith.mulf %259, %261 : vector<8x32xf32>
    %265 = arith.addf %263, %264 : vector<8x32xf32>
    %266 = math.tanh %265 : vector<8x32xf32>
    %267 = arith.mulf %262, %266 : vector<8x32xf32>
    %268 = tpu.concatenate %267, %244 in 1 : vector<8x32xf32>, vector<8x32xf32> -> vector<8x64xf32>
    %c0_97 = arith.constant 0 : index
    %c0_98 = arith.constant 0 : index
    %269 = vector.load %arg5[%c0_97, %c0_98] : memref<64x128xf32, #tpu.memory_space<vmem>>, vector<64x128xf32>
    %cst_99 = arith.constant dense<0.000000e+00> : vector<8x128xf32>
    %270 = tpu.matmul %268, %269, %cst_99 {dimension_numbers = #tpu.dot_dimension_numbers<[1], [0], [0], [1], [0, 0, 1, 1], [], []>} : vector<8x64xf32>, vector<64x128xf32>, vector<8x128xf32> -> vector<8x128xf32>
    %271 = arith.addf %270, %16 : vector<8x128xf32>
    %cst_100 = arith.constant 5.000000e-01 : f32
    %272 = vector.broadcast %cst_100 : f32 to vector<8x128xf32>
    %273 = arith.mulf %272, %271 : vector<8x128xf32>
    %274 = math.tanh %273 : vector<8x128xf32>
    %cst_101 = arith.constant 5.000000e-01 : f32
    %275 = vector.broadcast %cst_101 : f32 to vector<8x128xf32>
    %276 = arith.mulf %275, %274 : vector<8x128xf32>
    %cst_102 = arith.constant 5.000000e-01 : f32
    %277 = vector.broadcast %cst_102 : f32 to vector<8x128xf32>
    %278 = arith.addf %276, %277 : vector<8x128xf32>
    %279 = math.tanh %271 : vector<8x128xf32>
    %280 = arith.select %13, %279, %278 : vector<8x128xi1>, vector<8x128xf32>
    %281 = vector.extract_strided_slice %280 {offsets = [0, 0], sizes = [8, 32], strides = [1, 1]} : vector<8x128xf32> to vector<8x32xf32>
    %282 = vector.extract_strided_slice %280 {offsets = [0, 32], sizes = [8, 32], strides = [1, 1]} : vector<8x128xf32> to vector<8x32xf32>
    %283 = vector.extract_strided_slice %280 {offsets = [0, 64], sizes = [8, 32], strides = [1, 1]} : vector<8x128xf32> to vector<8x32xf32>
    %284 = vector.extract_strided_slice %280 {offsets = [0, 96], sizes = [8, 32], strides = [1, 1]} : vector<8x128xf32> to vector<8x32xf32>
    %285 = arith.mulf %282, %242 : vector<8x32xf32>
    %286 = arith.mulf %281, %283 : vector<8x32xf32>
    %287 = arith.addf %285, %286 : vector<8x32xf32>
    %288 = math.tanh %287 : vector<8x32xf32>
    %289 = arith.mulf %284, %288 : vector<8x32xf32>
    %c40_103 = arith.constant 40 : index
    %c0_104 = arith.constant 0 : index
    %290 = vector.load %arg13[%c40_103, %c0_104] : memref<128x32xf32, #tpu.memory_space<vmem>>, vector<8x32xf32>
    tpu.vector_store %arg13[%c40_103, %c0_104], %289 {strides = array<i32>} : memref<128x32xf32, #tpu.memory_space<vmem>>, vector<8x32xf32>,
    %c48 = arith.constant 48 : index
    %c0_105 = arith.constant 0 : index
    %291 = vector.load %arg12[%c48, %c0_105] : memref<128x128xf32, #tpu.memory_space<vmem>>, vector<8x128xf32>
    %c0_106 = arith.constant 0 : index
    %c0_107 = arith.constant 0 : index
    %292 = vector.load %arg4[%c0_106, %c0_107] : memref<32x128xf32, #tpu.memory_space<vmem>>, vector<32x128xf32>
    %cst_108 = arith.constant dense<0.000000e+00> : vector<8x128xf32>
    %293 = tpu.matmul %267, %292, %cst_108 {dimension_numbers = #tpu.dot_dimension_numbers<[1], [0], [0], [1], [0, 0, 1, 1], [], []>} : vector<8x32xf32>, vector<32x128xf32>, vector<8x128xf32> -> vector<8x128xf32>
    %294 = arith.addf %291, %293 : vector<8x128xf32>
    %cst_109 = arith.constant 5.000000e-01 : f32
    %295 = vector.broadcast %cst_109 : f32 to vector<8x128xf32>
    %296 = arith.mulf %295, %294 : vector<8x128xf32>
    %297 = math.tanh %296 : vector<8x128xf32>
    %cst_110 = arith.constant 5.000000e-01 : f32
    %298 = vector.broadcast %cst_110 : f32 to vector<8x128xf32>
    %299 = arith.mulf %298, %297 : vector<8x128xf32>
    %cst_111 = arith.constant 5.000000e-01 : f32
    %300 = vector.broadcast %cst_111 : f32 to vector<8x128xf32>
    %301 = arith.addf %299, %300 : vector<8x128xf32>
    %302 = math.tanh %294 : vector<8x128xf32>
    %303 = arith.select %13, %302, %301 : vector<8x128xi1>, vector<8x128xf32>
    %304 = vector.extract_strided_slice %303 {offsets = [0, 0], sizes = [8, 32], strides = [1, 1]} : vector<8x128xf32> to vector<8x32xf32>
    %305 = vector.extract_strided_slice %303 {offsets = [0, 32], sizes = [8, 32], strides = [1, 1]} : vector<8x128xf32> to vector<8x32xf32>
    %306 = vector.extract_strided_slice %303 {offsets = [0, 64], sizes = [8, 32], strides = [1, 1]} : vector<8x128xf32> to vector<8x32xf32>
    %307 = vector.extract_strided_slice %303 {offsets = [0, 96], sizes = [8, 32], strides = [1, 1]} : vector<8x128xf32> to vector<8x32xf32>
    %308 = arith.mulf %305, %265 : vector<8x32xf32>
    %309 = arith.mulf %304, %306 : vector<8x32xf32>
    %310 = arith.addf %308, %309 : vector<8x32xf32>
    %311 = math.tanh %310 : vector<8x32xf32>
    %312 = arith.mulf %307, %311 : vector<8x32xf32>
    %313 = tpu.concatenate %312, %289 in 1 : vector<8x32xf32>, vector<8x32xf32> -> vector<8x64xf32>
    %c0_112 = arith.constant 0 : index
    %c0_113 = arith.constant 0 : index
    %314 = vector.load %arg5[%c0_112, %c0_113] : memref<64x128xf32, #tpu.memory_space<vmem>>, vector<64x128xf32>
    %cst_114 = arith.constant dense<0.000000e+00> : vector<8x128xf32>
    %315 = tpu.matmul %313, %314, %cst_114 {dimension_numbers = #tpu.dot_dimension_numbers<[1], [0], [0], [1], [0, 0, 1, 1], [], []>} : vector<8x64xf32>, vector<64x128xf32>, vector<8x128xf32> -> vector<8x128xf32>
    %316 = arith.addf %315, %16 : vector<8x128xf32>
    %cst_115 = arith.constant 5.000000e-01 : f32
    %317 = vector.broadcast %cst_115 : f32 to vector<8x128xf32>
    %318 = arith.mulf %317, %316 : vector<8x128xf32>
    %319 = math.tanh %318 : vector<8x128xf32>
    %cst_116 = arith.constant 5.000000e-01 : f32
    %320 = vector.broadcast %cst_116 : f32 to vector<8x128xf32>
    %321 = arith.mulf %320, %319 : vector<8x128xf32>
    %cst_117 = arith.constant 5.000000e-01 : f32
    %322 = vector.broadcast %cst_117 : f32 to vector<8x128xf32>
    %323 = arith.addf %321, %322 : vector<8x128xf32>
    %324 = math.tanh %316 : vector<8x128xf32>
    %325 = arith.select %13, %324, %323 : vector<8x128xi1>, vector<8x128xf32>
    %326 = vector.extract_strided_slice %325 {offsets = [0, 0], sizes = [8, 32], strides = [1, 1]} : vector<8x128xf32> to vector<8x32xf32>
    %327 = vector.extract_strided_slice %325 {offsets = [0, 32], sizes = [8, 32], strides = [1, 1]} : vector<8x128xf32> to vector<8x32xf32>
    %328 = vector.extract_strided_slice %325 {offsets = [0, 64], sizes = [8, 32], strides = [1, 1]} : vector<8x128xf32> to vector<8x32xf32>
    %329 = vector.extract_strided_slice %325 {offsets = [0, 96], sizes = [8, 32], strides = [1, 1]} : vector<8x128xf32> to vector<8x32xf32>
    %330 = arith.mulf %327, %287 : vector<8x32xf32>
    %331 = arith.mulf %326, %328 : vector<8x32xf32>
    %332 = arith.addf %330, %331 : vector<8x32xf32>
    %333 = math.tanh %332 : vector<8x32xf32>
    %334 = arith.mulf %329, %333 : vector<8x32xf32>
    %c48_118 = arith.constant 48 : index
    %c0_119 = arith.constant 0 : index
    %335 = vector.load %arg13[%c48_118, %c0_119] : memref<128x32xf32, #tpu.memory_space<vmem>>, vector<8x32xf32>
    tpu.vector_store %arg13[%c48_118, %c0_119], %334 {strides = array<i32>} : memref<128x32xf32, #tpu.memory_space<vmem>>, vector<8x32xf32>,
    %c56 = arith.constant 56 : index
    %c0_120 = arith.constant 0 : index
    %336 = vector.load %arg12[%c56, %c0_120] : memref<128x128xf32, #tpu.memory_space<vmem>>, vector<8x128xf32>
    %c0_121 = arith.constant 0 : index
    %c0_122 = arith.constant 0 : index
    %337 = vector.load %arg4[%c0_121, %c0_122] : memref<32x128xf32, #tpu.memory_space<vmem>>, vector<32x128xf32>
    %cst_123 = arith.constant dense<0.000000e+00> : vector<8x128xf32>
    %338 = tpu.matmul %312, %337, %cst_123 {dimension_numbers = #tpu.dot_dimension_numbers<[1], [0], [0], [1], [0, 0, 1, 1], [], []>} : vector<8x32xf32>, vector<32x128xf32>, vector<8x128xf32> -> vector<8x128xf32>
    %339 = arith.addf %336, %338 : vector<8x128xf32>
    %cst_124 = arith.constant 5.000000e-01 : f32
    %340 = vector.broadcast %cst_124 : f32 to vector<8x128xf32>
    %341 = arith.mulf %340, %339 : vector<8x128xf32>
    %342 = math.tanh %341 : vector<8x128xf32>
    %cst_125 = arith.constant 5.000000e-01 : f32
    %343 = vector.broadcast %cst_125 : f32 to vector<8x128xf32>
    %344 = arith.mulf %343, %342 : vector<8x128xf32>
    %cst_126 = arith.constant 5.000000e-01 : f32
    %345 = vector.broadcast %cst_126 : f32 to vector<8x128xf32>
    %346 = arith.addf %344, %345 : vector<8x128xf32>
    %347 = math.tanh %339 : vector<8x128xf32>
    %348 = arith.select %13, %347, %346 : vector<8x128xi1>, vector<8x128xf32>
    %349 = vector.extract_strided_slice %348 {offsets = [0, 0], sizes = [8, 32], strides = [1, 1]} : vector<8x128xf32> to vector<8x32xf32>
    %350 = vector.extract_strided_slice %348 {offsets = [0, 32], sizes = [8, 32], strides = [1, 1]} : vector<8x128xf32> to vector<8x32xf32>
    %351 = vector.extract_strided_slice %348 {offsets = [0, 64], sizes = [8, 32], strides = [1, 1]} : vector<8x128xf32> to vector<8x32xf32>
    %352 = vector.extract_strided_slice %348 {offsets = [0, 96], sizes = [8, 32], strides = [1, 1]} : vector<8x128xf32> to vector<8x32xf32>
    %353 = arith.mulf %350, %310 : vector<8x32xf32>
    %354 = arith.mulf %349, %351 : vector<8x32xf32>
    %355 = arith.addf %353, %354 : vector<8x32xf32>
    %356 = math.tanh %355 : vector<8x32xf32>
    %357 = arith.mulf %352, %356 : vector<8x32xf32>
    %358 = tpu.concatenate %357, %334 in 1 : vector<8x32xf32>, vector<8x32xf32> -> vector<8x64xf32>
    %c0_127 = arith.constant 0 : index
    %c0_128 = arith.constant 0 : index
    %359 = vector.load %arg5[%c0_127, %c0_128] : memref<64x128xf32, #tpu.memory_space<vmem>>, vector<64x128xf32>
    %cst_129 = arith.constant dense<0.000000e+00> : vector<8x128xf32>
    %360 = tpu.matmul %358, %359, %cst_129 {dimension_numbers = #tpu.dot_dimension_numbers<[1], [0], [0], [1], [0, 0, 1, 1], [], []>} : vector<8x64xf32>, vector<64x128xf32>, vector<8x128xf32> -> vector<8x128xf32>
    %361 = arith.addf %360, %16 : vector<8x128xf32>
    %cst_130 = arith.constant 5.000000e-01 : f32
    %362 = vector.broadcast %cst_130 : f32 to vector<8x128xf32>
    %363 = arith.mulf %362, %361 : vector<8x128xf32>
    %364 = math.tanh %363 : vector<8x128xf32>
    %cst_131 = arith.constant 5.000000e-01 : f32
    %365 = vector.broadcast %cst_131 : f32 to vector<8x128xf32>
    %366 = arith.mulf %365, %364 : vector<8x128xf32>
    %cst_132 = arith.constant 5.000000e-01 : f32
    %367 = vector.broadcast %cst_132 : f32 to vector<8x128xf32>
    %368 = arith.addf %366, %367 : vector<8x128xf32>
    %369 = math.tanh %361 : vector<8x128xf32>
    %370 = arith.select %13, %369, %368 : vector<8x128xi1>, vector<8x128xf32>
    %371 = vector.extract_strided_slice %370 {offsets = [0, 0], sizes = [8, 32], strides = [1, 1]} : vector<8x128xf32> to vector<8x32xf32>
    %372 = vector.extract_strided_slice %370 {offsets = [0, 32], sizes = [8, 32], strides = [1, 1]} : vector<8x128xf32> to vector<8x32xf32>
    %373 = vector.extract_strided_slice %370 {offsets = [0, 64], sizes = [8, 32], strides = [1, 1]} : vector<8x128xf32> to vector<8x32xf32>
    %374 = vector.extract_strided_slice %370 {offsets = [0, 96], sizes = [8, 32], strides = [1, 1]} : vector<8x128xf32> to vector<8x32xf32>
    %375 = arith.mulf %372, %332 : vector<8x32xf32>
    %376 = arith.mulf %371, %373 : vector<8x32xf32>
    %377 = arith.addf %375, %376 : vector<8x32xf32>
    %378 = math.tanh %377 : vector<8x32xf32>
    %379 = arith.mulf %374, %378 : vector<8x32xf32>
    %c56_133 = arith.constant 56 : index
    %c0_134 = arith.constant 0 : index
    %380 = vector.load %arg13[%c56_133, %c0_134] : memref<128x32xf32, #tpu.memory_space<vmem>>, vector<8x32xf32>
    tpu.vector_store %arg13[%c56_133, %c0_134], %379 {strides = array<i32>} : memref<128x32xf32, #tpu.memory_space<vmem>>, vector<8x32xf32>,
    %c64 = arith.constant 64 : index
    %c0_135 = arith.constant 0 : index
    %381 = vector.load %arg12[%c64, %c0_135] : memref<128x128xf32, #tpu.memory_space<vmem>>, vector<8x128xf32>
    %c0_136 = arith.constant 0 : index
    %c0_137 = arith.constant 0 : index
    %382 = vector.load %arg4[%c0_136, %c0_137] : memref<32x128xf32, #tpu.memory_space<vmem>>, vector<32x128xf32>
    %cst_138 = arith.constant dense<0.000000e+00> : vector<8x128xf32>
    %383 = tpu.matmul %357, %382, %cst_138 {dimension_numbers = #tpu.dot_dimension_numbers<[1], [0], [0], [1], [0, 0, 1, 1], [], []>} : vector<8x32xf32>, vector<32x128xf32>, vector<8x128xf32> -> vector<8x128xf32>
    %384 = arith.addf %381, %383 : vector<8x128xf32>
    %cst_139 = arith.constant 5.000000e-01 : f32
    %385 = vector.broadcast %cst_139 : f32 to vector<8x128xf32>
    %386 = arith.mulf %385, %384 : vector<8x128xf32>
    %387 = math.tanh %386 : vector<8x128xf32>
    %cst_140 = arith.constant 5.000000e-01 : f32
    %388 = vector.broadcast %cst_140 : f32 to vector<8x128xf32>
    %389 = arith.mulf %388, %387 : vector<8x128xf32>
    %cst_141 = arith.constant 5.000000e-01 : f32
    %390 = vector.broadcast %cst_141 : f32 to vector<8x128xf32>
    %391 = arith.addf %389, %390 : vector<8x128xf32>
    %392 = math.tanh %384 : vector<8x128xf32>
    %393 = arith.select %13, %392, %391 : vector<8x128xi1>, vector<8x128xf32>
    %394 = vector.extract_strided_slice %393 {offsets = [0, 0], sizes = [8, 32], strides = [1, 1]} : vector<8x128xf32> to vector<8x32xf32>
    %395 = vector.extract_strided_slice %393 {offsets = [0, 32], sizes = [8, 32], strides = [1, 1]} : vector<8x128xf32> to vector<8x32xf32>
    %396 = vector.extract_strided_slice %393 {offsets = [0, 64], sizes = [8, 32], strides = [1, 1]} : vector<8x128xf32> to vector<8x32xf32>
    %397 = vector.extract_strided_slice %393 {offsets = [0, 96], sizes = [8, 32], strides = [1, 1]} : vector<8x128xf32> to vector<8x32xf32>
    %398 = arith.mulf %395, %355 : vector<8x32xf32>
    %399 = arith.mulf %394, %396 : vector<8x32xf32>
    %400 = arith.addf %398, %399 : vector<8x32xf32>
    %401 = math.tanh %400 : vector<8x32xf32>
    %402 = arith.mulf %397, %401 : vector<8x32xf32>
    %403 = tpu.concatenate %402, %379 in 1 : vector<8x32xf32>, vector<8x32xf32> -> vector<8x64xf32>
    %c0_142 = arith.constant 0 : index
    %c0_143 = arith.constant 0 : index
    %404 = vector.load %arg5[%c0_142, %c0_143] : memref<64x128xf32, #tpu.memory_space<vmem>>, vector<64x128xf32>
    %cst_144 = arith.constant dense<0.000000e+00> : vector<8x128xf32>
    %405 = tpu.matmul %403, %404, %cst_144 {dimension_numbers = #tpu.dot_dimension_numbers<[1], [0], [0], [1], [0, 0, 1, 1], [], []>} : vector<8x64xf32>, vector<64x128xf32>, vector<8x128xf32> -> vector<8x128xf32>
    %406 = arith.addf %405, %16 : vector<8x128xf32>
    %cst_145 = arith.constant 5.000000e-01 : f32
    %407 = vector.broadcast %cst_145 : f32 to vector<8x128xf32>
    %408 = arith.mulf %407, %406 : vector<8x128xf32>
    %409 = math.tanh %408 : vector<8x128xf32>
    %cst_146 = arith.constant 5.000000e-01 : f32
    %410 = vector.broadcast %cst_146 : f32 to vector<8x128xf32>
    %411 = arith.mulf %410, %409 : vector<8x128xf32>
    %cst_147 = arith.constant 5.000000e-01 : f32
    %412 = vector.broadcast %cst_147 : f32 to vector<8x128xf32>
    %413 = arith.addf %411, %412 : vector<8x128xf32>
    %414 = math.tanh %406 : vector<8x128xf32>
    %415 = arith.select %13, %414, %413 : vector<8x128xi1>, vector<8x128xf32>
    %416 = vector.extract_strided_slice %415 {offsets = [0, 0], sizes = [8, 32], strides = [1, 1]} : vector<8x128xf32> to vector<8x32xf32>
    %417 = vector.extract_strided_slice %415 {offsets = [0, 32], sizes = [8, 32], strides = [1, 1]} : vector<8x128xf32> to vector<8x32xf32>
    %418 = vector.extract_strided_slice %415 {offsets = [0, 64], sizes = [8, 32], strides = [1, 1]} : vector<8x128xf32> to vector<8x32xf32>
    %419 = vector.extract_strided_slice %415 {offsets = [0, 96], sizes = [8, 32], strides = [1, 1]} : vector<8x128xf32> to vector<8x32xf32>
    %420 = arith.mulf %417, %377 : vector<8x32xf32>
    %421 = arith.mulf %416, %418 : vector<8x32xf32>
    %422 = arith.addf %420, %421 : vector<8x32xf32>
    %423 = math.tanh %422 : vector<8x32xf32>
    %424 = arith.mulf %419, %423 : vector<8x32xf32>
    %c64_148 = arith.constant 64 : index
    %c0_149 = arith.constant 0 : index
    %425 = vector.load %arg13[%c64_148, %c0_149] : memref<128x32xf32, #tpu.memory_space<vmem>>, vector<8x32xf32>
    tpu.vector_store %arg13[%c64_148, %c0_149], %424 {strides = array<i32>} : memref<128x32xf32, #tpu.memory_space<vmem>>, vector<8x32xf32>,
    %c72 = arith.constant 72 : index
    %c0_150 = arith.constant 0 : index
    %426 = vector.load %arg12[%c72, %c0_150] : memref<128x128xf32, #tpu.memory_space<vmem>>, vector<8x128xf32>
    %c0_151 = arith.constant 0 : index
    %c0_152 = arith.constant 0 : index
    %427 = vector.load %arg4[%c0_151, %c0_152] : memref<32x128xf32, #tpu.memory_space<vmem>>, vector<32x128xf32>
    %cst_153 = arith.constant dense<0.000000e+00> : vector<8x128xf32>
    %428 = tpu.matmul %402, %427, %cst_153 {dimension_numbers = #tpu.dot_dimension_numbers<[1], [0], [0], [1], [0, 0, 1, 1], [], []>} : vector<8x32xf32>, vector<32x128xf32>, vector<8x128xf32> -> vector<8x128xf32>
    %429 = arith.addf %426, %428 : vector<8x128xf32>
    %cst_154 = arith.constant 5.000000e-01 : f32
    %430 = vector.broadcast %cst_154 : f32 to vector<8x128xf32>
    %431 = arith.mulf %430, %429 : vector<8x128xf32>
    %432 = math.tanh %431 : vector<8x128xf32>
    %cst_155 = arith.constant 5.000000e-01 : f32
    %433 = vector.broadcast %cst_155 : f32 to vector<8x128xf32>
    %434 = arith.mulf %433, %432 : vector<8x128xf32>
    %cst_156 = arith.constant 5.000000e-01 : f32
    %435 = vector.broadcast %cst_156 : f32 to vector<8x128xf32>
    %436 = arith.addf %434, %435 : vector<8x128xf32>
    %437 = math.tanh %429 : vector<8x128xf32>
    %438 = arith.select %13, %437, %436 : vector<8x128xi1>, vector<8x128xf32>
    %439 = vector.extract_strided_slice %438 {offsets = [0, 0], sizes = [8, 32], strides = [1, 1]} : vector<8x128xf32> to vector<8x32xf32>
    %440 = vector.extract_strided_slice %438 {offsets = [0, 32], sizes = [8, 32], strides = [1, 1]} : vector<8x128xf32> to vector<8x32xf32>
    %441 = vector.extract_strided_slice %438 {offsets = [0, 64], sizes = [8, 32], strides = [1, 1]} : vector<8x128xf32> to vector<8x32xf32>
    %442 = vector.extract_strided_slice %438 {offsets = [0, 96], sizes = [8, 32], strides = [1, 1]} : vector<8x128xf32> to vector<8x32xf32>
    %443 = arith.mulf %440, %400 : vector<8x32xf32>
    %444 = arith.mulf %439, %441 : vector<8x32xf32>
    %445 = arith.addf %443, %444 : vector<8x32xf32>
    %446 = math.tanh %445 : vector<8x32xf32>
    %447 = arith.mulf %442, %446 : vector<8x32xf32>
    %448 = tpu.concatenate %447, %424 in 1 : vector<8x32xf32>, vector<8x32xf32> -> vector<8x64xf32>
    %c0_157 = arith.constant 0 : index
    %c0_158 = arith.constant 0 : index
    %449 = vector.load %arg5[%c0_157, %c0_158] : memref<64x128xf32, #tpu.memory_space<vmem>>, vector<64x128xf32>
    %cst_159 = arith.constant dense<0.000000e+00> : vector<8x128xf32>
    %450 = tpu.matmul %448, %449, %cst_159 {dimension_numbers = #tpu.dot_dimension_numbers<[1], [0], [0], [1], [0, 0, 1, 1], [], []>} : vector<8x64xf32>, vector<64x128xf32>, vector<8x128xf32> -> vector<8x128xf32>
    %451 = arith.addf %450, %16 : vector<8x128xf32>
    %cst_160 = arith.constant 5.000000e-01 : f32
    %452 = vector.broadcast %cst_160 : f32 to vector<8x128xf32>
    %453 = arith.mulf %452, %451 : vector<8x128xf32>
    %454 = math.tanh %453 : vector<8x128xf32>
    %cst_161 = arith.constant 5.000000e-01 : f32
    %455 = vector.broadcast %cst_161 : f32 to vector<8x128xf32>
    %456 = arith.mulf %455, %454 : vector<8x128xf32>
    %cst_162 = arith.constant 5.000000e-01 : f32
    %457 = vector.broadcast %cst_162 : f32 to vector<8x128xf32>
    %458 = arith.addf %456, %457 : vector<8x128xf32>
    %459 = math.tanh %451 : vector<8x128xf32>
    %460 = arith.select %13, %459, %458 : vector<8x128xi1>, vector<8x128xf32>
    %461 = vector.extract_strided_slice %460 {offsets = [0, 0], sizes = [8, 32], strides = [1, 1]} : vector<8x128xf32> to vector<8x32xf32>
    %462 = vector.extract_strided_slice %460 {offsets = [0, 32], sizes = [8, 32], strides = [1, 1]} : vector<8x128xf32> to vector<8x32xf32>
    %463 = vector.extract_strided_slice %460 {offsets = [0, 64], sizes = [8, 32], strides = [1, 1]} : vector<8x128xf32> to vector<8x32xf32>
    %464 = vector.extract_strided_slice %460 {offsets = [0, 96], sizes = [8, 32], strides = [1, 1]} : vector<8x128xf32> to vector<8x32xf32>
    %465 = arith.mulf %462, %422 : vector<8x32xf32>
    %466 = arith.mulf %461, %463 : vector<8x32xf32>
    %467 = arith.addf %465, %466 : vector<8x32xf32>
    %468 = math.tanh %467 : vector<8x32xf32>
    %469 = arith.mulf %464, %468 : vector<8x32xf32>
    %c72_163 = arith.constant 72 : index
    %c0_164 = arith.constant 0 : index
    %470 = vector.load %arg13[%c72_163, %c0_164] : memref<128x32xf32, #tpu.memory_space<vmem>>, vector<8x32xf32>
    tpu.vector_store %arg13[%c72_163, %c0_164], %469 {strides = array<i32>} : memref<128x32xf32, #tpu.memory_space<vmem>>, vector<8x32xf32>,
    %c80 = arith.constant 80 : index
    %c0_165 = arith.constant 0 : index
    %471 = vector.load %arg12[%c80, %c0_165] : memref<128x128xf32, #tpu.memory_space<vmem>>, vector<8x128xf32>
    %c0_166 = arith.constant 0 : index
    %c0_167 = arith.constant 0 : index
    %472 = vector.load %arg4[%c0_166, %c0_167] : memref<32x128xf32, #tpu.memory_space<vmem>>, vector<32x128xf32>
    %cst_168 = arith.constant dense<0.000000e+00> : vector<8x128xf32>
    %473 = tpu.matmul %447, %472, %cst_168 {dimension_numbers = #tpu.dot_dimension_numbers<[1], [0], [0], [1], [0, 0, 1, 1], [], []>} : vector<8x32xf32>, vector<32x128xf32>, vector<8x128xf32> -> vector<8x128xf32>
    %474 = arith.addf %471, %473 : vector<8x128xf32>
    %cst_169 = arith.constant 5.000000e-01 : f32
    %475 = vector.broadcast %cst_169 : f32 to vector<8x128xf32>
    %476 = arith.mulf %475, %474 : vector<8x128xf32>
    %477 = math.tanh %476 : vector<8x128xf32>
    %cst_170 = arith.constant 5.000000e-01 : f32
    %478 = vector.broadcast %cst_170 : f32 to vector<8x128xf32>
    %479 = arith.mulf %478, %477 : vector<8x128xf32>
    %cst_171 = arith.constant 5.000000e-01 : f32
    %480 = vector.broadcast %cst_171 : f32 to vector<8x128xf32>
    %481 = arith.addf %479, %480 : vector<8x128xf32>
    %482 = math.tanh %474 : vector<8x128xf32>
    %483 = arith.select %13, %482, %481 : vector<8x128xi1>, vector<8x128xf32>
    %484 = vector.extract_strided_slice %483 {offsets = [0, 0], sizes = [8, 32], strides = [1, 1]} : vector<8x128xf32> to vector<8x32xf32>
    %485 = vector.extract_strided_slice %483 {offsets = [0, 32], sizes = [8, 32], strides = [1, 1]} : vector<8x128xf32> to vector<8x32xf32>
    %486 = vector.extract_strided_slice %483 {offsets = [0, 64], sizes = [8, 32], strides = [1, 1]} : vector<8x128xf32> to vector<8x32xf32>
    %487 = vector.extract_strided_slice %483 {offsets = [0, 96], sizes = [8, 32], strides = [1, 1]} : vector<8x128xf32> to vector<8x32xf32>
    %488 = arith.mulf %485, %445 : vector<8x32xf32>
    %489 = arith.mulf %484, %486 : vector<8x32xf32>
    %490 = arith.addf %488, %489 : vector<8x32xf32>
    %491 = math.tanh %490 : vector<8x32xf32>
    %492 = arith.mulf %487, %491 : vector<8x32xf32>
    %493 = tpu.concatenate %492, %469 in 1 : vector<8x32xf32>, vector<8x32xf32> -> vector<8x64xf32>
    %c0_172 = arith.constant 0 : index
    %c0_173 = arith.constant 0 : index
    %494 = vector.load %arg5[%c0_172, %c0_173] : memref<64x128xf32, #tpu.memory_space<vmem>>, vector<64x128xf32>
    %cst_174 = arith.constant dense<0.000000e+00> : vector<8x128xf32>
    %495 = tpu.matmul %493, %494, %cst_174 {dimension_numbers = #tpu.dot_dimension_numbers<[1], [0], [0], [1], [0, 0, 1, 1], [], []>} : vector<8x64xf32>, vector<64x128xf32>, vector<8x128xf32> -> vector<8x128xf32>
    %496 = arith.addf %495, %16 : vector<8x128xf32>
    %cst_175 = arith.constant 5.000000e-01 : f32
    %497 = vector.broadcast %cst_175 : f32 to vector<8x128xf32>
    %498 = arith.mulf %497, %496 : vector<8x128xf32>
    %499 = math.tanh %498 : vector<8x128xf32>
    %cst_176 = arith.constant 5.000000e-01 : f32
    %500 = vector.broadcast %cst_176 : f32 to vector<8x128xf32>
    %501 = arith.mulf %500, %499 : vector<8x128xf32>
    %cst_177 = arith.constant 5.000000e-01 : f32
    %502 = vector.broadcast %cst_177 : f32 to vector<8x128xf32>
    %503 = arith.addf %501, %502 : vector<8x128xf32>
    %504 = math.tanh %496 : vector<8x128xf32>
    %505 = arith.select %13, %504, %503 : vector<8x128xi1>, vector<8x128xf32>
    %506 = vector.extract_strided_slice %505 {offsets = [0, 0], sizes = [8, 32], strides = [1, 1]} : vector<8x128xf32> to vector<8x32xf32>
    %507 = vector.extract_strided_slice %505 {offsets = [0, 32], sizes = [8, 32], strides = [1, 1]} : vector<8x128xf32> to vector<8x32xf32>
    %508 = vector.extract_strided_slice %505 {offsets = [0, 64], sizes = [8, 32], strides = [1, 1]} : vector<8x128xf32> to vector<8x32xf32>
    %509 = vector.extract_strided_slice %505 {offsets = [0, 96], sizes = [8, 32], strides = [1, 1]} : vector<8x128xf32> to vector<8x32xf32>
    %510 = arith.mulf %507, %467 : vector<8x32xf32>
    %511 = arith.mulf %506, %508 : vector<8x32xf32>
    %512 = arith.addf %510, %511 : vector<8x32xf32>
    %513 = math.tanh %512 : vector<8x32xf32>
    %514 = arith.mulf %509, %513 : vector<8x32xf32>
    %c80_178 = arith.constant 80 : index
    %c0_179 = arith.constant 0 : index
    %515 = vector.load %arg13[%c80_178, %c0_179] : memref<128x32xf32, #tpu.memory_space<vmem>>, vector<8x32xf32>
    tpu.vector_store %arg13[%c80_178, %c0_179], %514 {strides = array<i32>} : memref<128x32xf32, #tpu.memory_space<vmem>>, vector<8x32xf32>,
    %c88 = arith.constant 88 : index
    %c0_180 = arith.constant 0 : index
    %516 = vector.load %arg12[%c88, %c0_180] : memref<128x128xf32, #tpu.memory_space<vmem>>, vector<8x128xf32>
    %c0_181 = arith.constant 0 : index
    %c0_182 = arith.constant 0 : index
    %517 = vector.load %arg4[%c0_181, %c0_182] : memref<32x128xf32, #tpu.memory_space<vmem>>, vector<32x128xf32>
    %cst_183 = arith.constant dense<0.000000e+00> : vector<8x128xf32>
    %518 = tpu.matmul %492, %517, %cst_183 {dimension_numbers = #tpu.dot_dimension_numbers<[1], [0], [0], [1], [0, 0, 1, 1], [], []>} : vector<8x32xf32>, vector<32x128xf32>, vector<8x128xf32> -> vector<8x128xf32>
    %519 = arith.addf %516, %518 : vector<8x128xf32>
    %cst_184 = arith.constant 5.000000e-01 : f32
    %520 = vector.broadcast %cst_184 : f32 to vector<8x128xf32>
    %521 = arith.mulf %520, %519 : vector<8x128xf32>
    %522 = math.tanh %521 : vector<8x128xf32>
    %cst_185 = arith.constant 5.000000e-01 : f32
    %523 = vector.broadcast %cst_185 : f32 to vector<8x128xf32>
    %524 = arith.mulf %523, %522 : vector<8x128xf32>
    %cst_186 = arith.constant 5.000000e-01 : f32
    %525 = vector.broadcast %cst_186 : f32 to vector<8x128xf32>
    %526 = arith.addf %524, %525 : vector<8x128xf32>
    %527 = math.tanh %519 : vector<8x128xf32>
    %528 = arith.select %13, %527, %526 : vector<8x128xi1>, vector<8x128xf32>
    %529 = vector.extract_strided_slice %528 {offsets = [0, 0], sizes = [8, 32], strides = [1, 1]} : vector<8x128xf32> to vector<8x32xf32>
    %530 = vector.extract_strided_slice %528 {offsets = [0, 32], sizes = [8, 32], strides = [1, 1]} : vector<8x128xf32> to vector<8x32xf32>
    %531 = vector.extract_strided_slice %528 {offsets = [0, 64], sizes = [8, 32], strides = [1, 1]} : vector<8x128xf32> to vector<8x32xf32>
    %532 = vector.extract_strided_slice %528 {offsets = [0, 96], sizes = [8, 32], strides = [1, 1]} : vector<8x128xf32> to vector<8x32xf32>
    %533 = arith.mulf %530, %490 : vector<8x32xf32>
    %534 = arith.mulf %529, %531 : vector<8x32xf32>
    %535 = arith.addf %533, %534 : vector<8x32xf32>
    %536 = math.tanh %535 : vector<8x32xf32>
    %537 = arith.mulf %532, %536 : vector<8x32xf32>
    %538 = tpu.concatenate %537, %514 in 1 : vector<8x32xf32>, vector<8x32xf32> -> vector<8x64xf32>
    %c0_187 = arith.constant 0 : index
    %c0_188 = arith.constant 0 : index
    %539 = vector.load %arg5[%c0_187, %c0_188] : memref<64x128xf32, #tpu.memory_space<vmem>>, vector<64x128xf32>
    %cst_189 = arith.constant dense<0.000000e+00> : vector<8x128xf32>
    %540 = tpu.matmul %538, %539, %cst_189 {dimension_numbers = #tpu.dot_dimension_numbers<[1], [0], [0], [1], [0, 0, 1, 1], [], []>} : vector<8x64xf32>, vector<64x128xf32>, vector<8x128xf32> -> vector<8x128xf32>
    %541 = arith.addf %540, %16 : vector<8x128xf32>
    %cst_190 = arith.constant 5.000000e-01 : f32
    %542 = vector.broadcast %cst_190 : f32 to vector<8x128xf32>
    %543 = arith.mulf %542, %541 : vector<8x128xf32>
    %544 = math.tanh %543 : vector<8x128xf32>
    %cst_191 = arith.constant 5.000000e-01 : f32
    %545 = vector.broadcast %cst_191 : f32 to vector<8x128xf32>
    %546 = arith.mulf %545, %544 : vector<8x128xf32>
    %cst_192 = arith.constant 5.000000e-01 : f32
    %547 = vector.broadcast %cst_192 : f32 to vector<8x128xf32>
    %548 = arith.addf %546, %547 : vector<8x128xf32>
    %549 = math.tanh %541 : vector<8x128xf32>
    %550 = arith.select %13, %549, %548 : vector<8x128xi1>, vector<8x128xf32>
    %551 = vector.extract_strided_slice %550 {offsets = [0, 0], sizes = [8, 32], strides = [1, 1]} : vector<8x128xf32> to vector<8x32xf32>
    %552 = vector.extract_strided_slice %550 {offsets = [0, 32], sizes = [8, 32], strides = [1, 1]} : vector<8x128xf32> to vector<8x32xf32>
    %553 = vector.extract_strided_slice %550 {offsets = [0, 64], sizes = [8, 32], strides = [1, 1]} : vector<8x128xf32> to vector<8x32xf32>
    %554 = vector.extract_strided_slice %550 {offsets = [0, 96], sizes = [8, 32], strides = [1, 1]} : vector<8x128xf32> to vector<8x32xf32>
    %555 = arith.mulf %552, %512 : vector<8x32xf32>
    %556 = arith.mulf %551, %553 : vector<8x32xf32>
    %557 = arith.addf %555, %556 : vector<8x32xf32>
    %558 = math.tanh %557 : vector<8x32xf32>
    %559 = arith.mulf %554, %558 : vector<8x32xf32>
    %c88_193 = arith.constant 88 : index
    %c0_194 = arith.constant 0 : index
    %560 = vector.load %arg13[%c88_193, %c0_194] : memref<128x32xf32, #tpu.memory_space<vmem>>, vector<8x32xf32>
    tpu.vector_store %arg13[%c88_193, %c0_194], %559 {strides = array<i32>} : memref<128x32xf32, #tpu.memory_space<vmem>>, vector<8x32xf32>,
    %c96 = arith.constant 96 : index
    %c0_195 = arith.constant 0 : index
    %561 = vector.load %arg12[%c96, %c0_195] : memref<128x128xf32, #tpu.memory_space<vmem>>, vector<8x128xf32>
    %c0_196 = arith.constant 0 : index
    %c0_197 = arith.constant 0 : index
    %562 = vector.load %arg4[%c0_196, %c0_197] : memref<32x128xf32, #tpu.memory_space<vmem>>, vector<32x128xf32>
    %cst_198 = arith.constant dense<0.000000e+00> : vector<8x128xf32>
    %563 = tpu.matmul %537, %562, %cst_198 {dimension_numbers = #tpu.dot_dimension_numbers<[1], [0], [0], [1], [0, 0, 1, 1], [], []>} : vector<8x32xf32>, vector<32x128xf32>, vector<8x128xf32> -> vector<8x128xf32>
    %564 = arith.addf %561, %563 : vector<8x128xf32>
    %cst_199 = arith.constant 5.000000e-01 : f32
    %565 = vector.broadcast %cst_199 : f32 to vector<8x128xf32>
    %566 = arith.mulf %565, %564 : vector<8x128xf32>
    %567 = math.tanh %566 : vector<8x128xf32>
    %cst_200 = arith.constant 5.000000e-01 : f32
    %568 = vector.broadcast %cst_200 : f32 to vector<8x128xf32>
    %569 = arith.mulf %568, %567 : vector<8x128xf32>
    %cst_201 = arith.constant 5.000000e-01 : f32
    %570 = vector.broadcast %cst_201 : f32 to vector<8x128xf32>
    %571 = arith.addf %569, %570 : vector<8x128xf32>
    %572 = math.tanh %564 : vector<8x128xf32>
    %573 = arith.select %13, %572, %571 : vector<8x128xi1>, vector<8x128xf32>
    %574 = vector.extract_strided_slice %573 {offsets = [0, 0], sizes = [8, 32], strides = [1, 1]} : vector<8x128xf32> to vector<8x32xf32>
    %575 = vector.extract_strided_slice %573 {offsets = [0, 32], sizes = [8, 32], strides = [1, 1]} : vector<8x128xf32> to vector<8x32xf32>
    %576 = vector.extract_strided_slice %573 {offsets = [0, 64], sizes = [8, 32], strides = [1, 1]} : vector<8x128xf32> to vector<8x32xf32>
    %577 = vector.extract_strided_slice %573 {offsets = [0, 96], sizes = [8, 32], strides = [1, 1]} : vector<8x128xf32> to vector<8x32xf32>
    %578 = arith.mulf %575, %535 : vector<8x32xf32>
    %579 = arith.mulf %574, %576 : vector<8x32xf32>
    %580 = arith.addf %578, %579 : vector<8x32xf32>
    %581 = math.tanh %580 : vector<8x32xf32>
    %582 = arith.mulf %577, %581 : vector<8x32xf32>
    %583 = tpu.concatenate %582, %559 in 1 : vector<8x32xf32>, vector<8x32xf32> -> vector<8x64xf32>
    %c0_202 = arith.constant 0 : index
    %c0_203 = arith.constant 0 : index
    %584 = vector.load %arg5[%c0_202, %c0_203] : memref<64x128xf32, #tpu.memory_space<vmem>>, vector<64x128xf32>
    %cst_204 = arith.constant dense<0.000000e+00> : vector<8x128xf32>
    %585 = tpu.matmul %583, %584, %cst_204 {dimension_numbers = #tpu.dot_dimension_numbers<[1], [0], [0], [1], [0, 0, 1, 1], [], []>} : vector<8x64xf32>, vector<64x128xf32>, vector<8x128xf32> -> vector<8x128xf32>
    %586 = arith.addf %585, %16 : vector<8x128xf32>
    %cst_205 = arith.constant 5.000000e-01 : f32
    %587 = vector.broadcast %cst_205 : f32 to vector<8x128xf32>
    %588 = arith.mulf %587, %586 : vector<8x128xf32>
    %589 = math.tanh %588 : vector<8x128xf32>
    %cst_206 = arith.constant 5.000000e-01 : f32
    %590 = vector.broadcast %cst_206 : f32 to vector<8x128xf32>
    %591 = arith.mulf %590, %589 : vector<8x128xf32>
    %cst_207 = arith.constant 5.000000e-01 : f32
    %592 = vector.broadcast %cst_207 : f32 to vector<8x128xf32>
    %593 = arith.addf %591, %592 : vector<8x128xf32>
    %594 = math.tanh %586 : vector<8x128xf32>
    %595 = arith.select %13, %594, %593 : vector<8x128xi1>, vector<8x128xf32>
    %596 = vector.extract_strided_slice %595 {offsets = [0, 0], sizes = [8, 32], strides = [1, 1]} : vector<8x128xf32> to vector<8x32xf32>
    %597 = vector.extract_strided_slice %595 {offsets = [0, 32], sizes = [8, 32], strides = [1, 1]} : vector<8x128xf32> to vector<8x32xf32>
    %598 = vector.extract_strided_slice %595 {offsets = [0, 64], sizes = [8, 32], strides = [1, 1]} : vector<8x128xf32> to vector<8x32xf32>
    %599 = vector.extract_strided_slice %595 {offsets = [0, 96], sizes = [8, 32], strides = [1, 1]} : vector<8x128xf32> to vector<8x32xf32>
    %600 = arith.mulf %597, %557 : vector<8x32xf32>
    %601 = arith.mulf %596, %598 : vector<8x32xf32>
    %602 = arith.addf %600, %601 : vector<8x32xf32>
    %603 = math.tanh %602 : vector<8x32xf32>
    %604 = arith.mulf %599, %603 : vector<8x32xf32>
    %c96_208 = arith.constant 96 : index
    %c0_209 = arith.constant 0 : index
    %605 = vector.load %arg13[%c96_208, %c0_209] : memref<128x32xf32, #tpu.memory_space<vmem>>, vector<8x32xf32>
    tpu.vector_store %arg13[%c96_208, %c0_209], %604 {strides = array<i32>} : memref<128x32xf32, #tpu.memory_space<vmem>>, vector<8x32xf32>,
    %c104 = arith.constant 104 : index
    %c0_210 = arith.constant 0 : index
    %606 = vector.load %arg12[%c104, %c0_210] : memref<128x128xf32, #tpu.memory_space<vmem>>, vector<8x128xf32>
    %c0_211 = arith.constant 0 : index
    %c0_212 = arith.constant 0 : index
    %607 = vector.load %arg4[%c0_211, %c0_212] : memref<32x128xf32, #tpu.memory_space<vmem>>, vector<32x128xf32>
    %cst_213 = arith.constant dense<0.000000e+00> : vector<8x128xf32>
    %608 = tpu.matmul %582, %607, %cst_213 {dimension_numbers = #tpu.dot_dimension_numbers<[1], [0], [0], [1], [0, 0, 1, 1], [], []>} : vector<8x32xf32>, vector<32x128xf32>, vector<8x128xf32> -> vector<8x128xf32>
    %609 = arith.addf %606, %608 : vector<8x128xf32>
    %cst_214 = arith.constant 5.000000e-01 : f32
    %610 = vector.broadcast %cst_214 : f32 to vector<8x128xf32>
    %611 = arith.mulf %610, %609 : vector<8x128xf32>
    %612 = math.tanh %611 : vector<8x128xf32>
    %cst_215 = arith.constant 5.000000e-01 : f32
    %613 = vector.broadcast %cst_215 : f32 to vector<8x128xf32>
    %614 = arith.mulf %613, %612 : vector<8x128xf32>
    %cst_216 = arith.constant 5.000000e-01 : f32
    %615 = vector.broadcast %cst_216 : f32 to vector<8x128xf32>
    %616 = arith.addf %614, %615 : vector<8x128xf32>
    %617 = math.tanh %609 : vector<8x128xf32>
    %618 = arith.select %13, %617, %616 : vector<8x128xi1>, vector<8x128xf32>
    %619 = vector.extract_strided_slice %618 {offsets = [0, 0], sizes = [8, 32], strides = [1, 1]} : vector<8x128xf32> to vector<8x32xf32>
    %620 = vector.extract_strided_slice %618 {offsets = [0, 32], sizes = [8, 32], strides = [1, 1]} : vector<8x128xf32> to vector<8x32xf32>
    %621 = vector.extract_strided_slice %618 {offsets = [0, 64], sizes = [8, 32], strides = [1, 1]} : vector<8x128xf32> to vector<8x32xf32>
    %622 = vector.extract_strided_slice %618 {offsets = [0, 96], sizes = [8, 32], strides = [1, 1]} : vector<8x128xf32> to vector<8x32xf32>
    %623 = arith.mulf %620, %580 : vector<8x32xf32>
    %624 = arith.mulf %619, %621 : vector<8x32xf32>
    %625 = arith.addf %623, %624 : vector<8x32xf32>
    %626 = math.tanh %625 : vector<8x32xf32>
    %627 = arith.mulf %622, %626 : vector<8x32xf32>
    %628 = tpu.concatenate %627, %604 in 1 : vector<8x32xf32>, vector<8x32xf32> -> vector<8x64xf32>
    %c0_217 = arith.constant 0 : index
    %c0_218 = arith.constant 0 : index
    %629 = vector.load %arg5[%c0_217, %c0_218] : memref<64x128xf32, #tpu.memory_space<vmem>>, vector<64x128xf32>
    %cst_219 = arith.constant dense<0.000000e+00> : vector<8x128xf32>
    %630 = tpu.matmul %628, %629, %cst_219 {dimension_numbers = #tpu.dot_dimension_numbers<[1], [0], [0], [1], [0, 0, 1, 1], [], []>} : vector<8x64xf32>, vector<64x128xf32>, vector<8x128xf32> -> vector<8x128xf32>
    %631 = arith.addf %630, %16 : vector<8x128xf32>
    %cst_220 = arith.constant 5.000000e-01 : f32
    %632 = vector.broadcast %cst_220 : f32 to vector<8x128xf32>
    %633 = arith.mulf %632, %631 : vector<8x128xf32>
    %634 = math.tanh %633 : vector<8x128xf32>
    %cst_221 = arith.constant 5.000000e-01 : f32
    %635 = vector.broadcast %cst_221 : f32 to vector<8x128xf32>
    %636 = arith.mulf %635, %634 : vector<8x128xf32>
    %cst_222 = arith.constant 5.000000e-01 : f32
    %637 = vector.broadcast %cst_222 : f32 to vector<8x128xf32>
    %638 = arith.addf %636, %637 : vector<8x128xf32>
    %639 = math.tanh %631 : vector<8x128xf32>
    %640 = arith.select %13, %639, %638 : vector<8x128xi1>, vector<8x128xf32>
    %641 = vector.extract_strided_slice %640 {offsets = [0, 0], sizes = [8, 32], strides = [1, 1]} : vector<8x128xf32> to vector<8x32xf32>
    %642 = vector.extract_strided_slice %640 {offsets = [0, 32], sizes = [8, 32], strides = [1, 1]} : vector<8x128xf32> to vector<8x32xf32>
    %643 = vector.extract_strided_slice %640 {offsets = [0, 64], sizes = [8, 32], strides = [1, 1]} : vector<8x128xf32> to vector<8x32xf32>
    %644 = vector.extract_strided_slice %640 {offsets = [0, 96], sizes = [8, 32], strides = [1, 1]} : vector<8x128xf32> to vector<8x32xf32>
    %645 = arith.mulf %642, %602 : vector<8x32xf32>
    %646 = arith.mulf %641, %643 : vector<8x32xf32>
    %647 = arith.addf %645, %646 : vector<8x32xf32>
    %648 = math.tanh %647 : vector<8x32xf32>
    %649 = arith.mulf %644, %648 : vector<8x32xf32>
    %c104_223 = arith.constant 104 : index
    %c0_224 = arith.constant 0 : index
    %650 = vector.load %arg13[%c104_223, %c0_224] : memref<128x32xf32, #tpu.memory_space<vmem>>, vector<8x32xf32>
    tpu.vector_store %arg13[%c104_223, %c0_224], %649 {strides = array<i32>} : memref<128x32xf32, #tpu.memory_space<vmem>>, vector<8x32xf32>,
    %c112 = arith.constant 112 : index
    %c0_225 = arith.constant 0 : index
    %651 = vector.load %arg12[%c112, %c0_225] : memref<128x128xf32, #tpu.memory_space<vmem>>, vector<8x128xf32>
    %c0_226 = arith.constant 0 : index
    %c0_227 = arith.constant 0 : index
    %652 = vector.load %arg4[%c0_226, %c0_227] : memref<32x128xf32, #tpu.memory_space<vmem>>, vector<32x128xf32>
    %cst_228 = arith.constant dense<0.000000e+00> : vector<8x128xf32>
    %653 = tpu.matmul %627, %652, %cst_228 {dimension_numbers = #tpu.dot_dimension_numbers<[1], [0], [0], [1], [0, 0, 1, 1], [], []>} : vector<8x32xf32>, vector<32x128xf32>, vector<8x128xf32> -> vector<8x128xf32>
    %654 = arith.addf %651, %653 : vector<8x128xf32>
    %cst_229 = arith.constant 5.000000e-01 : f32
    %655 = vector.broadcast %cst_229 : f32 to vector<8x128xf32>
    %656 = arith.mulf %655, %654 : vector<8x128xf32>
    %657 = math.tanh %656 : vector<8x128xf32>
    %cst_230 = arith.constant 5.000000e-01 : f32
    %658 = vector.broadcast %cst_230 : f32 to vector<8x128xf32>
    %659 = arith.mulf %658, %657 : vector<8x128xf32>
    %cst_231 = arith.constant 5.000000e-01 : f32
    %660 = vector.broadcast %cst_231 : f32 to vector<8x128xf32>
    %661 = arith.addf %659, %660 : vector<8x128xf32>
    %662 = math.tanh %654 : vector<8x128xf32>
    %663 = arith.select %13, %662, %661 : vector<8x128xi1>, vector<8x128xf32>
    %664 = vector.extract_strided_slice %663 {offsets = [0, 0], sizes = [8, 32], strides = [1, 1]} : vector<8x128xf32> to vector<8x32xf32>
    %665 = vector.extract_strided_slice %663 {offsets = [0, 32], sizes = [8, 32], strides = [1, 1]} : vector<8x128xf32> to vector<8x32xf32>
    %666 = vector.extract_strided_slice %663 {offsets = [0, 64], sizes = [8, 32], strides = [1, 1]} : vector<8x128xf32> to vector<8x32xf32>
    %667 = vector.extract_strided_slice %663 {offsets = [0, 96], sizes = [8, 32], strides = [1, 1]} : vector<8x128xf32> to vector<8x32xf32>
    %668 = arith.mulf %665, %625 : vector<8x32xf32>
    %669 = arith.mulf %664, %666 : vector<8x32xf32>
    %670 = arith.addf %668, %669 : vector<8x32xf32>
    %671 = math.tanh %670 : vector<8x32xf32>
    %672 = arith.mulf %667, %671 : vector<8x32xf32>
    %673 = tpu.concatenate %672, %649 in 1 : vector<8x32xf32>, vector<8x32xf32> -> vector<8x64xf32>
    %c0_232 = arith.constant 0 : index
    %c0_233 = arith.constant 0 : index
    %674 = vector.load %arg5[%c0_232, %c0_233] : memref<64x128xf32, #tpu.memory_space<vmem>>, vector<64x128xf32>
    %cst_234 = arith.constant dense<0.000000e+00> : vector<8x128xf32>
    %675 = tpu.matmul %673, %674, %cst_234 {dimension_numbers = #tpu.dot_dimension_numbers<[1], [0], [0], [1], [0, 0, 1, 1], [], []>} : vector<8x64xf32>, vector<64x128xf32>, vector<8x128xf32> -> vector<8x128xf32>
    %676 = arith.addf %675, %16 : vector<8x128xf32>
    %cst_235 = arith.constant 5.000000e-01 : f32
    %677 = vector.broadcast %cst_235 : f32 to vector<8x128xf32>
    %678 = arith.mulf %677, %676 : vector<8x128xf32>
    %679 = math.tanh %678 : vector<8x128xf32>
    %cst_236 = arith.constant 5.000000e-01 : f32
    %680 = vector.broadcast %cst_236 : f32 to vector<8x128xf32>
    %681 = arith.mulf %680, %679 : vector<8x128xf32>
    %cst_237 = arith.constant 5.000000e-01 : f32
    %682 = vector.broadcast %cst_237 : f32 to vector<8x128xf32>
    %683 = arith.addf %681, %682 : vector<8x128xf32>
    %684 = math.tanh %676 : vector<8x128xf32>
    %685 = arith.select %13, %684, %683 : vector<8x128xi1>, vector<8x128xf32>
    %686 = vector.extract_strided_slice %685 {offsets = [0, 0], sizes = [8, 32], strides = [1, 1]} : vector<8x128xf32> to vector<8x32xf32>
    %687 = vector.extract_strided_slice %685 {offsets = [0, 32], sizes = [8, 32], strides = [1, 1]} : vector<8x128xf32> to vector<8x32xf32>
    %688 = vector.extract_strided_slice %685 {offsets = [0, 64], sizes = [8, 32], strides = [1, 1]} : vector<8x128xf32> to vector<8x32xf32>
    %689 = vector.extract_strided_slice %685 {offsets = [0, 96], sizes = [8, 32], strides = [1, 1]} : vector<8x128xf32> to vector<8x32xf32>
    %690 = arith.mulf %687, %647 : vector<8x32xf32>
    %691 = arith.mulf %686, %688 : vector<8x32xf32>
    %692 = arith.addf %690, %691 : vector<8x32xf32>
    %693 = math.tanh %692 : vector<8x32xf32>
    %694 = arith.mulf %689, %693 : vector<8x32xf32>
    %c112_238 = arith.constant 112 : index
    %c0_239 = arith.constant 0 : index
    %695 = vector.load %arg13[%c112_238, %c0_239] : memref<128x32xf32, #tpu.memory_space<vmem>>, vector<8x32xf32>
    tpu.vector_store %arg13[%c112_238, %c0_239], %694 {strides = array<i32>} : memref<128x32xf32, #tpu.memory_space<vmem>>, vector<8x32xf32>,
    %c120 = arith.constant 120 : index
    %c0_240 = arith.constant 0 : index
    %696 = vector.load %arg12[%c120, %c0_240] : memref<128x128xf32, #tpu.memory_space<vmem>>, vector<8x128xf32>
    %c0_241 = arith.constant 0 : index
    %c0_242 = arith.constant 0 : index
    %697 = vector.load %arg4[%c0_241, %c0_242] : memref<32x128xf32, #tpu.memory_space<vmem>>, vector<32x128xf32>
    %cst_243 = arith.constant dense<0.000000e+00> : vector<8x128xf32>
    %698 = tpu.matmul %672, %697, %cst_243 {dimension_numbers = #tpu.dot_dimension_numbers<[1], [0], [0], [1], [0, 0, 1, 1], [], []>} : vector<8x32xf32>, vector<32x128xf32>, vector<8x128xf32> -> vector<8x128xf32>
    %699 = arith.addf %696, %698 : vector<8x128xf32>
    %cst_244 = arith.constant 5.000000e-01 : f32
    %700 = vector.broadcast %cst_244 : f32 to vector<8x128xf32>
    %701 = arith.mulf %700, %699 : vector<8x128xf32>
    %702 = math.tanh %701 : vector<8x128xf32>
    %cst_245 = arith.constant 5.000000e-01 : f32
    %703 = vector.broadcast %cst_245 : f32 to vector<8x128xf32>
    %704 = arith.mulf %703, %702 : vector<8x128xf32>
    %cst_246 = arith.constant 5.000000e-01 : f32
    %705 = vector.broadcast %cst_246 : f32 to vector<8x128xf32>
    %706 = arith.addf %704, %705 : vector<8x128xf32>
    %707 = math.tanh %699 : vector<8x128xf32>
    %708 = arith.select %13, %707, %706 : vector<8x128xi1>, vector<8x128xf32>
    %709 = vector.extract_strided_slice %708 {offsets = [0, 0], sizes = [8, 32], strides = [1, 1]} : vector<8x128xf32> to vector<8x32xf32>
    %710 = vector.extract_strided_slice %708 {offsets = [0, 32], sizes = [8, 32], strides = [1, 1]} : vector<8x128xf32> to vector<8x32xf32>
    %711 = vector.extract_strided_slice %708 {offsets = [0, 64], sizes = [8, 32], strides = [1, 1]} : vector<8x128xf32> to vector<8x32xf32>
    %712 = vector.extract_strided_slice %708 {offsets = [0, 96], sizes = [8, 32], strides = [1, 1]} : vector<8x128xf32> to vector<8x32xf32>
    %713 = arith.mulf %710, %670 : vector<8x32xf32>
    %714 = arith.mulf %709, %711 : vector<8x32xf32>
    %715 = arith.addf %713, %714 : vector<8x32xf32>
    %716 = math.tanh %715 : vector<8x32xf32>
    %717 = arith.mulf %712, %716 : vector<8x32xf32>
    %718 = tpu.concatenate %717, %694 in 1 : vector<8x32xf32>, vector<8x32xf32> -> vector<8x64xf32>
    %c0_247 = arith.constant 0 : index
    %c0_248 = arith.constant 0 : index
    %719 = vector.load %arg5[%c0_247, %c0_248] : memref<64x128xf32, #tpu.memory_space<vmem>>, vector<64x128xf32>
    %cst_249 = arith.constant dense<0.000000e+00> : vector<8x128xf32>
    %720 = tpu.matmul %718, %719, %cst_249 {dimension_numbers = #tpu.dot_dimension_numbers<[1], [0], [0], [1], [0, 0, 1, 1], [], []>} : vector<8x64xf32>, vector<64x128xf32>, vector<8x128xf32> -> vector<8x128xf32>
    %721 = arith.addf %720, %16 : vector<8x128xf32>
    %cst_250 = arith.constant 5.000000e-01 : f32
    %722 = vector.broadcast %cst_250 : f32 to vector<8x128xf32>
    %723 = arith.mulf %722, %721 : vector<8x128xf32>
    %724 = math.tanh %723 : vector<8x128xf32>
    %cst_251 = arith.constant 5.000000e-01 : f32
    %725 = vector.broadcast %cst_251 : f32 to vector<8x128xf32>
    %726 = arith.mulf %725, %724 : vector<8x128xf32>
    %cst_252 = arith.constant 5.000000e-01 : f32
    %727 = vector.broadcast %cst_252 : f32 to vector<8x128xf32>
    %728 = arith.addf %726, %727 : vector<8x128xf32>
    %729 = math.tanh %721 : vector<8x128xf32>
    %730 = arith.select %13, %729, %728 : vector<8x128xi1>, vector<8x128xf32>
    %731 = vector.extract_strided_slice %730 {offsets = [0, 0], sizes = [8, 32], strides = [1, 1]} : vector<8x128xf32> to vector<8x32xf32>
    %732 = vector.extract_strided_slice %730 {offsets = [0, 32], sizes = [8, 32], strides = [1, 1]} : vector<8x128xf32> to vector<8x32xf32>
    %733 = vector.extract_strided_slice %730 {offsets = [0, 64], sizes = [8, 32], strides = [1, 1]} : vector<8x128xf32> to vector<8x32xf32>
    %734 = vector.extract_strided_slice %730 {offsets = [0, 96], sizes = [8, 32], strides = [1, 1]} : vector<8x128xf32> to vector<8x32xf32>
    %735 = arith.mulf %732, %692 : vector<8x32xf32>
    %736 = arith.mulf %731, %733 : vector<8x32xf32>
    %737 = arith.addf %735, %736 : vector<8x32xf32>
    %738 = math.tanh %737 : vector<8x32xf32>
    %739 = arith.mulf %734, %738 : vector<8x32xf32>
    %c120_253 = arith.constant 120 : index
    %c0_254 = arith.constant 0 : index
    %740 = vector.load %arg13[%c120_253, %c0_254] : memref<128x32xf32, #tpu.memory_space<vmem>>, vector<8x32xf32>
    tpu.vector_store %arg13[%c120_253, %c0_254], %739 {strides = array<i32>} : memref<128x32xf32, #tpu.memory_space<vmem>>, vector<8x32xf32>,
    %c0_255 = arith.constant 0 : index
    %c0_256 = arith.constant 0 : index
    %741 = vector.load %arg13[%c0_255, %c0_256] : memref<128x32xf32, #tpu.memory_space<vmem>>, vector<128x32xf32>
    %c0_257 = arith.constant 0 : index
    %c0_258 = arith.constant 0 : index
    %742 = vector.load %arg7[%c0_257, %c0_258] : memref<32x48xf32, #tpu.memory_space<vmem>>, vector<32x48xf32>
    %cst_259 = arith.constant dense<0.000000e+00> : vector<128x48xf32>
    %743 = tpu.matmul %741, %742, %cst_259 {dimension_numbers = #tpu.dot_dimension_numbers<[1], [0], [0], [1], [0, 0, 1, 1], [], []>} : vector<128x32xf32>, vector<32x48xf32>, vector<128x48xf32> -> vector<128x48xf32>
    %c0_260 = arith.constant 0 : index
    %c0_261 = arith.constant 0 : index
    %744 = vector.load %arg8[%c0_260, %c0_261] : memref<1x48xf32, #tpu.memory_space<vmem>>, vector<1x48xf32>
    %745 = vector.broadcast %744 : vector<1x48xf32> to vector<128x48xf32>
    %746 = arith.addf %743, %745 : vector<128x48xf32>
    %c0_262 = arith.constant 0 : index
    %c0_263 = arith.constant 0 : index
    %747 = vector.load %arg9[%c0_262, %c0_263] : memref<48x128xf32, #tpu.memory_space<vmem>>, vector<48x128xf32>
    %cst_264 = arith.constant dense<0.000000e+00> : vector<128x128xf32>
    %748 = tpu.matmul %746, %747, %cst_264 {dimension_numbers = #tpu.dot_dimension_numbers<[1], [0], [0], [1], [0, 0, 1, 1], [], []>} : vector<128x48xf32>, vector<48x128xf32>, vector<128x128xf32> -> vector<128x128xf32>
    %c0_265 = arith.constant 0 : index
    %c0_266 = arith.constant 0 : index
    %749 = vector.load %arg10[%c0_265, %c0_266] : memref<1x128xf32, #tpu.memory_space<vmem>>, vector<1x128xf32>
    %750 = vector.broadcast %749 : vector<1x128xf32> to vector<128x128xf32>
    %751 = arith.addf %748, %750 : vector<128x128xf32>
    %c0_267 = arith.constant 0 : index
    %c0_268 = arith.constant 0 : index
    %c0_269 = arith.constant 0 : index
    %752 = vector.load %arg11[%c0_267, %c0_268, %c0_269] : memref<1x128x128xf32, #tpu.memory_space<vmem>>, vector<1x128x128xf32>
    %753 = vector.shape_cast %752 : vector<1x128x128xf32> to vector<128x128xf32>
    %754 = vector.shape_cast %751 : vector<128x128xf32> to vector<1x128x128xf32>
    tpu.vector_store %arg11[%c0_267, %c0_268, %c0_269], %754 {strides = array<i32>} : memref<1x128x128xf32, #tpu.memory_space<vmem>>, vector<1x128x128xf32>,
    return
  }
  func.func @transform_0(%arg0: i32) -> (i32, i32, i32) {
    %c0_i32 = arith.constant 0 : i32
    %c0_i32_0 = arith.constant 0 : i32
    %c0_i32_1 = arith.constant 0 : i32
    return %arg0, %c0_i32, %c0_i32_0 : i32, i32, i32
  }
  func.func @transform_1(%arg0: i32) -> (i32, i32) {
    %c0_i32 = arith.constant 0 : i32
    %c0_i32_0 = arith.constant 0 : i32
    %c0_i32_1 = arith.constant 0 : i32
    return %c0_i32, %c0_i32_0 : i32, i32
  }
  func.func @transform_2(%arg0: i32) -> (i32, i32) {
    %c0_i32 = arith.constant 0 : i32
    %c0_i32_0 = arith.constant 0 : i32
    %c0_i32_1 = arith.constant 0 : i32
    return %c0_i32, %c0_i32_0 : i32, i32
  }
  func.func @transform_3(%arg0: i32) -> (i32, i32) {
    %c0_i32 = arith.constant 0 : i32
    %c0_i32_0 = arith.constant 0 : i32
    %c0_i32_1 = arith.constant 0 : i32
    return %c0_i32, %c0_i32_0 : i32, i32
  }
  func.func @transform_4(%arg0: i32) -> (i32, i32) {
    %c0_i32 = arith.constant 0 : i32
    %c0_i32_0 = arith.constant 0 : i32
    %c0_i32_1 = arith.constant 0 : i32
    return %c0_i32, %c0_i32_0 : i32, i32
  }
  func.func @transform_5(%arg0: i32) -> (i32, i32) {
    %c0_i32 = arith.constant 0 : i32
    %c0_i32_0 = arith.constant 0 : i32
    %c0_i32_1 = arith.constant 0 : i32
    return %c0_i32, %c0_i32_0 : i32, i32
  }
  func.func @transform_6(%arg0: i32) -> (i32, i32) {
    %c0_i32 = arith.constant 0 : i32
    %c0_i32_0 = arith.constant 0 : i32
    %c0_i32_1 = arith.constant 0 : i32
    return %c0_i32, %c0_i32_0 : i32, i32
  }
  func.func @transform_7(%arg0: i32) -> (i32, i32) {
    %c0_i32 = arith.constant 0 : i32
    %c0_i32_0 = arith.constant 0 : i32
    %c0_i32_1 = arith.constant 0 : i32
    return %c0_i32, %c0_i32_0 : i32, i32
  }
  func.func @transform_8(%arg0: i32) -> (i32, i32) {
    %c0_i32 = arith.constant 0 : i32
    %c0_i32_0 = arith.constant 0 : i32
    %c0_i32_1 = arith.constant 0 : i32
    return %c0_i32, %c0_i32_0 : i32, i32
  }
  func.func @transform_9(%arg0: i32) -> (i32, i32) {
    %c0_i32 = arith.constant 0 : i32
    %c0_i32_0 = arith.constant 0 : i32
    %c0_i32_1 = arith.constant 0 : i32
    return %c0_i32, %c0_i32_0 : i32, i32
  }
  func.func @transform_10(%arg0: i32) -> (i32, i32, i32) {
    %c0_i32 = arith.constant 0 : i32
    %c0_i32_0 = arith.constant 0 : i32
    %c0_i32_1 = arith.constant 0 : i32
    return %arg0, %c0_i32, %c0_i32_0 : i32, i32, i32
  }
}

</mosaic_0001>

<llo_original>
// kernel: multinn_forward.1
$region0: #{multinn_forward.1}
  #allocation0 [shape = 'u32[]', space=smem, size = 0x4, offset = 0x4, fixed_abs, tag = 'smem constant byte address 0x4 - core index']
  #allocation1 [shape = 'u32[144,128]{1,0:T(1,128)}', space=vmem, size = 0x12000, scoped, tag = 'internal scratch']
  #allocation2 [shape = 'f32[128,128]{1,0:T(8,128)}', space=vmem, size = 0x10000, scoped, tag = 'scratch operand']
  #allocation3 [shape = 'f32[128,32]{1,0:T(8,128)}', space=vmem, size = 0x10000, scoped, tag = 'scratch operand']
  %s0 = inlined_call_operand.vmem [shape: f32[2,128,16], index: 0, kind: input, shape index: {}]
  %s1 = inlined_call_operand.vmem [shape: f32[16,128], index: 1, kind: input, shape index: {}]
  %s2 = inlined_call_operand.vmem [shape: f32[1,128], index: 2, kind: input, shape index: {}]
  %s3 = inlined_call_operand.vmem [shape: f32[32,128], index: 3, kind: input, shape index: {}]
  %s4 = inlined_call_operand.vmem [shape: f32[64,128], index: 4, kind: input, shape index: {}]
  %s5 = inlined_call_operand.vmem [shape: f32[1,128], index: 5, kind: input, shape index: {}]
  %s6 = inlined_call_operand.vmem [shape: f32[32,48], index: 6, kind: input, shape index: {}]
  %s7 = inlined_call_operand.vmem [shape: f32[1,48], index: 7, kind: input, shape index: {}]
  %s8 = inlined_call_operand.vmem [shape: f32[48,128], index: 8, kind: input, shape index: {}]
  %s9 = inlined_call_operand.vmem [shape: f32[1,128], index: 9, kind: input, shape index: {}]
  %s10 = inlined_call_operand.vmem [shape: f32[2,128,128], index: 10, kind: output, shape index: {}]
  %s11 = sld [smem:[#allocation0]]
  $region73: #{multinn_forward.1} parent=0
    _
  %s13 = ssub.s32 1, %s11
  %s14 = scalar_select 0, %s13, %s11
  loop: start=0, step=1, limit=4
  $region2: #{multinn_forward.1} parent=0 // loop_pre_header
    _
  $region3: #{multinn_forward.1} parent=0 // loop_header
    %s16 = sphi 0, %s20
    %p17 = scmp.ge.s32.totalorder %s16, 4
    %s26 = sphi 0, %s28
    %s29 = sphi 0, %s26
    %s30 = sphi 0, %s29
    %s46 = sphi 0, %s30
    %s50 = sphi 0, %s50
    %s52 = sphi 0, %s50
    %s53 = sphi 0, %s52
    %s67 = sphi 0, %s53
    %s71 = sphi 0, %s71
    %s73 = sphi 0, %s71
    %s74 = sphi 0, %s73
    %s88 = sphi 0, %s74
    %s92 = sphi 0, %s92
    %s94 = sphi 0, %s92
    %s95 = sphi 0, %s94
    %s109 = sphi 0, %s95
    %s113 = sphi 0, %s113
    %s115 = sphi 0, %s113
    %s116 = sphi 0, %s115
    %s130 = sphi 0, %s116
    %s134 = sphi 0, %s134
    %s136 = sphi 0, %s134
    %s137 = sphi 0, %s136
    %s151 = sphi 0, %s137
    %s155 = sphi 0, %s155
    %s157 = sphi 0, %s155
    %s158 = sphi 0, %s157
    %s172 = sphi 0, %s158
    %s176 = sphi 0, %s176
    %s178 = sphi 0, %s176
    %s179 = sphi 0, %s178
    %s193 = sphi 0, %s179
    %s197 = sphi 0, %s197
    %s199 = sphi 0, %s197
    %s200 = sphi 0, %s199
    %s214 = sphi 0, %s200
    %s218 = sphi 0, %s218
    %s220 = sphi 0, %s218
    %s221 = sphi 0, %s220
    %s235 = sphi 0, %s221
    %s241 = sphi 0, %s243
    %s244 = sphi 0, %s241
    %s245 = sphi 0, %s244
    %s261 = sphi 0, %s245
  $region4: #{multinn_forward.1} parent=0 // loop_header_branch
    %19 = sbr.rel (%p17) target = $region8
  $region5: #{multinn_forward.1} parent=0 // loop_body
    %s21 = ssub.s32 %s16, 1
    %s22 = ssub.s32 %s16, 2
    %s23 = sadd.s32 %s16, 1
    %s24 = ssub.s32 %s16, %s23
    %p25 = scmp.eq.s32.totalorder %s24, 0
    %s27 = sadd.s32 %s26, 1
    %s28 = scalar_select %p25, %s26, %s27
    %p31 = pneg %p25
    %p32 = scmp.eq.s32.totalorder %s16, 1
    %p33 = por %p31, %p32
    %p34 = scmp.ne.s32.totalorder %s26, %s29
    %p35 = scmp.eq.s32.totalorder %s16, 0
    %p36 = por %p34, %p35
    %p37 = scmp.ne.s32.totalorder %s26, %s29
    %p38 = scmp.eq.s32.totalorder %s21, 1
    %p39 = por %p37, %p38
    %p40 = scmp.ne.s32.totalorder %s29, %s30
    %p41 = scmp.eq.s32.totalorder %s21, 0
    %p42 = por %p40, %p41
    %p43 = scmp.ne.s32.totalorder %s29, %s30
    %p44 = scmp.eq.s32.totalorder %s22, 1
    %p45 = por %p43, %p44
    %p47 = scmp.ne.s32.totalorder %s30, %s46
    %p48 = scmp.eq.s32.totalorder %s22, 0
    %p49 = por %p47, %p48
    %s51 = sadd.s32 %s50, 1
    %p54 = scmp.eq.s32.totalorder %s16, 1
    %p55 = scmp.ne.s32.totalorder %s50, %s52
    %p56 = scmp.eq.s32.totalorder %s16, 0
    %p57 = por %p55, %p56
    %p58 = scmp.ne.s32.totalorder %s50, %s52
    %p59 = scmp.eq.s32.totalorder %s21, 1
    %p60 = por %p58, %p59
    %p61 = scmp.ne.s32.totalorder %s52, %s53
    %p62 = scmp.eq.s32.totalorder %s21, 0
    %p63 = por %p61, %p62
    %p64 = scmp.ne.s32.totalorder %s52, %s53
    %p65 = scmp.eq.s32.totalorder %s22, 1
    %p66 = por %p64, %p65
    %p68 = scmp.ne.s32.totalorder %s53, %s67
    %p69 = scmp.eq.s32.totalorder %s22, 0
    %p70 = por %p68, %p69
    %s72 = sadd.s32 %s71, 1
    %p75 = scmp.eq.s32.totalorder %s16, 1
    %p76 = scmp.ne.s32.totalorder %s71, %s73
    %p77 = scmp.eq.s32.totalorder %s16, 0
    %p78 = por %p76, %p77
    %p79 = scmp.ne.s32.totalorder %s71, %s73
    %p80 = scmp.eq.s32.totalorder %s21, 1
    %p81 = por %p79, %p80
    %p82 = scmp.ne.s32.totalorder %s73, %s74
    %p83 = scmp.eq.s32.totalorder %s21, 0
    %p84 = por %p82, %p83
    %p85 = scmp.ne.s32.totalorder %s73, %s74
    %p86 = scmp.eq.s32.totalorder %s22, 1
    %p87 = por %p85, %p86
    %p89 = scmp.ne.s32.totalorder %s74, %s88
    %p90 = scmp.eq.s32.totalorder %s22, 0
    %p91 = por %p89, %p90
    %s93 = sadd.s32 %s92, 1
    %p96 = scmp.eq.s32.totalorder %s16, 1
    %p97 = scmp.ne.s32.totalorder %s92, %s94
    %p98 = scmp.eq.s32.totalorder %s16, 0
    %p99 = por %p97, %p98
    %p100 = scmp.ne.s32.totalorder %s92, %s94
    %p101 = scmp.eq.s32.totalorder %s21, 1
    %p102 = por %p100, %p101
    %p103 = scmp.ne.s32.totalorder %s94, %s95
    %p104 = scmp.eq.s32.totalorder %s21, 0
    %p105 = por %p103, %p104
    %p106 = scmp.ne.s32.totalorder %s94, %s95
    %p107 = scmp.eq.s32.totalorder %s22, 1
    %p108 = por %p106, %p107
    %p110 = scmp.ne.s32.totalorder %s95, %s109
    %p111 = scmp.eq.s32.totalorder %s22, 0
    %p112 = por %p110, %p111
    %s114 = sadd.s32 %s113, 1
    %p117 = scmp.eq.s32.totalorder %s16, 1
    %p118 = scmp.ne.s32.totalorder %s113, %s115
    %p119 = scmp.eq.s32.totalorder %s16, 0
    %p120 = por %p118, %p119
    %p121 = scmp.ne.s32.totalorder %s113, %s115
    %p122 = scmp.eq.s32.totalorder %s21, 1
    %p123 = por %p121, %p122
    %p124 = scmp.ne.s32.totalorder %s115, %s116
    %p125 = scmp.eq.s32.totalorder %s21, 0
    %p126 = por %p124, %p125
    %p127 = scmp.ne.s32.totalorder %s115, %s116
    %p128 = scmp.eq.s32.totalorder %s22, 1
    %p129 = por %p127, %p128
    %p131 = scmp.ne.s32.totalorder %s116, %s130
    %p132 = scmp.eq.s32.totalorder %s22, 0
    %p133 = por %p131, %p132
    %s135 = sadd.s32 %s134, 1
    %p138 = scmp.eq.s32.totalorder %s16, 1
    %p139 = scmp.ne.s32.totalorder %s134, %s136
    %p140 = scmp.eq.s32.totalorder %s16, 0
    %p141 = por %p139, %p140
    %p142 = scmp.ne.s32.totalorder %s134, %s136
    %p143 = scmp.eq.s32.totalorder %s21, 1
    %p144 = por %p142, %p143
    %p145 = scmp.ne.s32.totalorder %s136, %s137
    %p146 = scmp.eq.s32.totalorder %s21, 0
    %p147 = por %p145, %p146
    %p148 = scmp.ne.s32.totalorder %s136, %s137
    %p149 = scmp.eq.s32.totalorder %s22, 1
    %p150 = por %p148, %p149
    %p152 = scmp.ne.s32.totalorder %s137, %s151
    %p153 = scmp.eq.s32.totalorder %s22, 0
    %p154 = por %p152, %p153
    %s156 = sadd.s32 %s155, 1
    %p159 = scmp.eq.s32.totalorder %s16, 1
    %p160 = scmp.ne.s32.totalorder %s155, %s157
    %p161 = scmp.eq.s32.totalorder %s16, 0
    %p162 = por %p160, %p161
    %p163 = scmp.ne.s32.totalorder %s155, %s157
    %p164 = scmp.eq.s32.totalorder %s21, 1
    %p165 = por %p163, %p164
    %p166 = scmp.ne.s32.totalorder %s157, %s158
    %p167 = scmp.eq.s32.totalorder %s21, 0
    %p168 = por %p166, %p167
    %p169 = scmp.ne.s32.totalorder %s157, %s158
    %p170 = scmp.eq.s32.totalorder %s22, 1
    %p171 = por %p169, %p170
    %p173 = scmp.ne.s32.totalorder %s158, %s172
    %p174 = scmp.eq.s32.totalorder %s22, 0
    %p175 = por %p173, %p174
    %s177 = sadd.s32 %s176, 1
    %p180 = scmp.eq.s32.totalorder %s16, 1
    %p181 = scmp.ne.s32.totalorder %s176, %s178
    %p182 = scmp.eq.s32.totalorder %s16, 0
    %p183 = por %p181, %p182
    %p184 = scmp.ne.s32.totalorder %s176, %s178
    %p185 = scmp.eq.s32.totalorder %s21, 1
    %p186 = por %p184, %p185
    %p187 = scmp.ne.s32.totalorder %s178, %s179
    %p188 = scmp.eq.s32.totalorder %s21, 0
    %p189 = por %p187, %p188
    %p190 = scmp.ne.s32.totalorder %s178, %s179
    %p191 = scmp.eq.s32.totalorder %s22, 1
    %p192 = por %p190, %p191
    %p194 = scmp.ne.s32.totalorder %s179, %s193
    %p195 = scmp.eq.s32.totalorder %s22, 0
    %p196 = por %p194, %p195
    %s198 = sadd.s32 %s197, 1
    %p201 = scmp.eq.s32.totalorder %s16, 1
    %p202 = scmp.ne.s32.totalorder %s197, %s199
    %p203 = scmp.eq.s32.totalorder %s16, 0
    %p204 = por %p202, %p203
    %p205 = scmp.ne.s32.totalorder %s197, %s199
    %p206 = scmp.eq.s32.totalorder %s21, 1
    %p207 = por %p205, %p206
    %p208 = scmp.ne.s32.totalorder %s199, %s200
    %p209 = scmp.eq.s32.totalorder %s21, 0
    %p210 = por %p208, %p209
    %p211 = scmp.ne.s32.totalorder %s199, %s200
    %p212 = scmp.eq.s32.totalorder %s22, 1
    %p213 = por %p211, %p212
    %p215 = scmp.ne.s32.totalorder %s200, %s214
    %p216 = scmp.eq.s32.totalorder %s22, 0
    %p217 = por %p215, %p216
    %s219 = sadd.s32 %s218, 1
    %p222 = scmp.eq.s32.totalorder %s16, 1
    %p223 = scmp.ne.s32.totalorder %s218, %s220
    %p224 = scmp.eq.s32.totalorder %s16, 0
    %p225 = por %p223, %p224
    %p226 = scmp.ne.s32.totalorder %s218, %s220
    %p227 = scmp.eq.s32.totalorder %s21, 1
    %p228 = por %p226, %p227
    %p229 = scmp.ne.s32.totalorder %s220, %s221
    %p230 = scmp.eq.s32.totalorder %s21, 0
    %p231 = por %p229, %p230
    %p232 = scmp.ne.s32.totalorder %s220, %s221
    %p233 = scmp.eq.s32.totalorder %s22, 1
    %p234 = por %p232, %p233
    %p236 = scmp.ne.s32.totalorder %s221, %s235
    %p237 = scmp.eq.s32.totalorder %s22, 0
    %p238 = por %p236, %p237
    %s239 = ssub.s32 %s16, %s23
    %p240 = scmp.eq.s32.totalorder %s239, 0
    %s242 = sadd.s32 %s241, 1
    %s243 = scalar_select %p240, %s241, %s242
    %p246 = pneg %p240
    %p247 = scmp.eq.s32.totalorder %s16, 1
    %p248 = por %p246, %p247
    %p249 = scmp.ne.s32.totalorder %s241, %s244
    %p250 = scmp.eq.s32.totalorder %s16, 0
    %p251 = por %p249, %p250
    %p252 = scmp.ne.s32.totalorder %s241, %s244
    %p253 = scmp.eq.s32.totalorder %s21, 1
    %p254 = por %p252, %p253
    %p255 = scmp.ne.s32.totalorder %s244, %s245
    %p256 = scmp.eq.s32.totalorder %s21, 0
    %p257 = por %p255, %p256
    %p258 = scmp.ne.s32.totalorder %s244, %s245
    %p259 = scmp.eq.s32.totalorder %s22, 1
    %p260 = por %p258, %p259
    %p262 = scmp.ne.s32.totalorder %s245, %s261
    %p263 = scmp.eq.s32.totalorder %s22, 0
    %p264 = por %p262, %p263
    %p265 = scmp.le.s32.totalorder 1, %s16
    %p266 = scmp.lt.s32.totalorder %s16, 3
    %p267 = pnand %p265, %p266
    %p268 = pneg %p267
    // Predicated region
    $region9: #{multinn_forward.1} parent=5 // pred_check
      _
    $region10: #{multinn_forward.1} parent=5 // pred_check_branch
      %270 = sbr.rel (%p267) target = $region12
    $region11: #{multinn_forward.1} parent=5 // pred_region
      %s271 = ssub.s32 %s16, 1
      // Predicated region
      $region13: #{multinn_forward.1} parent=11 // pred_check
        %p272 = pneg %p63
      $region14: #{multinn_forward.1} parent=11 // pred_check_branch
        %274 = sbr.rel (%p272) target = $region16
      $region15: #{multinn_forward.1} parent=11 // pred_region
        _
      $region16: #{multinn_forward.1} parent=11 // pred_fallthru
        _
      // Predicated region
      $region17: #{multinn_forward.1} parent=11 // pred_check
        %p275 = pneg %p84
      $region18: #{multinn_forward.1} parent=11 // pred_check_branch
        %277 = sbr.rel (%p275) target = $region20
      $region19: #{multinn_forward.1} parent=11 // pred_region
        _
      $region20: #{multinn_forward.1} parent=11 // pred_fallthru
        _
      // Predicated region
      $region21: #{multinn_forward.1} parent=11 // pred_check
        %p278 = pneg %p105
      $region22: #{multinn_forward.1} parent=11 // pred_check_branch
        %280 = sbr.rel (%p278) target = $region24
      $region23: #{multinn_forward.1} parent=11 // pred_region
        _
      $region24: #{multinn_forward.1} parent=11 // pred_fallthru
        _
      // Predicated region
      $region25: #{multinn_forward.1} parent=11 // pred_check
        %p281 = pneg %p126
      $region26: #{multinn_forward.1} parent=11 // pred_check_branch
        %283 = sbr.rel (%p281) target = $region28
      $region27: #{multinn_forward.1} parent=11 // pred_region
        _
      $region28: #{multinn_forward.1} parent=11 // pred_fallthru
        _
      // Predicated region
      $region29: #{multinn_forward.1} parent=11 // pred_check
        %p284 = pneg %p147
      $region30: #{multinn_forward.1} parent=11 // pred_check_branch
        %286 = sbr.rel (%p284) target = $region32
      $region31: #{multinn_forward.1} parent=11 // pred_region
        _
      $region32: #{multinn_forward.1} parent=11 // pred_fallthru
        _
      // Predicated region
      $region33: #{multinn_forward.1} parent=11 // pred_check
        %p287 = pneg %p168
      $region34: #{multinn_forward.1} parent=11 // pred_check_branch
        %289 = sbr.rel (%p287) target = $region36
      $region35: #{multinn_forward.1} parent=11 // pred_region
        _
      $region36: #{multinn_forward.1} parent=11 // pred_fallthru
        _
      // Predicated region
      $region37: #{multinn_forward.1} parent=11 // pred_check
        %p290 = pneg %p189
      $region38: #{multinn_forward.1} parent=11 // pred_check_branch
        %292 = sbr.rel (%p290) target = $region40
      $region39: #{multinn_forward.1} parent=11 // pred_region
        _
      $region40: #{multinn_forward.1} parent=11 // pred_fallthru
        _
      // Predicated region
      $region41: #{multinn_forward.1} parent=11 // pred_check
        %p293 = pneg %p210
      $region42: #{multinn_forward.1} parent=11 // pred_check_branch
        %295 = sbr.rel (%p293) target = $region44
      $region43: #{multinn_forward.1} parent=11 // pred_region
        _
      $region44: #{multinn_forward.1} parent=11 // pred_fallthru
        _
      // Predicated region
      $region45: #{multinn_forward.1} parent=11 // pred_check
        %p296 = pneg %p231
      $region46: #{multinn_forward.1} parent=11 // pred_check_branch
        %298 = sbr.rel (%p296) target = $region48
      $region47: #{multinn_forward.1} parent=11 // pred_region
        _
      $region48: #{multinn_forward.1} parent=11 // pred_fallthru
        _
    $region12: #{multinn_forward.1} parent=5 // pred_fallthru
      _
    %p299 = scmp.lt.s32.totalorder %s16, 2
    // Predicated region
    $region49: #{multinn_forward.1} parent=5 // pred_check
      %p300 = pneg %p299
    $region50: #{multinn_forward.1} parent=5 // pred_check_branch
      %302 = sbr.rel (%p300) target = $region52
    $region51: #{multinn_forward.1} parent=5 // pred_region
      // Predicated region
      $region53: #{multinn_forward.1} parent=51 // pred_check
        %p303 = pneg %p36
      $region54: #{multinn_forward.1} parent=51 // pred_check_branch
        %305 = sbr.rel (%p303) target = $region56
      $region55: #{multinn_forward.1} parent=51 // pred_region
        %p306 = scmp.lt.s32.totalorder %s16, 1
        %s307 = scalar_select %p306, %s16, 1
        %s308 = smul.addr %s307, 16
        %s309 = smul.addr %s308, 8
        %s310 = scalar_lea.vmem %s0, %s309
      $region56: #{multinn_forward.1} parent=51 // pred_fallthru
        _
    $region52: #{multinn_forward.1} parent=5 // pred_fallthru
      _
    %p311 = scmp.le.s32.totalorder 1, %s16
    %p312 = scmp.lt.s32.totalorder %s16, 3
    %p313 = pnand %p311, %p312
    %p314 = pneg %p313
    // Predicated region
    $region57: #{multinn_forward.1} parent=5 // pred_check
      _
    $region58: #{multinn_forward.1} parent=5 // pred_check_branch
      %316 = sbr.rel (%p313) target = $region60
    $region59: #{multinn_forward.1} parent=5 // pred_region
      %s317 = ssub.s32 %s16, 1
      %p318 = scmp.lt.s32.totalorder %s21, 1
      %s319 = scalar_select %p318, %s21, 1
      %s320 = smul.addr %s319, 16
      %s321 = smul.addr %s320, 8
      %s322 = scalar_lea.vmem %s0, %s321
      %p323 = pneg %p42
      %p324 = pneg %p39
      %p325 = pneg %p63
      %p326 = pneg %p60
      %p327 = pneg %p84
      %p328 = pneg %p81
      %p329 = pneg %p105
      %p330 = pneg %p102
      %p331 = pneg %p126
      %p332 = pneg %p123
      %p333 = pneg %p147
      %p334 = pneg %p144
      %p335 = pneg %p168
      %p336 = pneg %p165
      %p337 = pneg %p189
      %p338 = pneg %p186
      %p339 = pneg %p210
      %p340 = pneg %p207
      %p341 = pneg %p231
      %p342 = pneg %p228
      %p343 = pneg %p257
      %p344 = pneg %p254
      %p345 = scmp.lt.s32.totalorder %s21, 1
      %s346 = scalar_select %p345, %s21, 1
      %s347 = smul.addr %s346, 16
      %s348 = smul.addr %s347, 8
      %s349 = scalar_lea.vmem %s10, %s348
      %p350 = scmp.lt.s32.totalorder %s21, 1
      %s351 = scalar_select %p350, %s21, 1
      %s352 = smul.addr %s351, 16
      %s353 = smul.addr %s352, 8
      %s354 = scalar_lea.vmem %s0, %s353
      %p355 = scmp.lt.s32.totalorder %s21, 1
      %s356 = scalar_select %p355, %s21, 1
      %s357 = smul.addr %s356, 16
      %s358 = smul.addr %s357, 8
      %s359 = scalar_lea.vmem %s10, %s358
      %v360 = vld [vmem:[%s354] sm:$0xff]
      %v361 = vld [vmem:[%s354 + $0x8] sm:$0xff]
      %v362 = vld [vmem:[%s354 + $0x10] sm:$0xff]
      %v363 = vld [vmem:[%s354 + $0x18] sm:$0xff]
      %v364 = vld [vmem:[%s354 + $0x20] sm:$0xff]
      %v365 = vld [vmem:[%s354 + $0x28] sm:$0xff]
      %v366 = vld [vmem:[%s354 + $0x30] sm:$0xff]
      %v367 = vld [vmem:[%s354 + $0x38] sm:$0xff]
      %v368 = vld [vmem:[%s354 + $0x40] sm:$0xff]
      %v369 = vld [vmem:[%s354 + $0x48] sm:$0xff]
      %v370 = vld [vmem:[%s354 + $0x50] sm:$0xff]
      %v371 = vld [vmem:[%s354 + $0x58] sm:$0xff]
      %v372 = vld [vmem:[%s354 + $0x60] sm:$0xff]
      %v373 = vld [vmem:[%s354 + $0x68] sm:$0xff]
      %v374 = vld [vmem:[%s354 + $0x70] sm:$0xff]
      %v375 = vld [vmem:[%s354 + $0x78] sm:$0xff]
      %v376 = vld [vmem:[%s1] sm:$0xff]
      %v377 = vld [vmem:[%s1 + $0x8] sm:$0xff]
      %v378 = vld [vmem:[%s2] sm:$0x1]
      %v380 = vlaneseq
      %v381 = vshrl.u32 %v380, 7
      %v382 = vsub.s32 0, %v381
      %v383 = vrot.slane %v378, %v382
      %vm385 = vcmask 130048
      %v387 = vsel %vm385, %v360, 0
      %v390 = vsel %vm385, %v361, 0
      %v393 = vsel %vm385, %v362, 0
      %v396 = vsel %vm385, %v363, 0
      %v399 = vsel %vm385, %v364, 0
      %v402 = vsel %vm385, %v365, 0
      %v405 = vsel %vm385, %v366, 0
      %v408 = vsel %vm385, %v367, 0
      %v411 = vsel %vm385, %v368, 0
      %v414 = vsel %vm385, %v369, 0
      %v417 = vsel %vm385, %v370, 0
      %v420 = vsel %vm385, %v371, 0
      %v423 = vsel %vm385, %v372, 0
      %v426 = vsel %vm385, %v373, 0
      %v429 = vsel %vm385, %v374, 0
      %v432 = vsel %vm385, %v375, 0
      %434 = vmatprep.subr.mxu0 0.0
      %435 = vmatpush1.msra.mxu0 %v376
      %436 = vmatprep.subr.mxu0 0.0
      %437 = vmatpush1.msra.mxu0 %v377
      %438 = vmatprep.subr.mxu0 0.0
      %439 = vmatpush1.msra.mxu0 0.0
      %440 = vmatprep.subr.mxu0 0.0
      %441 = vmatpush1.msra.mxu0 0.0
      %442 = vmatprep.subr.mxu0 0.0
      %443 = vmatpush1.msra.mxu0 0.0
      %444 = vmatprep.subr.mxu0 0.0
      %445 = vmatpush1.msra.mxu0 0.0
      %446 = vmatprep.subr.mxu0 0.0
      %447 = vmatpush1.msra.mxu0 0.0
      %448 = vmatprep.subr.mxu0 0.0
      %449 = vmatpush1.msra.mxu0 0.0
      %450 = vmatprep.subr.mxu0 0.0
      %451 = vmatpush1.msra.mxu0 0.0
      %452 = vmatprep.subr.mxu0 0.0
      %453 = vmatpush1.msra.mxu0 0.0
      %454 = vmatprep.subr.mxu0 0.0
      %455 = vmatpush1.msra.mxu0 0.0
      %456 = vmatprep.subr.mxu0 0.0
      %457 = vmatpush1.msra.mxu0 0.0
      %458 = vmatprep.subr.mxu0 0.0
      %459 = vmatpush1.msra.mxu0 0.0
      %460 = vmatprep.subr.mxu0 0.0
      %461 = vmatpush1.msra.mxu0 0.0
      %462 = vmatprep.subr.mxu0 0.0
      %463 = vmatpush1.msra.mxu0 0.0
      %464 = vmatprep.subr.mxu0 0.0
      %465 = vmatpush1.msra.mxu0 0.0
      %466 = vmatprep.subr.mxu0 0.0
      %467 = vmatpush1.msra.mxu0 0.0
      %468 = vmatprep.subr.mxu0 0.0
      %469 = vmatpush1.msra.mxu0 0.0
      %470 = vmatprep.subr.mxu0 0.0
      %471 = vmatpush1.msra.mxu0 0.0
      %472 = vmatprep.subr.mxu0 0.0
      %473 = vmatpush1.msra.mxu0 0.0
      %474 = vmatprep.subr.mxu0 0.0
      %475 = vmatpush1.msra.mxu0 0.0
      %476 = vmatprep.subr.mxu0 0.0
      %477 = vmatpush1.msra.mxu0 0.0
      %478 = vmatprep.subr.mxu0 0.0
      %479 = vmatpush1.msra.mxu0 0.0
      %480 = vmatprep.subr.mxu0 0.0
      %481 = vmatpush1.msra.mxu0 0.0
      %482 = vmatprep.subr.mxu0 0.0
      %483 = vmatpush1.msra.mxu0 0.0
      %484 = vmatprep.subr.mxu0 0.0
      %485 = vmatpush1.msra.mxu0 0.0
      %486 = vmatprep.subr.mxu0 0.0
      %487 = vmatpush1.msra.mxu0 0.0
      %488 = vmatprep.subr.mxu0 0.0
      %489 = vmatpush1.msra.mxu0 0.0
      %490 = vmatprep.subr.mxu0 0.0
      %491 = vmatpush1.msra.mxu0 0.0
      %492 = vmatprep.subr.mxu0 0.0
      %493 = vmatpush1.msra.mxu0 0.0
      %494 = vmatprep.subr.mxu0 0.0
      %495 = vmatpush1.msra.mxu0 0.0
      %496 = vmatprep.subr.mxu0 0.0
      %497 = vmatpush1.msra.mxu0 0.0
      %498 = vmatprep.mubr.f32.mxu0 0.0
      %499 = vmatmul.mubr.f32.gmra.mrb[0].mxu0 %v387
      %v500 = vpop.f32.mrb[0].mxu0
      %v501 = vadd.f32 %v383, %v500
      %v502 = vpop.f32.mrb[0].mxu0
      %503 = vmatprep.mubr.f32.mxu0 0.0
      %504 = vmatmul.mubr.f32.gmra.mrb[0].mxu0 %v390
      %v505 = vpop.f32.mrb[0].mxu0
      %v506 = vadd.f32 %v383, %v505
      %v507 = vpop.f32.mrb[0].mxu0
      %508 = vmatprep.mubr.f32.mxu0 0.0
      %509 = vmatmul.mubr.f32.gmra.mrb[0].mxu0 %v393
      %v510 = vpop.f32.mrb[0].mxu0
      %v511 = vadd.f32 %v383, %v510
      %v512 = vpop.f32.mrb[0].mxu0
      %513 = vmatprep.mubr.f32.mxu0 0.0
      %514 = vmatmul.mubr.f32.gmra.mrb[0].mxu0 %v396
      %v515 = vpop.f32.mrb[0].mxu0
      %v516 = vadd.f32 %v383, %v515
      %v517 = vpop.f32.mrb[0].mxu0
      %518 = vmatprep.mubr.f32.mxu0 0.0
      %519 = vmatmul.mubr.f32.gmra.mrb[0].mxu0 %v399
      %v520 = vpop.f32.mrb[0].mxu0
      %v521 = vadd.f32 %v383, %v520
      %v522 = vpop.f32.mrb[0].mxu0
      %523 = vmatprep.mubr.f32.mxu0 0.0
      %524 = vmatmul.mubr.f32.gmra.mrb[0].mxu0 %v402
      %v525 = vpop.f32.mrb[0].mxu0
      %v526 = vadd.f32 %v383, %v525
      %v527 = vpop.f32.mrb[0].mxu0
      %528 = vmatprep.mubr.f32.mxu0 0.0
      %529 = vmatmul.mubr.f32.gmra.mrb[0].mxu0 %v405
      %v530 = vpop.f32.mrb[0].mxu0
      %v531 = vadd.f32 %v383, %v530
      %v532 = vpop.f32.mrb[0].mxu0
      %533 = vmatprep.mubr.f32.mxu0 0.0
      %534 = vmatmul.mubr.f32.gmra.mrb[0].mxu0 %v408
      %v535 = vpop.f32.mrb[0].mxu0
      %v536 = vadd.f32 %v383, %v535
      %v537 = vpop.f32.mrb[0].mxu0
      %538 = vmatprep.mubr.f32.mxu0 0.0
      %539 = vmatmul.mubr.f32.gmra.mrb[0].mxu0 %v411
      %v540 = vpop.f32.mrb[0].mxu0
      %v541 = vadd.f32 %v383, %v540
      %v542 = vpop.f32.mrb[0].mxu0
      %543 = vmatprep.mubr.f32.mxu0 0.0
      %544 = vmatmul.mubr.f32.gmra.mrb[0].mxu0 %v414
      %v545 = vpop.f32.mrb[0].mxu0
      %v546 = vadd.f32 %v383, %v545
      %v547 = vpop.f32.mrb[0].mxu0
      %548 = vmatprep.mubr.f32.mxu0 0.0
      %549 = vmatmul.mubr.f32.gmra.mrb[0].mxu0 %v417
      %v550 = vpop.f32.mrb[0].mxu0
      %v551 = vadd.f32 %v383, %v550
      %v552 = vpop.f32.mrb[0].mxu0
      %553 = vmatprep.mubr.f32.mxu0 0.0
      %554 = vmatmul.mubr.f32.gmra.mrb[0].mxu0 %v420
      %v555 = vpop.f32.mrb[0].mxu0
      %v556 = vadd.f32 %v383, %v555
      %v557 = vpop.f32.mrb[0].mxu0
      %558 = vmatprep.mubr.f32.mxu0 0.0
      %559 = vmatmul.mubr.f32.gmra.mrb[0].mxu0 %v423
      %v560 = vpop.f32.mrb[0].mxu0
      %v561 = vadd.f32 %v383, %v560
      %v562 = vpop.f32.mrb[0].mxu0
      %563 = vmatprep.mubr.f32.mxu0 0.0
      %564 = vmatmul.mubr.f32.gmra.mrb[0].mxu0 %v426
      %v565 = vpop.f32.mrb[0].mxu0
      %v566 = vadd.f32 %v383, %v565
      %v567 = vpop.f32.mrb[0].mxu0
      %568 = vmatprep.mubr.f32.mxu0 0.0
      %569 = vmatmul.mubr.f32.gmra.mrb[0].mxu0 %v429
      %v570 = vpop.f32.mrb[0].mxu0
      %v571 = vadd.f32 %v383, %v570
      %v572 = vpop.f32.mrb[0].mxu0
      %573 = vmatprep.mubr.f32.mxu0 0.0
      %574 = vmatmul.mubr.f32.gmra.mrb[0].mxu0 %v432
      %v575 = vpop.f32.mrb[0].mxu0
      %v576 = vadd.f32 %v383, %v575
      %v577 = vpop.f32.mrb[0].mxu0
      %578 = vdwg.mxu0
      %579 = vst [vmem:[#allocation2] sm:$0xff] %v501
      %580 = vst [vmem:[#allocation2 + $0x8] sm:$0xff] %v506
      %581 = vst [vmem:[#allocation2 + $0x10] sm:$0xff] %v511
      %582 = vst [vmem:[#allocation2 + $0x18] sm:$0xff] %v516
      %583 = vst [vmem:[#allocation2 + $0x20] sm:$0xff] %v521
      %584 = vst [vmem:[#allocation2 + $0x28] sm:$0xff] %v526
      %585 = vst [vmem:[#allocation2 + $0x30] sm:$0xff] %v531
      %586 = vst [vmem:[#allocation2 + $0x38] sm:$0xff] %v536
      %587 = vst [vmem:[#allocation2 + $0x40] sm:$0xff] %v541
      %588 = vst [vmem:[#allocation2 + $0x48] sm:$0xff] %v546
      %589 = vst [vmem:[#allocation2 + $0x50] sm:$0xff] %v551
      %590 = vst [vmem:[#allocation2 + $0x58] sm:$0xff] %v556
      %591 = vst [vmem:[#allocation2 + $0x60] sm:$0xff] %v561
      %592 = vst [vmem:[#allocation2 + $0x68] sm:$0xff] %v566
      %593 = vst [vmem:[#allocation2 + $0x70] sm:$0xff] %v571
      %594 = vst [vmem:[#allocation2 + $0x78] sm:$0xff] %v576
      %v595 = vlaneseq
      %v596 = vand.u32 %v595, 127
      %vm597 = vcmp.ge.s32.totalorder %v596, 64
      %vm598 = vcmp.lt.s32.totalorder %v596, 96
      %vm599 = vmand %vm597, %vm598
      %v600 = vld [vmem:[%s5] sm:$0x1]
      %v602 = vlaneseq
      %v603 = vshrl.u32 %v602, 7
      %v604 = vsub.s32 0, %v603
      %v605 = vrot.slane %v600, %v604
      %v607 = vld [vmem:[#allocation2] sm:$0xff]
      %v608 = vld [vmem:[%s3] sm:$0xff]
      %v609 = vld [vmem:[%s3 + $0x8] sm:$0xff]
      %v610 = vld [vmem:[%s3 + $0x10] sm:$0xff]
      %v611 = vld [vmem:[%s3 + $0x18] sm:$0xff]
      %vm612 = vcmask 261120
      %v614 = vsel %vm612, 0.0, 0
      %616 = vmatprep.subr.mxu0 0.0
      %617 = vmatpush1.msra.mxu0 %v608
      %618 = vmatprep.subr.mxu0 0.0
      %619 = vmatpush1.msra.mxu0 %v609
      %620 = vmatprep.subr.mxu0 0.0
      %621 = vmatpush1.msra.mxu0 %v610
      %622 = vmatprep.subr.mxu0 0.0
      %623 = vmatpush1.msra.mxu0 %v611
      %624 = vmatprep.subr.mxu0 0.0
      %625 = vmatpush1.msra.mxu0 0.0
      %626 = vmatprep.subr.mxu0 0.0
      %627 = vmatpush1.msra.mxu0 0.0
      %628 = vmatprep.subr.mxu0 0.0
      %629 = vmatpush1.msra.mxu0 0.0
      %630 = vmatprep.subr.mxu0 0.0
      %631 = vmatpush1.msra.mxu0 0.0
      %632 = vmatprep.subr.mxu0 0.0
      %633 = vmatpush1.msra.mxu0 0.0
      %634 = vmatprep.subr.mxu0 0.0
      %635 = vmatpush1.msra.mxu0 0.0
      %636 = vmatprep.subr.mxu0 0.0
      %637 = vmatpush1.msra.mxu0 0.0
      %638 = vmatprep.subr.mxu0 0.0
      %639 = vmatpush1.msra.mxu0 0.0
      %640 = vmatprep.subr.mxu0 0.0
      %641 = vmatpush1.msra.mxu0 0.0
      %642 = vmatprep.subr.mxu0 0.0
      %643 = vmatpush1.msra.mxu0 0.0
      %644 = vmatprep.subr.mxu0 0.0
      %645 = vmatpush1.msra.mxu0 0.0
      %646 = vmatprep.subr.mxu0 0.0
      %647 = vmatpush1.msra.mxu0 0.0
      %648 = vmatprep.subr.mxu0 0.0
      %649 = vmatpush1.msra.mxu0 0.0
      %650 = vmatprep.subr.mxu0 0.0
      %651 = vmatpush1.msra.mxu0 0.0
      %652 = vmatprep.subr.mxu0 0.0
      %653 = vmatpush1.msra.mxu0 0.0
      %654 = vmatprep.subr.mxu0 0.0
      %655 = vmatpush1.msra.mxu0 0.0
      %656 = vmatprep.subr.mxu0 0.0
      %657 = vmatpush1.msra.mxu0 0.0
      %658 = vmatprep.subr.mxu0 0.0
      %659 = vmatpush1.msra.mxu0 0.0
      %660 = vmatprep.subr.mxu0 0.0
      %661 = vmatpush1.msra.mxu0 0.0
      %662 = vmatprep.subr.mxu0 0.0
      %663 = vmatpush1.msra.mxu0 0.0
      %664 = vmatprep.subr.mxu0 0.0
      %665 = vmatpush1.msra.mxu0 0.0
      %666 = vmatprep.subr.mxu0 0.0
      %667 = vmatpush1.msra.mxu0 0.0
      %668 = vmatprep.subr.mxu0 0.0
      %669 = vmatpush1.msra.mxu0 0.0
      %670 = vmatprep.subr.mxu0 0.0
      %671 = vmatpush1.msra.mxu0 0.0
      %672 = vmatprep.subr.mxu0 0.0
      %673 = vmatpush1.msra.mxu0 0.0
      %674 = vmatprep.subr.mxu0 0.0
      %675 = vmatpush1.msra.mxu0 0.0
      %676 = vmatprep.subr.mxu0 0.0
      %677 = vmatpush1.msra.mxu0 0.0
      %678 = vmatprep.subr.mxu0 0.0
      %679 = vmatpush1.msra.mxu0 0.0
      %680 = vmatprep.mubr.f32.mxu0 0.0
      %681 = vmatmul.mubr.f32.gmra.mrb[0].mxu0 %v614
      %v682 = vpop.f32.mrb[0].mxu0
      %v683 = vadd.f32 0.0, %v682
      %v684 = vpop.f32.mrb[0].mxu0
      %685 = vdwg.mxu0
      %v686 = vadd.f32 %v607, %v683
      %v687 = vmul.f32 %v686, 0.5
      %v688 = vtanh.pop %v687
      %v689 = vmul.f32 %v688, 0.5
      %v690 = vadd.f32 %v689, 0.5
      %v691 = vtanh.pop %v686
      %v692 = vsel %vm599, %v691, %v690
      %v693 = vmul.f32 %v692, 0.0
      %695 = vrot.lane.b32.xlu0 %v692, 64
      %v696 = vpop.permute.xlu0 %695
      %v698 = vmul.f32 %v692, %v696
      %700 = vrot.lane.b32.xlu0 %v698, 32
      %v701 = vpop.permute.xlu0 %700
      %v703 = vadd.f32 %v693, %v701
      %v704 = vtanh.pop %v703
      %706 = vrot.lane.b32.xlu0 %v704, 64
      %v707 = vpop.permute.xlu0 %706
      %v709 = vmul.f32 %v692, %v707
      %711 = vrot.lane.b32.xlu0 %v709, 32
      %v712 = vpop.permute.xlu0 %711
      %v714 = vsel %vm612, %v712, 0.0
      %v715 = vld [vmem:[%s4] sm:$0xff]
      %v716 = vld [vmem:[%s4 + $0x8] sm:$0xff]
      %v717 = vld [vmem:[%s4 + $0x10] sm:$0xff]
      %v718 = vld [vmem:[%s4 + $0x18] sm:$0xff]
      %v719 = vld [vmem:[%s4 + $0x20] sm:$0xff]
      %v720 = vld [vmem:[%s4 + $0x28] sm:$0xff]
      %v721 = vld [vmem:[%s4 + $0x30] sm:$0xff]
      %v722 = vld [vmem:[%s4 + $0x38] sm:$0xff]
      %vm723 = vcmask 523264
      %v725 = vsel %vm723, %v714, 0
      %727 = vmatprep.subr.mxu0 0.0
      %728 = vmatpush1.msra.mxu0 %v715
      %729 = vmatprep.subr.mxu0 0.0
      %730 = vmatpush1.msra.mxu0 %v716
      %731 = vmatprep.subr.mxu0 0.0
      %732 = vmatpush1.msra.mxu0 %v717
      %733 = vmatprep.subr.mxu0 0.0
      %734 = vmatpush1.msra.mxu0 %v718
      %735 = vmatprep.subr.mxu0 0.0
      %736 = vmatpush1.msra.mxu0 %v719
      %737 = vmatprep.subr.mxu0 0.0
      %738 = vmatpush1.msra.mxu0 %v720
      %739 = vmatprep.subr.mxu0 0.0
      %740 = vmatpush1.msra.mxu0 %v721
      %741 = vmatprep.subr.mxu0 0.0
      %742 = vmatpush1.msra.mxu0 %v722
      %743 = vmatprep.subr.mxu0 0.0
      %744 = vmatpush1.msra.mxu0 0.0
      %745 = vmatprep.subr.mxu0 0.0
      %746 = vmatpush1.msra.mxu0 0.0
      %747 = vmatprep.subr.mxu0 0.0
      %748 = vmatpush1.msra.mxu0 0.0
      %749 = vmatprep.subr.mxu0 0.0
      %750 = vmatpush1.msra.mxu0 0.0
      %751 = vmatprep.subr.mxu0 0.0
      %752 = vmatpush1.msra.mxu0 0.0
      %753 = vmatprep.subr.mxu0 0.0
      %754 = vmatpush1.msra.mxu0 0.0
      %755 = vmatprep.subr.mxu0 0.0
      %756 = vmatpush1.msra.mxu0 0.0
      %757 = vmatprep.subr.mxu0 0.0
      %758 = vmatpush1.msra.mxu0 0.0
      %759 = vmatprep.subr.mxu0 0.0
      %760 = vmatpush1.msra.mxu0 0.0
      %761 = vmatprep.subr.mxu0 0.0
      %762 = vmatpush1.msra.mxu0 0.0
      %763 = vmatprep.subr.mxu0 0.0
      %764 = vmatpush1.msra.mxu0 0.0
      %765 = vmatprep.subr.mxu0 0.0
      %766 = vmatpush1.msra.mxu0 0.0
      %767 = vmatprep.subr.mxu0 0.0
      %768 = vmatpush1.msra.mxu0 0.0
      %769 = vmatprep.subr.mxu0 0.0
      %770 = vmatpush1.msra.mxu0 0.0
      %771 = vmatprep.subr.mxu0 0.0
      %772 = vmatpush1.msra.mxu0 0.0
      %773 = vmatprep.subr.mxu0 0.0
      %774 = vmatpush1.msra.mxu0 0.0
      %775 = vmatprep.subr.mxu0 0.0
      %776 = vmatpush1.msra.mxu0 0.0
      %777 = vmatprep.subr.mxu0 0.0
      %778 = vmatpush1.msra.mxu0 0.0
      %779 = vmatprep.subr.mxu0 0.0
      %780 = vmatpush1.msra.mxu0 0.0
      %781 = vmatprep.subr.mxu0 0.0
      %782 = vmatpush1.msra.mxu0 0.0
      %783 = vmatprep.subr.mxu0 0.0
      %784 = vmatpush1.msra.mxu0 0.0
      %785 = vmatprep.subr.mxu0 0.0
      %786 = vmatpush1.msra.mxu0 0.0
      %787 = vmatprep.subr.mxu0 0.0
      %788 = vmatpush1.msra.mxu0 0.0
      %789 = vmatprep.subr.mxu0 0.0
      %790 = vmatpush1.msra.mxu0 0.0
      %791 = vmatprep.mubr.f32.mxu0 0.0
      %792 = vmatmul.mubr.f32.gmra.mrb[0].mxu0 %v725
      %v793 = vpop.f32.mrb[0].mxu0
      %v794 = vadd.f32 %v605, %v793
      %v795 = vpop.f32.mrb[0].mxu0
      %796 = vdwg.mxu0
      %v797 = vmul.f32 %v794, 0.5
      %v798 = vtanh.pop %v797
      %v799 = vmul.f32 %v798, 0.5
      %v800 = vadd.f32 %v799, 0.5
      %v801 = vtanh.pop %v794
      %v802 = vsel %vm599, %v801, %v800
      %v803 = vmul.f32 %v802, 0.0
      %805 = vrot.lane.b32.xlu0 %v802, 64
      %v806 = vpop.permute.xlu0 %805
      %v808 = vmul.f32 %v802, %v806
      %810 = vrot.lane.b32.xlu0 %v808, 32
      %v811 = vpop.permute.xlu0 %810
      %v813 = vadd.f32 %v803, %v811
      %v814 = vtanh.pop %v813
      %816 = vrot.lane.b32.xlu0 %v814, 64
      %v817 = vpop.permute.xlu0 %816
      %v819 = vmul.f32 %v802, %v817
      %821 = vrot.lane.b32.xlu0 %v819, 32
      %v822 = vpop.permute.xlu0 %821
      %824 = vst.msk [vmem:[#allocation3] sm:$0xff] %vm612, %v822
      %v825 = vld [vmem:[#allocation2 + $0x8] sm:$0xff]
      %v826 = vld [vmem:[%s3] sm:$0xff]
      %v827 = vld [vmem:[%s3 + $0x8] sm:$0xff]
      %v828 = vld [vmem:[%s3 + $0x10] sm:$0xff]
      %v829 = vld [vmem:[%s3 + $0x18] sm:$0xff]
      %v830 = vsel %vm612, %v712, 0
      %832 = vmatprep.subr.mxu0 0.0
      %833 = vmatpush1.msra.mxu0 %v826
      %834 = vmatprep.subr.mxu0 0.0
      %835 = vmatpush1.msra.mxu0 %v827
      %836 = vmatprep.subr.mxu0 0.0
      %837 = vmatpush1.msra.mxu0 %v828
      %838 = vmatprep.subr.mxu0 0.0
      %839 = vmatpush1.msra.mxu0 %v829
      %840 = vmatprep.subr.mxu0 0.0
      %841 = vmatpush1.msra.mxu0 0.0
      %842 = vmatprep.subr.mxu0 0.0
      %843 = vmatpush1.msra.mxu0 0.0
      %844 = vmatprep.subr.mxu0 0.0
      %845 = vmatpush1.msra.mxu0 0.0
      %846 = vmatprep.subr.mxu0 0.0
      %847 = vmatpush1.msra.mxu0 0.0
      %848 = vmatprep.subr.mxu0 0.0
      %849 = vmatpush1.msra.mxu0 0.0
      %850 = vmatprep.subr.mxu0 0.0
      %851 = vmatpush1.msra.mxu0 0.0
      %852 = vmatprep.subr.mxu0 0.0
      %853 = vmatpush1.msra.mxu0 0.0
      %854 = vmatprep.subr.mxu0 0.0
      %855 = vmatpush1.msra.mxu0 0.0
      %856 = vmatprep.subr.mxu0 0.0
      %857 = vmatpush1.msra.mxu0 0.0
      %858 = vmatprep.subr.mxu0 0.0
      %859 = vmatpush1.msra.mxu0 0.0
      %860 = vmatprep.subr.mxu0 0.0
      %861 = vmatpush1.msra.mxu0 0.0
      %862 = vmatprep.subr.mxu0 0.0
      %863 = vmatpush1.msra.mxu0 0.0
      %864 = vmatprep.subr.mxu0 0.0
      %865 = vmatpush1.msra.mxu0 0.0
      %866 = vmatprep.subr.mxu0 0.0
      %867 = vmatpush1.msra.mxu0 0.0
      %868 = vmatprep.subr.mxu0 0.0
      %869 = vmatpush1.msra.mxu0 0.0
      %870 = vmatprep.subr.mxu0 0.0
      %871 = vmatpush1.msra.mxu0 0.0
      %872 = vmatprep.subr.mxu0 0.0
      %873 = vmatpush1.msra.mxu0 0.0
      %874 = vmatprep.subr.mxu0 0.0
      %875 = vmatpush1.msra.mxu0 0.0
      %876 = vmatprep.subr.mxu0 0.0
      %877 = vmatpush1.msra.mxu0 0.0
      %878 = vmatprep.subr.mxu0 0.0
      %879 = vmatpush1.msra.mxu0 0.0
      %880 = vmatprep.subr.mxu0 0.0
      %881 = vmatpush1.msra.mxu0 0.0
      %882 = vmatprep.subr.mxu0 0.0
      %883 = vmatpush1.msra.mxu0 0.0
      %884 = vmatprep.subr.mxu0 0.0
      %885 = vmatpush1.msra.mxu0 0.0
      %886 = vmatprep.subr.mxu0 0.0
      %887 = vmatpush1.msra.mxu0 0.0
      %888 = vmatprep.subr.mxu0 0.0
      %889 = vmatpush1.msra.mxu0 0.0
      %890 = vmatprep.subr.mxu0 0.0
      %891 = vmatpush1.msra.mxu0 0.0
      %892 = vmatprep.subr.mxu0 0.0
      %893 = vmatpush1.msra.mxu0 0.0
      %894 = vmatprep.subr.mxu0 0.0
      %895 = vmatpush1.msra.mxu0 0.0
      %896 = vmatprep.mubr.f32.mxu0 0.0
      %897 = vmatmul.mubr.f32.gmra.mrb[0].mxu0 %v830
      %v898 = vpop.f32.mrb[0].mxu0
      %v899 = vadd.f32 0.0, %v898
      %v900 = vpop.f32.mrb[0].mxu0
      %901 = vdwg.mxu0
      %v902 = vadd.f32 %v825, %v899
      %v903 = vmul.f32 %v902, 0.5
      %v904 = vtanh.pop %v903
      %v905 = vmul.f32 %v904, 0.5
      %v906 = vadd.f32 %v905, 0.5
      %v907 = vtanh.pop %v902
      %v908 = vsel %vm599, %v907, %v906
      %v909 = vmul.f32 %v908, %v703
      %911 = vrot.lane.b32.xlu0 %v908, 64
      %v912 = vpop.permute.xlu0 %911
      %v914 = vmul.f32 %v908, %v912
      %916 = vrot.lane.b32.xlu0 %v914, 32
      %v917 = vpop.permute.xlu0 %916
      %v919 = vadd.f32 %v909, %v917
      %v920 = vtanh.pop %v919
      %922 = vrot.lane.b32.xlu0 %v920, 64
      %v923 = vpop.permute.xlu0 %922
      %v925 = vmul.f32 %v908, %v923
      %927 = vrot.lane.b32.xlu0 %v925, 32
      %v928 = vpop.permute.xlu0 %927
      %930 = vrot.lane.b32.xlu0 %v819, 64
      %v931 = vpop.permute.xlu0 %930
      %v933 = vsel %vm612, %v928, %v931
      %v934 = vld [vmem:[%s4] sm:$0xff]
      %v935 = vld [vmem:[%s4 + $0x8] sm:$0xff]
      %v936 = vld [vmem:[%s4 + $0x10] sm:$0xff]
      %v937 = vld [vmem:[%s4 + $0x18] sm:$0xff]
      %v938 = vld [vmem:[%s4 + $0x20] sm:$0xff]
      %v939 = vld [vmem:[%s4 + $0x28] sm:$0xff]
      %v940 = vld [vmem:[%s4 + $0x30] sm:$0xff]
      %v941 = vld [vmem:[%s4 + $0x38] sm:$0xff]
      %v943 = vsel %vm723, %v933, 0
      %945 = vmatprep.subr.mxu0 0.0
      %946 = vmatpush1.msra.mxu0 %v934
      %947 = vmatprep.subr.mxu0 0.0
      %948 = vmatpush1.msra.mxu0 %v935
      %949 = vmatprep.subr.mxu0 0.0
      %950 = vmatpush1.msra.mxu0 %v936
      %951 = vmatprep.subr.mxu0 0.0
      %952 = vmatpush1.msra.mxu0 %v937
      %953 = vmatprep.subr.mxu0 0.0
      %954 = vmatpush1.msra.mxu0 %v938
      %955 = vmatprep.subr.mxu0 0.0
      %956 = vmatpush1.msra.mxu0 %v939
      %957 = vmatprep.subr.mxu0 0.0
      %958 = vmatpush1.msra.mxu0 %v940
      %959 = vmatprep.subr.mxu0 0.0
      %960 = vmatpush1.msra.mxu0 %v941
      %961 = vmatprep.subr.mxu0 0.0
      %962 = vmatpush1.msra.mxu0 0.0
      %963 = vmatprep.subr.mxu0 0.0
      %964 = vmatpush1.msra.mxu0 0.0
      %965 = vmatprep.subr.mxu0 0.0
      %966 = vmatpush1.msra.mxu0 0.0
      %967 = vmatprep.subr.mxu0 0.0
      %968 = vmatpush1.msra.mxu0 0.0
      %969 = vmatprep.subr.mxu0 0.0
      %970 = vmatpush1.msra.mxu0 0.0
      %971 = vmatprep.subr.mxu0 0.0
      %972 = vmatpush1.msra.mxu0 0.0
      %973 = vmatprep.subr.mxu0 0.0
      %974 = vmatpush1.msra.mxu0 0.0
      %975 = vmatprep.subr.mxu0 0.0
      %976 = vmatpush1.msra.mxu0 0.0
      %977 = vmatprep.subr.mxu0 0.0
      %978 = vmatpush1.msra.mxu0 0.0
      %979 = vmatprep.subr.mxu0 0.0
      %980 = vmatpush1.msra.mxu0 0.0
      %981 = vmatprep.subr.mxu0 0.0
      %982 = vmatpush1.msra.mxu0 0.0
      %983 = vmatprep.subr.mxu0 0.0
      %984 = vmatpush1.msra.mxu0 0.0
      %985 = vmatprep.subr.mxu0 0.0
      %986 = vmatpush1.msra.mxu0 0.0
      %987 = vmatprep.subr.mxu0 0.0
      %988 = vmatpush1.msra.mxu0 0.0
      %989 = vmatprep.subr.mxu0 0.0
      %990 = vmatpush1.msra.mxu0 0.0
      %991 = vmatprep.subr.mxu0 0.0
      %992 = vmatpush1.msra.mxu0 0.0
      %993 = vmatprep.subr.mxu0 0.0
      %994 = vmatpush1.msra.mxu0 0.0
      %995 = vmatprep.subr.mxu0 0.0
      %996 = vmatpush1.msra.mxu0 0.0
      %997 = vmatprep.subr.mxu0 0.0
      %998 = vmatpush1.msra.mxu0 0.0
      %999 = vmatprep.subr.mxu0 0.0
      %1000 = vmatpush1.msra.mxu0 0.0
      %1001 = vmatprep.subr.mxu0 0.0
      %1002 = vmatpush1.msra.mxu0 0.0
      %1003 = vmatprep.subr.mxu0 0.0
      %1004 = vmatpush1.msra.mxu0 0.0
      %1005 = vmatprep.subr.mxu0 0.0
      %1006 = vmatpush1.msra.mxu0 0.0
      %1007 = vmatprep.subr.mxu0 0.0
      %1008 = vmatpush1.msra.mxu0 0.0
      %1009 = vmatprep.mubr.f32.mxu0 0.0
      %1010 = vmatmul.mubr.f32.gmra.mrb[0].mxu0 %v943
      %v1011 = vpop.f32.mrb[0].mxu0
      %v1012 = vadd.f32 %v605, %v1011
      %v1013 = vpop.f32.mrb[0].mxu0
      %1014 = vdwg.mxu0
      %v1015 = vmul.f32 %v1012, 0.5
      %v1016 = vtanh.pop %v1015
      %v1017 = vmul.f32 %v1016, 0.5
      %v1018 = vadd.f32 %v1017, 0.5
      %v1019 = vtanh.pop %v1012
      %v1020 = vsel %vm599, %v1019, %v1018
      %v1021 = vmul.f32 %v1020, %v813
      %1023 = vrot.lane.b32.xlu0 %v1020, 64
      %v1024 = vpop.permute.xlu0 %1023
      %v1026 = vmul.f32 %v1020, %v1024
      %1028 = vrot.lane.b32.xlu0 %v1026, 32
      %v1029 = vpop.permute.xlu0 %1028
      %v1031 = vadd.f32 %v1021, %v1029
      %v1032 = vtanh.pop %v1031
      %1034 = vrot.lane.b32.xlu0 %v1032, 64
      %v1035 = vpop.permute.xlu0 %1034
      %v1037 = vmul.f32 %v1020, %v1035
      %1039 = vrot.lane.b32.xlu0 %v1037, 32
      %v1040 = vpop.permute.xlu0 %1039
      %1042 = vst.msk [vmem:[#allocation3 + $0x8] sm:$0xff] %vm612, %v1040
      %v1043 = vld [vmem:[#allocation2 + $0x10] sm:$0xff]
      %v1044 = vld [vmem:[%s3] sm:$0xff]
      %v1045 = vld [vmem:[%s3 + $0x8] sm:$0xff]
      %v1046 = vld [vmem:[%s3 + $0x10] sm:$0xff]
      %v1047 = vld [vmem:[%s3 + $0x18] sm:$0xff]
      %v1048 = vsel %vm612, %v928, 0
      %1050 = vmatprep.subr.mxu0 0.0
      %1051 = vmatpush1.msra.mxu0 %v1044
      %1052 = vmatprep.subr.mxu0 0.0
      %1053 = vmatpush1.msra.mxu0 %v1045
      %1054 = vmatprep.subr.mxu0 0.0
      %1055 = vmatpush1.msra.mxu0 %v1046
      %1056 = vmatprep.subr.mxu0 0.0
      %1057 = vmatpush1.msra.mxu0 %v1047
      %1058 = vmatprep.subr.mxu0 0.0
      %1059 = vmatpush1.msra.mxu0 0.0
      %1060 = vmatprep.subr.mxu0 0.0
      %1061 = vmatpush1.msra.mxu0 0.0
      %1062 = vmatprep.subr.mxu0 0.0
      %1063 = vmatpush1.msra.mxu0 0.0
      %1064 = vmatprep.subr.mxu0 0.0
      %1065 = vmatpush1.msra.mxu0 0.0
      %1066 = vmatprep.subr.mxu0 0.0
      %1067 = vmatpush1.msra.mxu0 0.0
      %1068 = vmatprep.subr.mxu0 0.0
      %1069 = vmatpush1.msra.mxu0 0.0
      %1070 = vmatprep.subr.mxu0 0.0
      %1071 = vmatpush1.msra.mxu0 0.0
      %1072 = vmatprep.subr.mxu0 0.0
      %1073 = vmatpush1.msra.mxu0 0.0
      %1074 = vmatprep.subr.mxu0 0.0
      %1075 = vmatpush1.msra.mxu0 0.0
      %1076 = vmatprep.subr.mxu0 0.0
      %1077 = vmatpush1.msra.mxu0 0.0
      %1078 = vmatprep.subr.mxu0 0.0
      %1079 = vmatpush1.msra.mxu0 0.0
      %1080 = vmatprep.subr.mxu0 0.0
      %1081 = vmatpush1.msra.mxu0 0.0
      %1082 = vmatprep.subr.mxu0 0.0
      %1083 = vmatpush1.msra.mxu0 0.0
      %1084 = vmatprep.subr.mxu0 0.0
      %1085 = vmatpush1.msra.mxu0 0.0
      %1086 = vmatprep.subr.mxu0 0.0
      %1087 = vmatpush1.msra.mxu0 0.0
      %1088 = vmatprep.subr.mxu0 0.0
      %1089 = vmatpush1.msra.mxu0 0.0
      %1090 = vmatprep.subr.mxu0 0.0
      %1091 = vmatpush1.msra.mxu0 0.0
      %1092 = vmatprep.subr.mxu0 0.0
      %1093 = vmatpush1.msra.mxu0 0.0
      %1094 = vmatprep.subr.mxu0 0.0
      %1095 = vmatpush1.msra.mxu0 0.0
      %1096 = vmatprep.subr.mxu0 0.0
      %1097 = vmatpush1.msra.mxu0 0.0
      %1098 = vmatprep.subr.mxu0 0.0
      %1099 = vmatpush1.msra.mxu0 0.0
      %1100 = vmatprep.subr.mxu0 0.0
      %1101 = vmatpush1.msra.mxu0 0.0
      %1102 = vmatprep.subr.mxu0 0.0
      %1103 = vmatpush1.msra.mxu0 0.0
      %1104 = vmatprep.subr.mxu0 0.0
      %1105 = vmatpush1.msra.mxu0 0.0
      %1106 = vmatprep.subr.mxu0 0.0
      %1107 = vmatpush1.msra.mxu0 0.0
      %1108 = vmatprep.subr.mxu0 0.0
      %1109 = vmatpush1.msra.mxu0 0.0
      %1110 = vmatprep.subr.mxu0 0.0
      %1111 = vmatpush1.msra.mxu0 0.0
      %1112 = vmatprep.subr.mxu0 0.0
      %1113 = vmatpush1.msra.mxu0 0.0
      %1114 = vmatprep.mubr.f32.mxu0 0.0
      %1115 = vmatmul.mubr.f32.gmra.mrb[0].mxu0 %v1048
      %v1116 = vpop.f32.mrb[0].mxu0
      %v1117 = vadd.f32 0.0, %v1116
      %v1118 = vpop.f32.mrb[0].mxu0
      %1119 = vdwg.mxu0
      %v1120 = vadd.f32 %v1043, %v1117
      %v1121 = vmul.f32 %v1120, 0.5
      %v1122 = vtanh.pop %v1121
      %v1123 = vmul.f32 %v1122, 0.5
      %v1124 = vadd.f32 %v1123, 0.5
      %v1125 = vtanh.pop %v1120
      %v1126 = vsel %vm599, %v1125, %v1124
      %v1127 = vmul.f32 %v1126, %v919
      %1129 = vrot.lane.b32.xlu0 %v1126, 64
      %v1130 = vpop.permute.xlu0 %1129
      %v1132 = vmul.f32 %v1126, %v1130
      %1134 = vrot.lane.b32.xlu0 %v1132, 32
      %v1135 = vpop.permute.xlu0 %1134
      %v1137 = vadd.f32 %v1127, %v1135
      %v1138 = vtanh.pop %v1137
      %1140 = vrot.lane.b32.xlu0 %v1138, 64
      %v1141 = vpop.permute.xlu0 %1140
      %v1143 = vmul.f32 %v1126, %v1141
      %1145 = vrot.lane.b32.xlu0 %v1143, 32
      %v1146 = vpop.permute.xlu0 %1145
      %1148 = vrot.lane.b32.xlu0 %v1037, 64
      %v1149 = vpop.permute.xlu0 %1148
      %v1151 = vsel %vm612, %v1146, %v1149
      %v1152 = vld [vmem:[%s4] sm:$0xff]
      %v1153 = vld [vmem:[%s4 + $0x8] sm:$0xff]
      %v1154 = vld [vmem:[%s4 + $0x10] sm:$0xff]
      %v1155 = vld [vmem:[%s4 + $0x18] sm:$0xff]
      %v1156 = vld [vmem:[%s4 + $0x20] sm:$0xff]
      %v1157 = vld [vmem:[%s4 + $0x28] sm:$0xff]
      %v1158 = vld [vmem:[%s4 + $0x30] sm:$0xff]
      %v1159 = vld [vmem:[%s4 + $0x38] sm:$0xff]
      %v1161 = vsel %vm723, %v1151, 0
      %1163 = vmatprep.subr.mxu0 0.0
      %1164 = vmatpush1.msra.mxu0 %v1152
      %1165 = vmatprep.subr.mxu0 0.0
      %1166 = vmatpush1.msra.mxu0 %v1153
      %1167 = vmatprep.subr.mxu0 0.0
      %1168 = vmatpush1.msra.mxu0 %v1154
      %1169 = vmatprep.subr.mxu0 0.0
      %1170 = vmatpush1.msra.mxu0 %v1155
      %1171 = vmatprep.subr.mxu0 0.0
      %1172 = vmatpush1.msra.mxu0 %v1156
      %1173 = vmatprep.subr.mxu0 0.0
      %1174 = vmatpush1.msra.mxu0 %v1157
      %1175 = vmatprep.subr.mxu0 0.0
      %1176 = vmatpush1.msra.mxu0 %v1158
      %1177 = vmatprep.subr.mxu0 0.0
      %1178 = vmatpush1.msra.mxu0 %v1159
      %1179 = vmatprep.subr.mxu0 0.0
      %1180 = vmatpush1.msra.mxu0 0.0
      %1181 = vmatprep.subr.mxu0 0.0
      %1182 = vmatpush1.msra.mxu0 0.0
      %1183 = vmatprep.subr.mxu0 0.0
      %1184 = vmatpush1.msra.mxu0 0.0
      %1185 = vmatprep.subr.mxu0 0.0
      %1186 = vmatpush1.msra.mxu0 0.0
      %1187 = vmatprep.subr.mxu0 0.0
      %1188 = vmatpush1.msra.mxu0 0.0
      %1189 = vmatprep.subr.mxu0 0.0
      %1190 = vmatpush1.msra.mxu0 0.0
      %1191 = vmatprep.subr.mxu0 0.0
      %1192 = vmatpush1.msra.mxu0 0.0
      %1193 = vmatprep.subr.mxu0 0.0
      %1194 = vmatpush1.msra.mxu0 0.0
      %1195 = vmatprep.subr.mxu0 0.0
      %1196 = vmatpush1.msra.mxu0 0.0
      %1197 = vmatprep.subr.mxu0 0.0
      %1198 = vmatpush1.msra.mxu0 0.0
      %1199 = vmatprep.subr.mxu0 0.0
      %1200 = vmatpush1.msra.mxu0 0.0
      %1201 = vmatprep.subr.mxu0 0.0
      %1202 = vmatpush1.msra.mxu0 0.0
      %1203 = vmatprep.subr.mxu0 0.0
      %1204 = vmatpush1.msra.mxu0 0.0
      %1205 = vmatprep.subr.mxu0 0.0
      %1206 = vmatpush1.msra.mxu0 0.0
      %1207 = vmatprep.subr.mxu0 0.0
      %1208 = vmatpush1.msra.mxu0 0.0
      %1209 = vmatprep.subr.mxu0 0.0
      %1210 = vmatpush1.msra.mxu0 0.0
      %1211 = vmatprep.subr.mxu0 0.0
      %1212 = vmatpush1.msra.mxu0 0.0
      %1213 = vmatprep.subr.mxu0 0.0
      %1214 = vmatpush1.msra.mxu0 0.0
      %1215 = vmatprep.subr.mxu0 0.0
      %1216 = vmatpush1.msra.mxu0 0.0
      %1217 = vmatprep.subr.mxu0 0.0
      %1218 = vmatpush1.msra.mxu0 0.0
      %1219 = vmatprep.subr.mxu0 0.0
      %1220 = vmatpush1.msra.mxu0 0.0
      %1221 = vmatprep.subr.mxu0 0.0
      %1222 = vmatpush1.msra.mxu0 0.0
      %1223 = vmatprep.subr.mxu0 0.0
      %1224 = vmatpush1.msra.mxu0 0.0
      %1225 = vmatprep.subr.mxu0 0.0
      %1226 = vmatpush1.msra.mxu0 0.0
      %1227 = vmatprep.mubr.f32.mxu0 0.0
      %1228 = vmatmul.mubr.f32.gmra.mrb[0].mxu0 %v1161
      %v1229 = vpop.f32.mrb[0].mxu0
      %v1230 = vadd.f32 %v605, %v1229
      %v1231 = vpop.f32.mrb[0].mxu0
      %1232 = vdwg.mxu0
      %v1233 = vmul.f32 %v1230, 0.5
      %v1234 = vtanh.pop %v1233
      %v1235 = vmul.f32 %v1234, 0.5
      %v1236 = vadd.f32 %v1235, 0.5
      %v1237 = vtanh.pop %v1230
      %v1238 = vsel %vm599, %v1237, %v1236
      %v1239 = vmul.f32 %v1238, %v1031
      %1241 = vrot.lane.b32.xlu0 %v1238, 64
      %v1242 = vpop.permute.xlu0 %1241
      %v1244 = vmul.f32 %v1238, %v1242
      %1246 = vrot.lane.b32.xlu0 %v1244, 32
      %v1247 = vpop.permute.xlu0 %1246
      %v1249 = vadd.f32 %v1239, %v1247
      %v1250 = vtanh.pop %v1249
      %1252 = vrot.lane.b32.xlu0 %v1250, 64
      %v1253 = vpop.permute.xlu0 %1252
      %v1255 = vmul.f32 %v1238, %v1253
      %1257 = vrot.lane.b32.xlu0 %v1255, 32
      %v1258 = vpop.permute.xlu0 %1257
      %1260 = vst.msk [vmem:[#allocation3 + $0x10] sm:$0xff] %vm612, %v1258
      %v1261 = vld [vmem:[#allocation2 + $0x18] sm:$0xff]
      %v1262 = vld [vmem:[%s3] sm:$0xff]
      %v1263 = vld [vmem:[%s3 + $0x8] sm:$0xff]
      %v1264 = vld [vmem:[%s3 + $0x10] sm:$0xff]
      %v1265 = vld [vmem:[%s3 + $0x18] sm:$0xff]
      %v1266 = vsel %vm612, %v1146, 0
      %1268 = vmatprep.subr.mxu0 0.0
      %1269 = vmatpush1.msra.mxu0 %v1262
      %1270 = vmatprep.subr.mxu0 0.0
      %1271 = vmatpush1.msra.mxu0 %v1263
      %1272 = vmatprep.subr.mxu0 0.0
      %1273 = vmatpush1.msra.mxu0 %v1264
      %1274 = vmatprep.subr.mxu0 0.0
      %1275 = vmatpush1.msra.mxu0 %v1265
      %1276 = vmatprep.subr.mxu0 0.0
      %1277 = vmatpush1.msra.mxu0 0.0
      %1278 = vmatprep.subr.mxu0 0.0
      %1279 = vmatpush1.msra.mxu0 0.0
      %1280 = vmatprep.subr.mxu0 0.0
      %1281 = vmatpush1.msra.mxu0 0.0
      %1282 = vmatprep.subr.mxu0 0.0
      %1283 = vmatpush1.msra.mxu0 0.0
      %1284 = vmatprep.subr.mxu0 0.0
      %1285 = vmatpush1.msra.mxu0 0.0
      %1286 = vmatprep.subr.mxu0 0.0
      %1287 = vmatpush1.msra.mxu0 0.0
      %1288 = vmatprep.subr.mxu0 0.0
      %1289 = vmatpush1.msra.mxu0 0.0
      %1290 = vmatprep.subr.mxu0 0.0
      %1291 = vmatpush1.msra.mxu0 0.0
      %1292 = vmatprep.subr.mxu0 0.0
      %1293 = vmatpush1.msra.mxu0 0.0
      %1294 = vmatprep.subr.mxu0 0.0
      %1295 = vmatpush1.msra.mxu0 0.0
      %1296 = vmatprep.subr.mxu0 0.0
      %1297 = vmatpush1.msra.mxu0 0.0
      %1298 = vmatprep.subr.mxu0 0.0
      %1299 = vmatpush1.msra.mxu0 0.0
      %1300 = vmatprep.subr.mxu0 0.0
      %1301 = vmatpush1.msra.mxu0 0.0
      %1302 = vmatprep.subr.mxu0 0.0
      %1303 = vmatpush1.msra.mxu0 0.0
      %1304 = vmatprep.subr.mxu0 0.0
      %1305 = vmatpush1.msra.mxu0 0.0
      %1306 = vmatprep.subr.mxu0 0.0
      %1307 = vmatpush1.msra.mxu0 0.0
      %1308 = vmatprep.subr.mxu0 0.0
      %1309 = vmatpush1.msra.mxu0 0.0
      %1310 = vmatprep.subr.mxu0 0.0
      %1311 = vmatpush1.msra.mxu0 0.0
      %1312 = vmatprep.subr.mxu0 0.0
      %1313 = vmatpush1.msra.mxu0 0.0
      %1314 = vmatprep.subr.mxu0 0.0
      %1315 = vmatpush1.msra.mxu0 0.0
      %1316 = vmatprep.subr.mxu0 0.0
      %1317 = vmatpush1.msra.mxu0 0.0
      %1318 = vmatprep.subr.mxu0 0.0
      %1319 = vmatpush1.msra.mxu0 0.0
      %1320 = vmatprep.subr.mxu0 0.0
      %1321 = vmatpush1.msra.mxu0 0.0
      %1322 = vmatprep.subr.mxu0 0.0
      %1323 = vmatpush1.msra.mxu0 0.0
      %1324 = vmatprep.subr.mxu0 0.0
      %1325 = vmatpush1.msra.mxu0 0.0
      %1326 = vmatprep.subr.mxu0 0.0
      %1327 = vmatpush1.msra.mxu0 0.0
      %1328 = vmatprep.subr.mxu0 0.0
      %1329 = vmatpush1.msra.mxu0 0.0
      %1330 = vmatprep.subr.mxu0 0.0
      %1331 = vmatpush1.msra.mxu0 0.0
      %1332 = vmatprep.mubr.f32.mxu0 0.0
      %1333 = vmatmul.mubr.f32.gmra.mrb[0].mxu0 %v1266
      %v1334 = vpop.f32.mrb[0].mxu0
      %v1335 = vadd.f32 0.0, %v1334
      %v1336 = vpop.f32.mrb[0].mxu0
      %1337 = vdwg.mxu0
      %v1338 = vadd.f32 %v1261, %v1335
      %v1339 = vmul.f32 %v1338, 0.5
      %v1340 = vtanh.pop %v1339
      %v1341 = vmul.f32 %v1340, 0.5
      %v1342 = vadd.f32 %v1341, 0.5
      %v1343 = vtanh.pop %v1338
      %v1344 = vsel %vm599, %v1343, %v1342
      %v1345 = vmul.f32 %v1344, %v1137
      %1347 = vrot.lane.b32.xlu0 %v1344, 64
      %v1348 = vpop.permute.xlu0 %1347
      %v1350 = vmul.f32 %v1344, %v1348
      %1352 = vrot.lane.b32.xlu0 %v1350, 32
      %v1353 = vpop.permute.xlu0 %1352
      %v1355 = vadd.f32 %v1345, %v1353
      %v1356 = vtanh.pop %v1355
      %1358 = vrot.lane.b32.xlu0 %v1356, 64
      %v1359 = vpop.permute.xlu0 %1358
      %v1361 = vmul.f32 %v1344, %v1359
      %1363 = vrot.lane.b32.xlu0 %v1361, 32
      %v1364 = vpop.permute.xlu0 %1363
      %1366 = vrot.lane.b32.xlu0 %v1255, 64
      %v1367 = vpop.permute.xlu0 %1366
      %v1369 = vsel %vm612, %v1364, %v1367
      %v1370 = vld [vmem:[%s4] sm:$0xff]
      %v1371 = vld [vmem:[%s4 + $0x8] sm:$0xff]
      %v1372 = vld [vmem:[%s4 + $0x10] sm:$0xff]
      %v1373 = vld [vmem:[%s4 + $0x18] sm:$0xff]
      %v1374 = vld [vmem:[%s4 + $0x20] sm:$0xff]
      %v1375 = vld [vmem:[%s4 + $0x28] sm:$0xff]
      %v1376 = vld [vmem:[%s4 + $0x30] sm:$0xff]
      %v1377 = vld [vmem:[%s4 + $0x38] sm:$0xff]
      %v1379 = vsel %vm723, %v1369, 0
      %1381 = vmatprep.subr.mxu0 0.0
      %1382 = vmatpush1.msra.mxu0 %v1370
      %1383 = vmatprep.subr.mxu0 0.0
      %1384 = vmatpush1.msra.mxu0 %v1371
      %1385 = vmatprep.subr.mxu0 0.0
      %1386 = vmatpush1.msra.mxu0 %v1372
      %1387 = vmatprep.subr.mxu0 0.0
      %1388 = vmatpush1.msra.mxu0 %v1373
      %1389 = vmatprep.subr.mxu0 0.0
      %1390 = vmatpush1.msra.mxu0 %v1374
      %1391 = vmatprep.subr.mxu0 0.0
      %1392 = vmatpush1.msra.mxu0 %v1375
      %1393 = vmatprep.subr.mxu0 0.0
      %1394 = vmatpush1.msra.mxu0 %v1376
      %1395 = vmatprep.subr.mxu0 0.0
      %1396 = vmatpush1.msra.mxu0 %v1377
      %1397 = vmatprep.subr.mxu0 0.0
      %1398 = vmatpush1.msra.mxu0 0.0
      %1399 = vmatprep.subr.mxu0 0.0
      %1400 = vmatpush1.msra.mxu0 0.0
      %1401 = vmatprep.subr.mxu0 0.0
      %1402 = vmatpush1.msra.mxu0 0.0
      %1403 = vmatprep.subr.mxu0 0.0
      %1404 = vmatpush1.msra.mxu0 0.0
      %1405 = vmatprep.subr.mxu0 0.0
      %1406 = vmatpush1.msra.mxu0 0.0
      %1407 = vmatprep.subr.mxu0 0.0
      %1408 = vmatpush1.msra.mxu0 0.0
      %1409 = vmatprep.subr.mxu0 0.0
      %1410 = vmatpush1.msra.mxu0 0.0
      %1411 = vmatprep.subr.mxu0 0.0
      %1412 = vmatpush1.msra.mxu0 0.0
      %1413 = vmatprep.subr.mxu0 0.0
      %1414 = vmatpush1.msra.mxu0 0.0
      %1415 = vmatprep.subr.mxu0 0.0
      %1416 = vmatpush1.msra.mxu0 0.0
      %1417 = vmatprep.subr.mxu0 0.0
      %1418 = vmatpush1.msra.mxu0 0.0
      %1419 = vmatprep.subr.mxu0 0.0
      %1420 = vmatpush1.msra.mxu0 0.0
      %1421 = vmatprep.subr.mxu0 0.0
      %1422 = vmatpush1.msra.mxu0 0.0
      %1423 = vmatprep.subr.mxu0 0.0
      %1424 = vmatpush1.msra.mxu0 0.0
      %1425 = vmatprep.subr.mxu0 0.0
      %1426 = vmatpush1.msra.mxu0 0.0
      %1427 = vmatprep.subr.mxu0 0.0
      %1428 = vmatpush1.msra.mxu0 0.0
      %1429 = vmatprep.subr.mxu0 0.0
      %1430 = vmatpush1.msra.mxu0 0.0
      %1431 = vmatprep.subr.mxu0 0.0
      %1432 = vmatpush1.msra.mxu0 0.0
      %1433 = vmatprep.subr.mxu0 0.0
      %1434 = vmatpush1.msra.mxu0 0.0
      %1435 = vmatprep.subr.mxu0 0.0
      %1436 = vmatpush1.msra.mxu0 0.0
      %1437 = vmatprep.subr.mxu0 0.0
      %1438 = vmatpush1.msra.mxu0 0.0
      %1439 = vmatprep.subr.mxu0 0.0
      %1440 = vmatpush1.msra.mxu0 0.0
      %1441 = vmatprep.subr.mxu0 0.0
      %1442 = vmatpush1.msra.mxu0 0.0
      %1443 = vmatprep.subr.mxu0 0.0
      %1444 = vmatpush1.msra.mxu0 0.0
      %1445 = vmatprep.mubr.f32.mxu0 0.0
      %1446 = vmatmul.mubr.f32.gmra.mrb[0].mxu0 %v1379
      %v1447 = vpop.f32.mrb[0].mxu0
      %v1448 = vadd.f32 %v605, %v1447
      %v1449 = vpop.f32.mrb[0].mxu0
      %1450 = vdwg.mxu0
      %v1451 = vmul.f32 %v1448, 0.5
      %v1452 = vtanh.pop %v1451
      %v1453 = vmul.f32 %v1452, 0.5
      %v1454 = vadd.f32 %v1453, 0.5
      %v1455 = vtanh.pop %v1448
      %v1456 = vsel %vm599, %v1455, %v1454
      %v1457 = vmul.f32 %v1456, %v1249
      %1459 = vrot.lane.b32.xlu0 %v1456, 64
      %v1460 = vpop.permute.xlu0 %1459
      %v1462 = vmul.f32 %v1456, %v1460
      %1464 = vrot.lane.b32.xlu0 %v1462, 32
      %v1465 = vpop.permute.xlu0 %1464
      %v1467 = vadd.f32 %v1457, %v1465
      %v1468 = vtanh.pop %v1467
      %1470 = vrot.lane.b32.xlu0 %v1468, 64
      %v1471 = vpop.permute.xlu0 %1470
      %v1473 = vmul.f32 %v1456, %v1471
      %1475 = vrot.lane.b32.xlu0 %v1473, 32
      %v1476 = vpop.permute.xlu0 %1475
      %1478 = vst.msk [vmem:[#allocation3 + $0x18] sm:$0xff] %vm612, %v1476
      %v1479 = vld [vmem:[#allocation2 + $0x20] sm:$0xff]
      %v1480 = vld [vmem:[%s3] sm:$0xff]
      %v1481 = vld [vmem:[%s3 + $0x8] sm:$0xff]
      %v1482 = vld [vmem:[%s3 + $0x10] sm:$0xff]
      %v1483 = vld [vmem:[%s3 + $0x18] sm:$0xff]
      %v1484 = vsel %vm612, %v1364, 0
      %1486 = vmatprep.subr.mxu0 0.0
      %1487 = vmatpush1.msra.mxu0 %v1480
      %1488 = vmatprep.subr.mxu0 0.0
      %1489 = vmatpush1.msra.mxu0 %v1481
      %1490 = vmatprep.subr.mxu0 0.0
      %1491 = vmatpush1.msra.mxu0 %v1482
      %1492 = vmatprep.subr.mxu0 0.0
      %1493 = vmatpush1.msra.mxu0 %v1483
      %1494 = vmatprep.subr.mxu0 0.0
      %1495 = vmatpush1.msra.mxu0 0.0
      %1496 = vmatprep.subr.mxu0 0.0
      %1497 = vmatpush1.msra.mxu0 0.0
      %1498 = vmatprep.subr.mxu0 0.0
      %1499 = vmatpush1.msra.mxu0 0.0
      %1500 = vmatprep.subr.mxu0 0.0
      %1501 = vmatpush1.msra.mxu0 0.0
      %1502 = vmatprep.subr.mxu0 0.0
      %1503 = vmatpush1.msra.mxu0 0.0
      %1504 = vmatprep.subr.mxu0 0.0
      %1505 = vmatpush1.msra.mxu0 0.0
      %1506 = vmatprep.subr.mxu0 0.0
      %1507 = vmatpush1.msra.mxu0 0.0
      %1508 = vmatprep.subr.mxu0 0.0
      %1509 = vmatpush1.msra.mxu0 0.0
      %1510 = vmatprep.subr.mxu0 0.0
      %1511 = vmatpush1.msra.mxu0 0.0
      %1512 = vmatprep.subr.mxu0 0.0
      %1513 = vmatpush1.msra.mxu0 0.0
      %1514 = vmatprep.subr.mxu0 0.0
      %1515 = vmatpush1.msra.mxu0 0.0
      %1516 = vmatprep.subr.mxu0 0.0
      %1517 = vmatpush1.msra.mxu0 0.0
      %1518 = vmatprep.subr.mxu0 0.0
      %1519 = vmatpush1.msra.mxu0 0.0
      %1520 = vmatprep.subr.mxu0 0.0
      %1521 = vmatpush1.msra.mxu0 0.0
      %1522 = vmatprep.subr.mxu0 0.0
      %1523 = vmatpush1.msra.mxu0 0.0
      %1524 = vmatprep.subr.mxu0 0.0
      %1525 = vmatpush1.msra.mxu0 0.0
      %1526 = vmatprep.subr.mxu0 0.0
      %1527 = vmatpush1.msra.mxu0 0.0
      %1528 = vmatprep.subr.mxu0 0.0
      %1529 = vmatpush1.msra.mxu0 0.0
      %1530 = vmatprep.subr.mxu0 0.0
      %1531 = vmatpush1.msra.mxu0 0.0
      %1532 = vmatprep.subr.mxu0 0.0
      %1533 = vmatpush1.msra.mxu0 0.0
      %1534 = vmatprep.subr.mxu0 0.0
      %1535 = vmatpush1.msra.mxu0 0.0
      %1536 = vmatprep.subr.mxu0 0.0
      %1537 = vmatpush1.msra.mxu0 0.0
      %1538 = vmatprep.subr.mxu0 0.0
      %1539 = vmatpush1.msra.mxu0 0.0
      %1540 = vmatprep.subr.mxu0 0.0
      %1541 = vmatpush1.msra.mxu0 0.0
      %1542 = vmatprep.subr.mxu0 0.0
      %1543 = vmatpush1.msra.mxu0 0.0
      %1544 = vmatprep.subr.mxu0 0.0
      %1545 = vmatpush1.msra.mxu0 0.0
      %1546 = vmatprep.subr.mxu0 0.0
      %1547 = vmatpush1.msra.mxu0 0.0
      %1548 = vmatprep.subr.mxu0 0.0
      %1549 = vmatpush1.msra.mxu0 0.0
      %1550 = vmatprep.mubr.f32.mxu0 0.0
      %1551 = vmatmul.mubr.f32.gmra.mrb[0].mxu0 %v1484
      %v1552 = vpop.f32.mrb[0].mxu0
      %v1553 = vadd.f32 0.0, %v1552
      %v1554 = vpop.f32.mrb[0].mxu0
      %1555 = vdwg.mxu0
      %v1556 = vadd.f32 %v1479, %v1553
      %v1557 = vmul.f32 %v1556, 0.5
      %v1558 = vtanh.pop %v1557
      %v1559 = vmul.f32 %v1558, 0.5
      %v1560 = vadd.f32 %v1559, 0.5
      %v1561 = vtanh.pop %v1556
      %v1562 = vsel %vm599, %v1561, %v1560
      %v1563 = vmul.f32 %v1562, %v1355
      %1565 = vrot.lane.b32.xlu0 %v1562, 64
      %v1566 = vpop.permute.xlu0 %1565
      %v1568 = vmul.f32 %v1562, %v1566
      %1570 = vrot.lane.b32.xlu0 %v1568, 32
      %v1571 = vpop.permute.xlu0 %1570
      %v1573 = vadd.f32 %v1563, %v1571
      %v1574 = vtanh.pop %v1573
      %1576 = vrot.lane.b32.xlu0 %v1574, 64
      %v1577 = vpop.permute.xlu0 %1576
      %v1579 = vmul.f32 %v1562, %v1577
      %1581 = vrot.lane.b32.xlu0 %v1579, 32
      %v1582 = vpop.permute.xlu0 %1581
      %1584 = vrot.lane.b32.xlu0 %v1473, 64
      %v1585 = vpop.permute.xlu0 %1584
      %v1587 = vsel %vm612, %v1582, %v1585
      %v1588 = vld [vmem:[%s4] sm:$0xff]
      %v1589 = vld [vmem:[%s4 + $0x8] sm:$0xff]
      %v1590 = vld [vmem:[%s4 + $0x10] sm:$0xff]
      %v1591 = vld [vmem:[%s4 + $0x18] sm:$0xff]
      %v1592 = vld [vmem:[%s4 + $0x20] sm:$0xff]
      %v1593 = vld [vmem:[%s4 + $0x28] sm:$0xff]
      %v1594 = vld [vmem:[%s4 + $0x30] sm:$0xff]
      %v1595 = vld [vmem:[%s4 + $0x38] sm:$0xff]
      %v1597 = vsel %vm723, %v1587, 0
      %1599 = vmatprep.subr.mxu0 0.0
      %1600 = vmatpush1.msra.mxu0 %v1588
      %1601 = vmatprep.subr.mxu0 0.0
      %1602 = vmatpush1.msra.mxu0 %v1589
      %1603 = vmatprep.subr.mxu0 0.0
      %1604 = vmatpush1.msra.mxu0 %v1590
      %1605 = vmatprep.subr.mxu0 0.0
      %1606 = vmatpush1.msra.mxu0 %v1591
      %1607 = vmatprep.subr.mxu0 0.0
      %1608 = vmatpush1.msra.mxu0 %v1592
      %1609 = vmatprep.subr.mxu0 0.0
      %1610 = vmatpush1.msra.mxu0 %v1593
      %1611 = vmatprep.subr.mxu0 0.0
      %1612 = vmatpush1.msra.mxu0 %v1594
      %1613 = vmatprep.subr.mxu0 0.0
      %1614 = vmatpush1.msra.mxu0 %v1595
      %1615 = vmatprep.subr.mxu0 0.0
      %1616 = vmatpush1.msra.mxu0 0.0
      %1617 = vmatprep.subr.mxu0 0.0
      %1618 = vmatpush1.msra.mxu0 0.0
      %1619 = vmatprep.subr.mxu0 0.0
      %1620 = vmatpush1.msra.mxu0 0.0
      %1621 = vmatprep.subr.mxu0 0.0
      %1622 = vmatpush1.msra.mxu0 0.0
      %1623 = vmatprep.subr.mxu0 0.0
      %1624 = vmatpush1.msra.mxu0 0.0
      %1625 = vmatprep.subr.mxu0 0.0
      %1626 = vmatpush1.msra.mxu0 0.0
      %1627 = vmatprep.subr.mxu0 0.0
      %1628 = vmatpush1.msra.mxu0 0.0
      %1629 = vmatprep.subr.mxu0 0.0
      %1630 = vmatpush1.msra.mxu0 0.0
      %1631 = vmatprep.subr.mxu0 0.0
      %1632 = vmatpush1.msra.mxu0 0.0
      %1633 = vmatprep.subr.mxu0 0.0
      %1634 = vmatpush1.msra.mxu0 0.0
      %1635 = vmatprep.subr.mxu0 0.0
      %1636 = vmatpush1.msra.mxu0 0.0
      %1637 = vmatprep.subr.mxu0 0.0
      %1638 = vmatpush1.msra.mxu0 0.0
      %1639 = vmatprep.subr.mxu0 0.0
      %1640 = vmatpush1.msra.mxu0 0.0
      %1641 = vmatprep.subr.mxu0 0.0
      %1642 = vmatpush1.msra.mxu0 0.0
      %1643 = vmatprep.subr.mxu0 0.0
      %1644 = vmatpush1.msra.mxu0 0.0
      %1645 = vmatprep.subr.mxu0 0.0
      %1646 = vmatpush1.msra.mxu0 0.0
      %1647 = vmatprep.subr.mxu0 0.0
      %1648 = vmatpush1.msra.mxu0 0.0
      %1649 = vmatprep.subr.mxu0 0.0
      %1650 = vmatpush1.msra.mxu0 0.0
      %1651 = vmatprep.subr.mxu0 0.0
      %1652 = vmatpush1.msra.mxu0 0.0
      %1653 = vmatprep.subr.mxu0 0.0
      %1654 = vmatpush1.msra.mxu0 0.0
      %1655 = vmatprep.subr.mxu0 0.0
      %1656 = vmatpush1.msra.mxu0 0.0
      %1657 = vmatprep.subr.mxu0 0.0
      %1658 = vmatpush1.msra.mxu0 0.0
      %1659 = vmatprep.subr.mxu0 0.0
      %1660 = vmatpush1.msra.mxu0 0.0
      %1661 = vmatprep.subr.mxu0 0.0
      %1662 = vmatpush1.msra.mxu0 0.0
      %1663 = vmatprep.mubr.f32.mxu0 0.0
      %1664 = vmatmul.mubr.f32.gmra.mrb[0].mxu0 %v1597
      %v1665 = vpop.f32.mrb[0].mxu0
      %v1666 = vadd.f32 %v605, %v1665
      %v1667 = vpop.f32.mrb[0].mxu0
      %1668 = vdwg.mxu0
      %v1669 = vmul.f32 %v1666, 0.5
      %v1670 = vtanh.pop %v1669
      %v1671 = vmul.f32 %v1670, 0.5
      %v1672 = vadd.f32 %v1671, 0.5
      %v1673 = vtanh.pop %v1666
      %v1674 = vsel %vm599, %v1673, %v1672
      %v1675 = vmul.f32 %v1674, %v1467
      %1677 = vrot.lane.b32.xlu0 %v1674, 64
      %v1678 = vpop.permute.xlu0 %1677
      %v1680 = vmul.f32 %v1674, %v1678
      %1682 = vrot.lane.b32.xlu0 %v1680, 32
      %v1683 = vpop.permute.xlu0 %1682
      %v1685 = vadd.f32 %v1675, %v1683
      %v1686 = vtanh.pop %v1685
      %1688 = vrot.lane.b32.xlu0 %v1686, 64
      %v1689 = vpop.permute.xlu0 %1688
      %v1691 = vmul.f32 %v1674, %v1689
      %1693 = vrot.lane.b32.xlu0 %v1691, 32
      %v1694 = vpop.permute.xlu0 %1693
      %1696 = vst.msk [vmem:[#allocation3 + $0x20] sm:$0xff] %vm612, %v1694
      %v1697 = vld [vmem:[#allocation2 + $0x28] sm:$0xff]
      %v1698 = vld [vmem:[%s3] sm:$0xff]
      %v1699 = vld [vmem:[%s3 + $0x8] sm:$0xff]
      %v1700 = vld [vmem:[%s3 + $0x10] sm:$0xff]
      %v1701 = vld [vmem:[%s3 + $0x18] sm:$0xff]
      %v1702 = vsel %vm612, %v1582, 0
      %1704 = vmatprep.subr.mxu0 0.0
      %1705 = vmatpush1.msra.mxu0 %v1698
      %1706 = vmatprep.subr.mxu0 0.0
      %1707 = vmatpush1.msra.mxu0 %v1699
      %1708 = vmatprep.subr.mxu0 0.0
      %1709 = vmatpush1.msra.mxu0 %v1700
      %1710 = vmatprep.subr.mxu0 0.0
      %1711 = vmatpush1.msra.mxu0 %v1701
      %1712 = vmatprep.subr.mxu0 0.0
      %1713 = vmatpush1.msra.mxu0 0.0
      %1714 = vmatprep.subr.mxu0 0.0
      %1715 = vmatpush1.msra.mxu0 0.0
      %1716 = vmatprep.subr.mxu0 0.0
      %1717 = vmatpush1.msra.mxu0 0.0
      %1718 = vmatprep.subr.mxu0 0.0
      %1719 = vmatpush1.msra.mxu0 0.0
      %1720 = vmatprep.subr.mxu0 0.0
      %1721 = vmatpush1.msra.mxu0 0.0
      %1722 = vmatprep.subr.mxu0 0.0
      %1723 = vmatpush1.msra.mxu0 0.0
      %1724 = vmatprep.subr.mxu0 0.0
      %1725 = vmatpush1.msra.mxu0 0.0
      %1726 = vmatprep.subr.mxu0 0.0
      %1727 = vmatpush1.msra.mxu0 0.0
      %1728 = vmatprep.subr.mxu0 0.0
      %1729 = vmatpush1.msra.mxu0 0.0
      %1730 = vmatprep.subr.mxu0 0.0
      %1731 = vmatpush1.msra.mxu0 0.0
      %1732 = vmatprep.subr.mxu0 0.0
      %1733 = vmatpush1.msra.mxu0 0.0
      %1734 = vmatprep.subr.mxu0 0.0
      %1735 = vmatpush1.msra.mxu0 0.0
      %1736 = vmatprep.subr.mxu0 0.0
      %1737 = vmatpush1.msra.mxu0 0.0
      %1738 = vmatprep.subr.mxu0 0.0
      %1739 = vmatpush1.msra.mxu0 0.0
      %1740 = vmatprep.subr.mxu0 0.0
      %1741 = vmatpush1.msra.mxu0 0.0
      %1742 = vmatprep.subr.mxu0 0.0
      %1743 = vmatpush1.msra.mxu0 0.0
      %1744 = vmatprep.subr.mxu0 0.0
      %1745 = vmatpush1.msra.mxu0 0.0
      %1746 = vmatprep.subr.mxu0 0.0
      %1747 = vmatpush1.msra.mxu0 0.0
      %1748 = vmatprep.subr.mxu0 0.0
      %1749 = vmatpush1.msra.mxu0 0.0
      %1750 = vmatprep.subr.mxu0 0.0
      %1751 = vmatpush1.msra.mxu0 0.0
      %1752 = vmatprep.subr.mxu0 0.0
      %1753 = vmatpush1.msra.mxu0 0.0
      %1754 = vmatprep.subr.mxu0 0.0
      %1755 = vmatpush1.msra.mxu0 0.0
      %1756 = vmatprep.subr.mxu0 0.0
      %1757 = vmatpush1.msra.mxu0 0.0
      %1758 = vmatprep.subr.mxu0 0.0
      %1759 = vmatpush1.msra.mxu0 0.0
      %1760 = vmatprep.subr.mxu0 0.0
      %1761 = vmatpush1.msra.mxu0 0.0
      %1762 = vmatprep.subr.mxu0 0.0
      %1763 = vmatpush1.msra.mxu0 0.0
      %1764 = vmatprep.subr.mxu0 0.0
      %1765 = vmatpush1.msra.mxu0 0.0
      %1766 = vmatprep.subr.mxu0 0.0
      %1767 = vmatpush1.msra.mxu0 0.0
      %1768 = vmatprep.mubr.f32.mxu0 0.0
      %1769 = vmatmul.mubr.f32.gmra.mrb[0].mxu0 %v1702
      %v1770 = vpop.f32.mrb[0].mxu0
      %v1771 = vadd.f32 0.0, %v1770
      %v1772 = vpop.f32.mrb[0].mxu0
      %1773 = vdwg.mxu0
      %v1774 = vadd.f32 %v1697, %v1771
      %v1775 = vmul.f32 %v1774, 0.5
      %v1776 = vtanh.pop %v1775
      %v1777 = vmul.f32 %v1776, 0.5
      %v1778 = vadd.f32 %v1777, 0.5
      %v1779 = vtanh.pop %v1774
      %v1780 = vsel %vm599, %v1779, %v1778
      %v1781 = vmul.f32 %v1780, %v1573
      %1783 = vrot.lane.b32.xlu0 %v1780, 64
      %v1784 = vpop.permute.xlu0 %1783
      %v1786 = vmul.f32 %v1780, %v1784
      %1788 = vrot.lane.b32.xlu0 %v1786, 32
      %v1789 = vpop.permute.xlu0 %1788
      %v1791 = vadd.f32 %v1781, %v1789
      %v1792 = vtanh.pop %v1791
      %1794 = vrot.lane.b32.xlu0 %v1792, 64
      %v1795 = vpop.permute.xlu0 %1794
      %v1797 = vmul.f32 %v1780, %v1795
      %1799 = vrot.lane.b32.xlu0 %v1797, 32
      %v1800 = vpop.permute.xlu0 %1799
      %1802 = vrot.lane.b32.xlu0 %v1691, 64
      %v1803 = vpop.permute.xlu0 %1802
      %v1805 = vsel %vm612, %v1800, %v1803
      %v1806 = vld [vmem:[%s4] sm:$0xff]
      %v1807 = vld [vmem:[%s4 + $0x8] sm:$0xff]
      %v1808 = vld [vmem:[%s4 + $0x10] sm:$0xff]
      %v1809 = vld [vmem:[%s4 + $0x18] sm:$0xff]
      %v1810 = vld [vmem:[%s4 + $0x20] sm:$0xff]
      %v1811 = vld [vmem:[%s4 + $0x28] sm:$0xff]
      %v1812 = vld [vmem:[%s4 + $0x30] sm:$0xff]
      %v1813 = vld [vmem:[%s4 + $0x38] sm:$0xff]
      %v1815 = vsel %vm723, %v1805, 0
      %1817 = vmatprep.subr.mxu0 0.0
      %1818 = vmatpush1.msra.mxu0 %v1806
      %1819 = vmatprep.subr.mxu0 0.0
      %1820 = vmatpush1.msra.mxu0 %v1807
      %1821 = vmatprep.subr.mxu0 0.0
      %1822 = vmatpush1.msra.mxu0 %v1808
      %1823 = vmatprep.subr.mxu0 0.0
      %1824 = vmatpush1.msra.mxu0 %v1809
      %1825 = vmatprep.subr.mxu0 0.0
      %1826 = vmatpush1.msra.mxu0 %v1810
      %1827 = vmatprep.subr.mxu0 0.0
      %1828 = vmatpush1.msra.mxu0 %v1811
      %1829 = vmatprep.subr.mxu0 0.0
      %1830 = vmatpush1.msra.mxu0 %v1812
      %1831 = vmatprep.subr.mxu0 0.0
      %1832 = vmatpush1.msra.mxu0 %v1813
      %1833 = vmatprep.subr.mxu0 0.0
      %1834 = vmatpush1.msra.mxu0 0.0
      %1835 = vmatprep.subr.mxu0 0.0
      %1836 = vmatpush1.msra.mxu0 0.0
      %1837 = vmatprep.subr.mxu0 0.0
      %1838 = vmatpush1.msra.mxu0 0.0
      %1839 = vmatprep.subr.mxu0 0.0
      %1840 = vmatpush1.msra.mxu0 0.0
      %1841 = vmatprep.subr.mxu0 0.0
      %1842 = vmatpush1.msra.mxu0 0.0
      %1843 = vmatprep.subr.mxu0 0.0
      %1844 = vmatpush1.msra.mxu0 0.0
      %1845 = vmatprep.subr.mxu0 0.0
      %1846 = vmatpush1.msra.mxu0 0.0
      %1847 = vmatprep.subr.mxu0 0.0
      %1848 = vmatpush1.msra.mxu0 0.0
      %1849 = vmatprep.subr.mxu0 0.0
      %1850 = vmatpush1.msra.mxu0 0.0
      %1851 = vmatprep.subr.mxu0 0.0
      %1852 = vmatpush1.msra.mxu0 0.0
      %1853 = vmatprep.subr.mxu0 0.0
      %1854 = vmatpush1.msra.mxu0 0.0
      %1855 = vmatprep.subr.mxu0 0.0
      %1856 = vmatpush1.msra.mxu0 0.0
      %1857 = vmatprep.subr.mxu0 0.0
      %1858 = vmatpush1.msra.mxu0 0.0
      %1859 = vmatprep.subr.mxu0 0.0
      %1860 = vmatpush1.msra.mxu0 0.0
      %1861 = vmatprep.subr.mxu0 0.0
      %1862 = vmatpush1.msra.mxu0 0.0
      %1863 = vmatprep.subr.mxu0 0.0
      %1864 = vmatpush1.msra.mxu0 0.0
      %1865 = vmatprep.subr.mxu0 0.0
      %1866 = vmatpush1.msra.mxu0 0.0
      %1867 = vmatprep.subr.mxu0 0.0
      %1868 = vmatpush1.msra.mxu0 0.0
      %1869 = vmatprep.subr.mxu0 0.0
      %1870 = vmatpush1.msra.mxu0 0.0
      %1871 = vmatprep.subr.mxu0 0.0
      %1872 = vmatpush1.msra.mxu0 0.0
      %1873 = vmatprep.subr.mxu0 0.0
      %1874 = vmatpush1.msra.mxu0 0.0
      %1875 = vmatprep.subr.mxu0 0.0
      %1876 = vmatpush1.msra.mxu0 0.0
      %1877 = vmatprep.subr.mxu0 0.0
      %1878 = vmatpush1.msra.mxu0 0.0
      %1879 = vmatprep.subr.mxu0 0.0
      %1880 = vmatpush1.msra.mxu0 0.0
      %1881 = vmatprep.mubr.f32.mxu0 0.0
      %1882 = vmatmul.mubr.f32.gmra.mrb[0].mxu0 %v1815
      %v1883 = vpop.f32.mrb[0].mxu0
      %v1884 = vadd.f32 %v605, %v1883
      %v1885 = vpop.f32.mrb[0].mxu0
      %1886 = vdwg.mxu0
      %v1887 = vmul.f32 %v1884, 0.5
      %v1888 = vtanh.pop %v1887
      %v1889 = vmul.f32 %v1888, 0.5
      %v1890 = vadd.f32 %v1889, 0.5
      %v1891 = vtanh.pop %v1884
      %v1892 = vsel %vm599, %v1891, %v1890
      %v1893 = vmul.f32 %v1892, %v1685
      %1895 = vrot.lane.b32.xlu0 %v1892, 64
      %v1896 = vpop.permute.xlu0 %1895
      %v1898 = vmul.f32 %v1892, %v1896
      %1900 = vrot.lane.b32.xlu0 %v1898, 32
      %v1901 = vpop.permute.xlu0 %1900
      %v1903 = vadd.f32 %v1893, %v1901
      %v1904 = vtanh.pop %v1903
      %1906 = vrot.lane.b32.xlu0 %v1904, 64
      %v1907 = vpop.permute.xlu0 %1906
      %v1909 = vmul.f32 %v1892, %v1907
      %1911 = vrot.lane.b32.xlu0 %v1909, 32
      %v1912 = vpop.permute.xlu0 %1911
      %1914 = vst.msk [vmem:[#allocation3 + $0x28] sm:$0xff] %vm612, %v1912
      %v1915 = vld [vmem:[#allocation2 + $0x30] sm:$0xff]
      %v1916 = vld [vmem:[%s3] sm:$0xff]
      %v1917 = vld [vmem:[%s3 + $0x8] sm:$0xff]
      %v1918 = vld [vmem:[%s3 + $0x10] sm:$0xff]
      %v1919 = vld [vmem:[%s3 + $0x18] sm:$0xff]
      %v1920 = vsel %vm612, %v1800, 0
      %1922 = vmatprep.subr.mxu0 0.0
      %1923 = vmatpush1.msra.mxu0 %v1916
      %1924 = vmatprep.subr.mxu0 0.0
      %1925 = vmatpush1.msra.mxu0 %v1917
      %1926 = vmatprep.subr.mxu0 0.0
      %1927 = vmatpush1.msra.mxu0 %v1918
      %1928 = vmatprep.subr.mxu0 0.0
      %1929 = vmatpush1.msra.mxu0 %v1919
      %1930 = vmatprep.subr.mxu0 0.0
      %1931 = vmatpush1.msra.mxu0 0.0
      %1932 = vmatprep.subr.mxu0 0.0
      %1933 = vmatpush1.msra.mxu0 0.0
      %1934 = vmatprep.subr.mxu0 0.0
      %1935 = vmatpush1.msra.mxu0 0.0
      %1936 = vmatprep.subr.mxu0 0.0
      %1937 = vmatpush1.msra.mxu0 0.0
      %1938 = vmatprep.subr.mxu0 0.0
      %1939 = vmatpush1.msra.mxu0 0.0
      %1940 = vmatprep.subr.mxu0 0.0
      %1941 = vmatpush1.msra.mxu0 0.0
      %1942 = vmatprep.subr.mxu0 0.0
      %1943 = vmatpush1.msra.mxu0 0.0
      %1944 = vmatprep.subr.mxu0 0.0
      %1945 = vmatpush1.msra.mxu0 0.0
      %1946 = vmatprep.subr.mxu0 0.0
      %1947 = vmatpush1.msra.mxu0 0.0
      %1948 = vmatprep.subr.mxu0 0.0
      %1949 = vmatpush1.msra.mxu0 0.0
      %1950 = vmatprep.subr.mxu0 0.0
      %1951 = vmatpush1.msra.mxu0 0.0
      %1952 = vmatprep.subr.mxu0 0.0
      %1953 = vmatpush1.msra.mxu0 0.0
      %1954 = vmatprep.subr.mxu0 0.0
      %1955 = vmatpush1.msra.mxu0 0.0
      %1956 = vmatprep.subr.mxu0 0.0
      %1957 = vmatpush1.msra.mxu0 0.0
      %1958 = vmatprep.subr.mxu0 0.0
      %1959 = vmatpush1.msra.mxu0 0.0
      %1960 = vmatprep.subr.mxu0 0.0
      %1961 = vmatpush1.msra.mxu0 0.0
      %1962 = vmatprep.subr.mxu0 0.0
      %1963 = vmatpush1.msra.mxu0 0.0
      %1964 = vmatprep.subr.mxu0 0.0
      %1965 = vmatpush1.msra.mxu0 0.0
      %1966 = vmatprep.subr.mxu0 0.0
      %1967 = vmatpush1.msra.mxu0 0.0
      %1968 = vmatprep.subr.mxu0 0.0
      %1969 = vmatpush1.msra.mxu0 0.0
      %1970 = vmatprep.subr.mxu0 0.0
      %1971 = vmatpush1.msra.mxu0 0.0
      %1972 = vmatprep.subr.mxu0 0.0
      %1973 = vmatpush1.msra.mxu0 0.0
      %1974 = vmatprep.subr.mxu0 0.0
      %1975 = vmatpush1.msra.mxu0 0.0
      %1976 = vmatprep.subr.mxu0 0.0
      %1977 = vmatpush1.msra.mxu0 0.0
      %1978 = vmatprep.subr.mxu0 0.0
      %1979 = vmatpush1.msra.mxu0 0.0
      %1980 = vmatprep.subr.mxu0 0.0
      %1981 = vmatpush1.msra.mxu0 0.0
      %1982 = vmatprep.subr.mxu0 0.0
      %1983 = vmatpush1.msra.mxu0 0.0
      %1984 = vmatprep.subr.mxu0 0.0
      %1985 = vmatpush1.msra.mxu0 0.0
      %1986 = vmatprep.mubr.f32.mxu0 0.0
      %1987 = vmatmul.mubr.f32.gmra.mrb[0].mxu0 %v1920
      %v1988 = vpop.f32.mrb[0].mxu0
      %v1989 = vadd.f32 0.0, %v1988
      %v1990 = vpop.f32.mrb[0].mxu0
      %1991 = vdwg.mxu0
      %v1992 = vadd.f32 %v1915, %v1989
      %v1993 = vmul.f32 %v1992, 0.5
      %v1994 = vtanh.pop %v1993
      %v1995 = vmul.f32 %v1994, 0.5
      %v1996 = vadd.f32 %v1995, 0.5
      %v1997 = vtanh.pop %v1992
      %v1998 = vsel %vm599, %v1997, %v1996
      %v1999 = vmul.f32 %v1998, %v1791
      %2001 = vrot.lane.b32.xlu0 %v1998, 64
      %v2002 = vpop.permute.xlu0 %2001
      %v2004 = vmul.f32 %v1998, %v2002
      %2006 = vrot.lane.b32.xlu0 %v2004, 32
      %v2007 = vpop.permute.xlu0 %2006
      %v2009 = vadd.f32 %v1999, %v2007
      %v2010 = vtanh.pop %v2009
      %2012 = vrot.lane.b32.xlu0 %v2010, 64
      %v2013 = vpop.permute.xlu0 %2012
      %v2015 = vmul.f32 %v1998, %v2013
      %2017 = vrot.lane.b32.xlu0 %v2015, 32
      %v2018 = vpop.permute.xlu0 %2017
      %2020 = vrot.lane.b32.xlu0 %v1909, 64
      %v2021 = vpop.permute.xlu0 %2020
      %v2023 = vsel %vm612, %v2018, %v2021
      %v2024 = vld [vmem:[%s4] sm:$0xff]
      %v2025 = vld [vmem:[%s4 + $0x8] sm:$0xff]
      %v2026 = vld [vmem:[%s4 + $0x10] sm:$0xff]
      %v2027 = vld [vmem:[%s4 + $0x18] sm:$0xff]
      %v2028 = vld [vmem:[%s4 + $0x20] sm:$0xff]
      %v2029 = vld [vmem:[%s4 + $0x28] sm:$0xff]
      %v2030 = vld [vmem:[%s4 + $0x30] sm:$0xff]
      %v2031 = vld [vmem:[%s4 + $0x38] sm:$0xff]
      %v2033 = vsel %vm723, %v2023, 0
      %2035 = vmatprep.subr.mxu0 0.0
      %2036 = vmatpush1.msra.mxu0 %v2024
      %2037 = vmatprep.subr.mxu0 0.0
      %2038 = vmatpush1.msra.mxu0 %v2025
      %2039 = vmatprep.subr.mxu0 0.0
      %2040 = vmatpush1.msra.mxu0 %v2026
      %2041 = vmatprep.subr.mxu0 0.0
      %2042 = vmatpush1.msra.mxu0 %v2027
      %2043 = vmatprep.subr.mxu0 0.0
      %2044 = vmatpush1.msra.mxu0 %v2028
      %2045 = vmatprep.subr.mxu0 0.0
      %2046 = vmatpush1.msra.mxu0 %v2029
      %2047 = vmatprep.subr.mxu0 0.0
      %2048 = vmatpush1.msra.mxu0 %v2030
      %2049 = vmatprep.subr.mxu0 0.0
      %2050 = vmatpush1.msra.mxu0 %v2031
      %2051 = vmatprep.subr.mxu0 0.0
      %2052 = vmatpush1.msra.mxu0 0.0
      %2053 = vmatprep.subr.mxu0 0.0
      %2054 = vmatpush1.msra.mxu0 0.0
      %2055 = vmatprep.subr.mxu0 0.0
      %2056 = vmatpush1.msra.mxu0 0.0
      %2057 = vmatprep.subr.mxu0 0.0
      %2058 = vmatpush1.msra.mxu0 0.0
      %2059 = vmatprep.subr.mxu0 0.0
      %2060 = vmatpush1.msra.mxu0 0.0
      %2061 = vmatprep.subr.mxu0 0.0
      %2062 = vmatpush1.msra.mxu0 0.0
      %2063 = vmatprep.subr.mxu0 0.0
      %2064 = vmatpush1.msra.mxu0 0.0
      %2065 = vmatprep.subr.mxu0 0.0
      %2066 = vmatpush1.msra.mxu0 0.0
      %2067 = vmatprep.subr.mxu0 0.0
      %2068 = vmatpush1.msra.mxu0 0.0
      %2069 = vmatprep.subr.mxu0 0.0
      %2070 = vmatpush1.msra.mxu0 0.0
      %2071 = vmatprep.subr.mxu0 0.0
      %2072 = vmatpush1.msra.mxu0 0.0
      %2073 = vmatprep.subr.mxu0 0.0
      %2074 = vmatpush1.msra.mxu0 0.0
      %2075 = vmatprep.subr.mxu0 0.0
      %2076 = vmatpush1.msra.mxu0 0.0
      %2077 = vmatprep.subr.mxu0 0.0
      %2078 = vmatpush1.msra.mxu0 0.0
      %2079 = vmatprep.subr.mxu0 0.0
      %2080 = vmatpush1.msra.mxu0 0.0
      %2081 = vmatprep.subr.mxu0 0.0
      %2082 = vmatpush1.msra.mxu0 0.0
      %2083 = vmatprep.subr.mxu0 0.0
      %2084 = vmatpush1.msra.mxu0 0.0
      %2085 = vmatprep.subr.mxu0 0.0
      %2086 = vmatpush1.msra.mxu0 0.0
      %2087 = vmatprep.subr.mxu0 0.0
      %2088 = vmatpush1.msra.mxu0 0.0
      %2089 = vmatprep.subr.mxu0 0.0
      %2090 = vmatpush1.msra.mxu0 0.0
      %2091 = vmatprep.subr.mxu0 0.0
      %2092 = vmatpush1.msra.mxu0 0.0
      %2093 = vmatprep.subr.mxu0 0.0
      %2094 = vmatpush1.msra.mxu0 0.0
      %2095 = vmatprep.subr.mxu0 0.0
      %2096 = vmatpush1.msra.mxu0 0.0
      %2097 = vmatprep.subr.mxu0 0.0
      %2098 = vmatpush1.msra.mxu0 0.0
      %2099 = vmatprep.mubr.f32.mxu0 0.0
      %2100 = vmatmul.mubr.f32.gmra.mrb[0].mxu0 %v2033
      %v2101 = vpop.f32.mrb[0].mxu0
      %v2102 = vadd.f32 %v605, %v2101
      %v2103 = vpop.f32.mrb[0].mxu0
      %2104 = vdwg.mxu0
      %v2105 = vmul.f32 %v2102, 0.5
      %v2106 = vtanh.pop %v2105
      %v2107 = vmul.f32 %v2106, 0.5
      %v2108 = vadd.f32 %v2107, 0.5
      %v2109 = vtanh.pop %v2102
      %v2110 = vsel %vm599, %v2109, %v2108
      %v2111 = vmul.f32 %v2110, %v1903
      %2113 = vrot.lane.b32.xlu0 %v2110, 64
      %v2114 = vpop.permute.xlu0 %2113
      %v2116 = vmul.f32 %v2110, %v2114
      %2118 = vrot.lane.b32.xlu0 %v2116, 32
      %v2119 = vpop.permute.xlu0 %2118
      %v2121 = vadd.f32 %v2111, %v2119
      %v2122 = vtanh.pop %v2121
      %2124 = vrot.lane.b32.xlu0 %v2122, 64
      %v2125 = vpop.permute.xlu0 %2124
      %v2127 = vmul.f32 %v2110, %v2125
      %2129 = vrot.lane.b32.xlu0 %v2127, 32
      %v2130 = vpop.permute.xlu0 %2129
      %2132 = vst.msk [vmem:[#allocation3 + $0x30] sm:$0xff] %vm612, %v2130
      %v2133 = vld [vmem:[#allocation2 + $0x38] sm:$0xff]
      %v2134 = vld [vmem:[%s3] sm:$0xff]
      %v2135 = vld [vmem:[%s3 + $0x8] sm:$0xff]
      %v2136 = vld [vmem:[%s3 + $0x10] sm:$0xff]
      %v2137 = vld [vmem:[%s3 + $0x18] sm:$0xff]
      %v2138 = vsel %vm612, %v2018, 0
      %2140 = vmatprep.subr.mxu0 0.0
      %2141 = vmatpush1.msra.mxu0 %v2134
      %2142 = vmatprep.subr.mxu0 0.0
      %2143 = vmatpush1.msra.mxu0 %v2135
      %2144 = vmatprep.subr.mxu0 0.0
      %2145 = vmatpush1.msra.mxu0 %v2136
      %2146 = vmatprep.subr.mxu0 0.0
      %2147 = vmatpush1.msra.mxu0 %v2137
      %2148 = vmatprep.subr.mxu0 0.0
      %2149 = vmatpush1.msra.mxu0 0.0
      %2150 = vmatprep.subr.mxu0 0.0
      %2151 = vmatpush1.msra.mxu0 0.0
      %2152 = vmatprep.subr.mxu0 0.0
      %2153 = vmatpush1.msra.mxu0 0.0
      %2154 = vmatprep.subr.mxu0 0.0
      %2155 = vmatpush1.msra.mxu0 0.0
      %2156 = vmatprep.subr.mxu0 0.0
      %2157 = vmatpush1.msra.mxu0 0.0
      %2158 = vmatprep.subr.mxu0 0.0
      %2159 = vmatpush1.msra.mxu0 0.0
      %2160 = vmatprep.subr.mxu0 0.0
      %2161 = vmatpush1.msra.mxu0 0.0
      %2162 = vmatprep.subr.mxu0 0.0
      %2163 = vmatpush1.msra.mxu0 0.0
      %2164 = vmatprep.subr.mxu0 0.0
      %2165 = vmatpush1.msra.mxu0 0.0
      %2166 = vmatprep.subr.mxu0 0.0
      %2167 = vmatpush1.msra.mxu0 0.0
      %2168 = vmatprep.subr.mxu0 0.0
      %2169 = vmatpush1.msra.mxu0 0.0
      %2170 = vmatprep.subr.mxu0 0.0
      %2171 = vmatpush1.msra.mxu0 0.0
      %2172 = vmatprep.subr.mxu0 0.0
      %2173 = vmatpush1.msra.mxu0 0.0
      %2174 = vmatprep.subr.mxu0 0.0
      %2175 = vmatpush1.msra.mxu0 0.0
      %2176 = vmatprep.subr.mxu0 0.0
      %2177 = vmatpush1.msra.mxu0 0.0
      %2178 = vmatprep.subr.mxu0 0.0
      %2179 = vmatpush1.msra.mxu0 0.0
      %2180 = vmatprep.subr.mxu0 0.0
      %2181 = vmatpush1.msra.mxu0 0.0
      %2182 = vmatprep.subr.mxu0 0.0
      %2183 = vmatpush1.msra.mxu0 0.0
      %2184 = vmatprep.subr.mxu0 0.0
      %2185 = vmatpush1.msra.mxu0 0.0
      %2186 = vmatprep.subr.mxu0 0.0
      %2187 = vmatpush1.msra.mxu0 0.0
      %2188 = vmatprep.subr.mxu0 0.0
      %2189 = vmatpush1.msra.mxu0 0.0
      %2190 = vmatprep.subr.mxu0 0.0
      %2191 = vmatpush1.msra.mxu0 0.0
      %2192 = vmatprep.subr.mxu0 0.0
      %2193 = vmatpush1.msra.mxu0 0.0
      %2194 = vmatprep.subr.mxu0 0.0
      %2195 = vmatpush1.msra.mxu0 0.0
      %2196 = vmatprep.subr.mxu0 0.0
      %2197 = vmatpush1.msra.mxu0 0.0
      %2198 = vmatprep.subr.mxu0 0.0
      %2199 = vmatpush1.msra.mxu0 0.0
      %2200 = vmatprep.subr.mxu0 0.0
      %2201 = vmatpush1.msra.mxu0 0.0
      %2202 = vmatprep.subr.mxu0 0.0
      %2203 = vmatpush1.msra.mxu0 0.0
      %2204 = vmatprep.mubr.f32.mxu0 0.0
      %2205 = vmatmul.mubr.f32.gmra.mrb[0].mxu0 %v2138
      %v2206 = vpop.f32.mrb[0].mxu0
      %v2207 = vadd.f32 0.0, %v2206
      %v2208 = vpop.f32.mrb[0].mxu0
      %2209 = vdwg.mxu0
      %v2210 = vadd.f32 %v2133, %v2207
      %v2211 = vmul.f32 %v2210, 0.5
      %v2212 = vtanh.pop %v2211
      %v2213 = vmul.f32 %v2212, 0.5
      %v2214 = vadd.f32 %v2213, 0.5
      %v2215 = vtanh.pop %v2210
      %v2216 = vsel %vm599, %v2215, %v2214
      %v2217 = vmul.f32 %v2216, %v2009
      %2219 = vrot.lane.b32.xlu0 %v2216, 64
      %v2220 = vpop.permute.xlu0 %2219
      %v2222 = vmul.f32 %v2216, %v2220
      %2224 = vrot.lane.b32.xlu0 %v2222, 32
      %v2225 = vpop.permute.xlu0 %2224
      %v2227 = vadd.f32 %v2217, %v2225
      %v2228 = vtanh.pop %v2227
      %2230 = vrot.lane.b32.xlu0 %v2228, 64
      %v2231 = vpop.permute.xlu0 %2230
      %v2233 = vmul.f32 %v2216, %v2231
      %2235 = vrot.lane.b32.xlu0 %v2233, 32
      %v2236 = vpop.permute.xlu0 %2235
      %2238 = vrot.lane.b32.xlu0 %v2127, 64
      %v2239 = vpop.permute.xlu0 %2238
      %v2241 = vsel %vm612, %v2236, %v2239
      %v2242 = vld [vmem:[%s4] sm:$0xff]
      %v2243 = vld [vmem:[%s4 + $0x8] sm:$0xff]
      %v2244 = vld [vmem:[%s4 + $0x10] sm:$0xff]
      %v2245 = vld [vmem:[%s4 + $0x18] sm:$0xff]
      %v2246 = vld [vmem:[%s4 + $0x20] sm:$0xff]
      %v2247 = vld [vmem:[%s4 + $0x28] sm:$0xff]
      %v2248 = vld [vmem:[%s4 + $0x30] sm:$0xff]
      %v2249 = vld [vmem:[%s4 + $0x38] sm:$0xff]
      %v2251 = vsel %vm723, %v2241, 0
      %2253 = vmatprep.subr.mxu0 0.0
      %2254 = vmatpush1.msra.mxu0 %v2242
      %2255 = vmatprep.subr.mxu0 0.0
      %2256 = vmatpush1.msra.mxu0 %v2243
      %2257 = vmatprep.subr.mxu0 0.0
      %2258 = vmatpush1.msra.mxu0 %v2244
      %2259 = vmatprep.subr.mxu0 0.0
      %2260 = vmatpush1.msra.mxu0 %v2245
      %2261 = vmatprep.subr.mxu0 0.0
      %2262 = vmatpush1.msra.mxu0 %v2246
      %2263 = vmatprep.subr.mxu0 0.0
      %2264 = vmatpush1.msra.mxu0 %v2247
      %2265 = vmatprep.subr.mxu0 0.0
      %2266 = vmatpush1.msra.mxu0 %v2248
      %2267 = vmatprep.subr.mxu0 0.0
      %2268 = vmatpush1.msra.mxu0 %v2249
      %2269 = vmatprep.subr.mxu0 0.0
      %2270 = vmatpush1.msra.mxu0 0.0
      %2271 = vmatprep.subr.mxu0 0.0
      %2272 = vmatpush1.msra.mxu0 0.0
      %2273 = vmatprep.subr.mxu0 0.0
      %2274 = vmatpush1.msra.mxu0 0.0
      %2275 = vmatprep.subr.mxu0 0.0
      %2276 = vmatpush1.msra.mxu0 0.0
      %2277 = vmatprep.subr.mxu0 0.0
      %2278 = vmatpush1.msra.mxu0 0.0
      %2279 = vmatprep.subr.mxu0 0.0
      %2280 = vmatpush1.msra.mxu0 0.0
      %2281 = vmatprep.subr.mxu0 0.0
      %2282 = vmatpush1.msra.mxu0 0.0
      %2283 = vmatprep.subr.mxu0 0.0
      %2284 = vmatpush1.msra.mxu0 0.0
      %2285 = vmatprep.subr.mxu0 0.0
      %2286 = vmatpush1.msra.mxu0 0.0
      %2287 = vmatprep.subr.mxu0 0.0
      %2288 = vmatpush1.msra.mxu0 0.0
      %2289 = vmatprep.subr.mxu0 0.0
      %2290 = vmatpush1.msra.mxu0 0.0
      %2291 = vmatprep.subr.mxu0 0.0
      %2292 = vmatpush1.msra.mxu0 0.0
      %2293 = vmatprep.subr.mxu0 0.0
      %2294 = vmatpush1.msra.mxu0 0.0
      %2295 = vmatprep.subr.mxu0 0.0
      %2296 = vmatpush1.msra.mxu0 0.0
      %2297 = vmatprep.subr.mxu0 0.0
      %2298 = vmatpush1.msra.mxu0 0.0
      %2299 = vmatprep.subr.mxu0 0.0
      %2300 = vmatpush1.msra.mxu0 0.0
      %2301 = vmatprep.subr.mxu0 0.0
      %2302 = vmatpush1.msra.mxu0 0.0
      %2303 = vmatprep.subr.mxu0 0.0
      %2304 = vmatpush1.msra.mxu0 0.0
      %2305 = vmatprep.subr.mxu0 0.0
      %2306 = vmatpush1.msra.mxu0 0.0
      %2307 = vmatprep.subr.mxu0 0.0
      %2308 = vmatpush1.msra.mxu0 0.0
      %2309 = vmatprep.subr.mxu0 0.0
      %2310 = vmatpush1.msra.mxu0 0.0
      %2311 = vmatprep.subr.mxu0 0.0
      %2312 = vmatpush1.msra.mxu0 0.0
      %2313 = vmatprep.subr.mxu0 0.0
      %2314 = vmatpush1.msra.mxu0 0.0
      %2315 = vmatprep.subr.mxu0 0.0
      %2316 = vmatpush1.msra.mxu0 0.0
      %2317 = vmatprep.mubr.f32.mxu0 0.0
      %2318 = vmatmul.mubr.f32.gmra.mrb[0].mxu0 %v2251
      %v2319 = vpop.f32.mrb[0].mxu0
      %v2320 = vadd.f32 %v605, %v2319
      %v2321 = vpop.f32.mrb[0].mxu0
      %2322 = vdwg.mxu0
      %v2323 = vmul.f32 %v2320, 0.5
      %v2324 = vtanh.pop %v2323
      %v2325 = vmul.f32 %v2324, 0.5
      %v2326 = vadd.f32 %v2325, 0.5
      %v2327 = vtanh.pop %v2320
      %v2328 = vsel %vm599, %v2327, %v2326
      %v2329 = vmul.f32 %v2328, %v2121
      %2331 = vrot.lane.b32.xlu0 %v2328, 64
      %v2332 = vpop.permute.xlu0 %2331
      %v2334 = vmul.f32 %v2328, %v2332
      %2336 = vrot.lane.b32.xlu0 %v2334, 32
      %v2337 = vpop.permute.xlu0 %2336
      %v2339 = vadd.f32 %v2329, %v2337
      %v2340 = vtanh.pop %v2339
      %2342 = vrot.lane.b32.xlu0 %v2340, 64
      %v2343 = vpop.permute.xlu0 %2342
      %v2345 = vmul.f32 %v2328, %v2343
      %2347 = vrot.lane.b32.xlu0 %v2345, 32
      %v2348 = vpop.permute.xlu0 %2347
      %2350 = vst.msk [vmem:[#allocation3 + $0x38] sm:$0xff] %vm612, %v2348
      %v2351 = vld [vmem:[#allocation2 + $0x40] sm:$0xff]
      %v2352 = vld [vmem:[%s3] sm:$0xff]
      %v2353 = vld [vmem:[%s3 + $0x8] sm:$0xff]
      %v2354 = vld [vmem:[%s3 + $0x10] sm:$0xff]
      %v2355 = vld [vmem:[%s3 + $0x18] sm:$0xff]
      %v2356 = vsel %vm612, %v2236, 0
      %2358 = vmatprep.subr.mxu0 0.0
      %2359 = vmatpush1.msra.mxu0 %v2352
      %2360 = vmatprep.subr.mxu0 0.0
      %2361 = vmatpush1.msra.mxu0 %v2353
      %2362 = vmatprep.subr.mxu0 0.0
      %2363 = vmatpush1.msra.mxu0 %v2354
      %2364 = vmatprep.subr.mxu0 0.0
      %2365 = vmatpush1.msra.mxu0 %v2355
      %2366 = vmatprep.subr.mxu0 0.0
      %2367 = vmatpush1.msra.mxu0 0.0
      %2368 = vmatprep.subr.mxu0 0.0
      %2369 = vmatpush1.msra.mxu0 0.0
      %2370 = vmatprep.subr.mxu0 0.0
      %2371 = vmatpush1.msra.mxu0 0.0
      %2372 = vmatprep.subr.mxu0 0.0
      %2373 = vmatpush1.msra.mxu0 0.0
      %2374 = vmatprep.subr.mxu0 0.0
      %2375 = vmatpush1.msra.mxu0 0.0
      %2376 = vmatprep.subr.mxu0 0.0
      %2377 = vmatpush1.msra.mxu0 0.0
      %2378 = vmatprep.subr.mxu0 0.0
      %2379 = vmatpush1.msra.mxu0 0.0
      %2380 = vmatprep.subr.mxu0 0.0
      %2381 = vmatpush1.msra.mxu0 0.0
      %2382 = vmatprep.subr.mxu0 0.0
      %2383 = vmatpush1.msra.mxu0 0.0
      %2384 = vmatprep.subr.mxu0 0.0
      %2385 = vmatpush1.msra.mxu0 0.0
      %2386 = vmatprep.subr.mxu0 0.0
      %2387 = vmatpush1.msra.mxu0 0.0
      %2388 = vmatprep.subr.mxu0 0.0
      %2389 = vmatpush1.msra.mxu0 0.0
      %2390 = vmatprep.subr.mxu0 0.0
      %2391 = vmatpush1.msra.mxu0 0.0
      %2392 = vmatprep.subr.mxu0 0.0
      %2393 = vmatpush1.msra.mxu0 0.0
      %2394 = vmatprep.subr.mxu0 0.0
      %2395 = vmatpush1.msra.mxu0 0.0
      %2396 = vmatprep.subr.mxu0 0.0
      %2397 = vmatpush1.msra.mxu0 0.0
      %2398 = vmatprep.subr.mxu0 0.0
      %2399 = vmatpush1.msra.mxu0 0.0
      %2400 = vmatprep.subr.mxu0 0.0
      %2401 = vmatpush1.msra.mxu0 0.0
      %2402 = vmatprep.subr.mxu0 0.0
      %2403 = vmatpush1.msra.mxu0 0.0
      %2404 = vmatprep.subr.mxu0 0.0
      %2405 = vmatpush1.msra.mxu0 0.0
      %2406 = vmatprep.subr.mxu0 0.0
      %2407 = vmatpush1.msra.mxu0 0.0
      %2408 = vmatprep.subr.mxu0 0.0
      %2409 = vmatpush1.msra.mxu0 0.0
      %2410 = vmatprep.subr.mxu0 0.0
      %2411 = vmatpush1.msra.mxu0 0.0
      %2412 = vmatprep.subr.mxu0 0.0
      %2413 = vmatpush1.msra.mxu0 0.0
      %2414 = vmatprep.subr.mxu0 0.0
      %2415 = vmatpush1.msra.mxu0 0.0
      %2416 = vmatprep.subr.mxu0 0.0
      %2417 = vmatpush1.msra.mxu0 0.0
      %2418 = vmatprep.subr.mxu0 0.0
      %2419 = vmatpush1.msra.mxu0 0.0
      %2420 = vmatprep.subr.mxu0 0.0
      %2421 = vmatpush1.msra.mxu0 0.0
      %2422 = vmatprep.mubr.f32.mxu0 0.0
      %2423 = vmatmul.mubr.f32.gmra.mrb[0].mxu0 %v2356
      %v2424 = vpop.f32.mrb[0].mxu0
      %v2425 = vadd.f32 0.0, %v2424
      %v2426 = vpop.f32.mrb[0].mxu0
      %2427 = vdwg.mxu0
      %v2428 = vadd.f32 %v2351, %v2425
      %v2429 = vmul.f32 %v2428, 0.5
      %v2430 = vtanh.pop %v2429
      %v2431 = vmul.f32 %v2430, 0.5
      %v2432 = vadd.f32 %v2431, 0.5
      %v2433 = vtanh.pop %v2428
      %v2434 = vsel %vm599, %v2433, %v2432
      %v2435 = vmul.f32 %v2434, %v2227
      %2437 = vrot.lane.b32.xlu0 %v2434, 64
      %v2438 = vpop.permute.xlu0 %2437
      %v2440 = vmul.f32 %v2434, %v2438
      %2442 = vrot.lane.b32.xlu0 %v2440, 32
      %v2443 = vpop.permute.xlu0 %2442
      %v2445 = vadd.f32 %v2435, %v2443
      %v2446 = vtanh.pop %v2445
      %2448 = vrot.lane.b32.xlu0 %v2446, 64
      %v2449 = vpop.permute.xlu0 %2448
      %v2451 = vmul.f32 %v2434, %v2449
      %2453 = vrot.lane.b32.xlu0 %v2451, 32
      %v2454 = vpop.permute.xlu0 %2453
      %2456 = vrot.lane.b32.xlu0 %v2345, 64
      %v2457 = vpop.permute.xlu0 %2456
      %v2459 = vsel %vm612, %v2454, %v2457
      %v2460 = vld [vmem:[%s4] sm:$0xff]
      %v2461 = vld [vmem:[%s4 + $0x8] sm:$0xff]
      %v2462 = vld [vmem:[%s4 + $0x10] sm:$0xff]
      %v2463 = vld [vmem:[%s4 + $0x18] sm:$0xff]
      %v2464 = vld [vmem:[%s4 + $0x20] sm:$0xff]
      %v2465 = vld [vmem:[%s4 + $0x28] sm:$0xff]
      %v2466 = vld [vmem:[%s4 + $0x30] sm:$0xff]
      %v2467 = vld [vmem:[%s4 + $0x38] sm:$0xff]
      %v2469 = vsel %vm723, %v2459, 0
      %2471 = vmatprep.subr.mxu0 0.0
      %2472 = vmatpush1.msra.mxu0 %v2460
      %2473 = vmatprep.subr.mxu0 0.0
      %2474 = vmatpush1.msra.mxu0 %v2461
      %2475 = vmatprep.subr.mxu0 0.0
      %2476 = vmatpush1.msra.mxu0 %v2462
      %2477 = vmatprep.subr.mxu0 0.0
      %2478 = vmatpush1.msra.mxu0 %v2463
      %2479 = vmatprep.subr.mxu0 0.0
      %2480 = vmatpush1.msra.mxu0 %v2464
      %2481 = vmatprep.subr.mxu0 0.0
      %2482 = vmatpush1.msra.mxu0 %v2465
      %2483 = vmatprep.subr.mxu0 0.0
      %2484 = vmatpush1.msra.mxu0 %v2466
      %2485 = vmatprep.subr.mxu0 0.0
      %2486 = vmatpush1.msra.mxu0 %v2467
      %2487 = vmatprep.subr.mxu0 0.0
      %2488 = vmatpush1.msra.mxu0 0.0
      %2489 = vmatprep.subr.mxu0 0.0
      %2490 = vmatpush1.msra.mxu0 0.0
      %2491 = vmatprep.subr.mxu0 0.0
      %2492 = vmatpush1.msra.mxu0 0.0
      %2493 = vmatprep.subr.mxu0 0.0
      %2494 = vmatpush1.msra.mxu0 0.0
      %2495 = vmatprep.subr.mxu0 0.0
      %2496 = vmatpush1.msra.mxu0 0.0
      %2497 = vmatprep.subr.mxu0 0.0
      %2498 = vmatpush1.msra.mxu0 0.0
      %2499 = vmatprep.subr.mxu0 0.0
      %2500 = vmatpush1.msra.mxu0 0.0
      %2501 = vmatprep.subr.mxu0 0.0
      %2502 = vmatpush1.msra.mxu0 0.0
      %2503 = vmatprep.subr.mxu0 0.0
      %2504 = vmatpush1.msra.mxu0 0.0
      %2505 = vmatprep.subr.mxu0 0.0
      %2506 = vmatpush1.msra.mxu0 0.0
      %2507 = vmatprep.subr.mxu0 0.0
      %2508 = vmatpush1.msra.mxu0 0.0
      %2509 = vmatprep.subr.mxu0 0.0
      %2510 = vmatpush1.msra.mxu0 0.0
      %2511 = vmatprep.subr.mxu0 0.0
      %2512 = vmatpush1.msra.mxu0 0.0
      %2513 = vmatprep.subr.mxu0 0.0
      %2514 = vmatpush1.msra.mxu0 0.0
      %2515 = vmatprep.subr.mxu0 0.0
      %2516 = vmatpush1.msra.mxu0 0.0
      %2517 = vmatprep.subr.mxu0 0.0
      %2518 = vmatpush1.msra.mxu0 0.0
      %2519 = vmatprep.subr.mxu0 0.0
      %2520 = vmatpush1.msra.mxu0 0.0
      %2521 = vmatprep.subr.mxu0 0.0
      %2522 = vmatpush1.msra.mxu0 0.0
      %2523 = vmatprep.subr.mxu0 0.0
      %2524 = vmatpush1.msra.mxu0 0.0
      %2525 = vmatprep.subr.mxu0 0.0
      %2526 = vmatpush1.msra.mxu0 0.0
      %2527 = vmatprep.subr.mxu0 0.0
      %2528 = vmatpush1.msra.mxu0 0.0
      %2529 = vmatprep.subr.mxu0 0.0
      %2530 = vmatpush1.msra.mxu0 0.0
      %2531 = vmatprep.subr.mxu0 0.0
      %2532 = vmatpush1.msra.mxu0 0.0
      %2533 = vmatprep.subr.mxu0 0.0
      %2534 = vmatpush1.msra.mxu0 0.0
      %2535 = vmatprep.mubr.f32.mxu0 0.0
      %2536 = vmatmul.mubr.f32.gmra.mrb[0].mxu0 %v2469
      %v2537 = vpop.f32.mrb[0].mxu0
      %v2538 = vadd.f32 %v605, %v2537
      %v2539 = vpop.f32.mrb[0].mxu0
      %2540 = vdwg.mxu0
      %v2541 = vmul.f32 %v2538, 0.5
      %v2542 = vtanh.pop %v2541
      %v2543 = vmul.f32 %v2542, 0.5
      %v2544 = vadd.f32 %v2543, 0.5
      %v2545 = vtanh.pop %v2538
      %v2546 = vsel %vm599, %v2545, %v2544
      %v2547 = vmul.f32 %v2546, %v2339
      %2549 = vrot.lane.b32.xlu0 %v2546, 64
      %v2550 = vpop.permute.xlu0 %2549
      %v2552 = vmul.f32 %v2546, %v2550
      %2554 = vrot.lane.b32.xlu0 %v2552, 32
      %v2555 = vpop.permute.xlu0 %2554
      %v2557 = vadd.f32 %v2547, %v2555
      %v2558 = vtanh.pop %v2557
      %2560 = vrot.lane.b32.xlu0 %v2558, 64
      %v2561 = vpop.permute.xlu0 %2560
      %v2563 = vmul.f32 %v2546, %v2561
      %2565 = vrot.lane.b32.xlu0 %v2563, 32
      %v2566 = vpop.permute.xlu0 %2565
      %2568 = vst.msk [vmem:[#allocation3 + $0x40] sm:$0xff] %vm612, %v2566
      %v2569 = vld [vmem:[#allocation2 + $0x48] sm:$0xff]
      %v2570 = vld [vmem:[%s3] sm:$0xff]
      %v2571 = vld [vmem:[%s3 + $0x8] sm:$0xff]
      %v2572 = vld [vmem:[%s3 + $0x10] sm:$0xff]
      %v2573 = vld [vmem:[%s3 + $0x18] sm:$0xff]
      %v2574 = vsel %vm612, %v2454, 0
      %2576 = vmatprep.subr.mxu0 0.0
      %2577 = vmatpush1.msra.mxu0 %v2570
      %2578 = vmatprep.subr.mxu0 0.0
      %2579 = vmatpush1.msra.mxu0 %v2571
      %2580 = vmatprep.subr.mxu0 0.0
      %2581 = vmatpush1.msra.mxu0 %v2572
      %2582 = vmatprep.subr.mxu0 0.0
      %2583 = vmatpush1.msra.mxu0 %v2573
      %2584 = vmatprep.subr.mxu0 0.0
      %2585 = vmatpush1.msra.mxu0 0.0
      %2586 = vmatprep.subr.mxu0 0.0
      %2587 = vmatpush1.msra.mxu0 0.0
      %2588 = vmatprep.subr.mxu0 0.0
      %2589 = vmatpush1.msra.mxu0 0.0
      %2590 = vmatprep.subr.mxu0 0.0
      %2591 = vmatpush1.msra.mxu0 0.0
      %2592 = vmatprep.subr.mxu0 0.0
      %2593 = vmatpush1.msra.mxu0 0.0
      %2594 = vmatprep.subr.mxu0 0.0
      %2595 = vmatpush1.msra.mxu0 0.0
      %2596 = vmatprep.subr.mxu0 0.0
      %2597 = vmatpush1.msra.mxu0 0.0
      %2598 = vmatprep.subr.mxu0 0.0
      %2599 = vmatpush1.msra.mxu0 0.0
      %2600 = vmatprep.subr.mxu0 0.0
      %2601 = vmatpush1.msra.mxu0 0.0
      %2602 = vmatprep.subr.mxu0 0.0
      %2603 = vmatpush1.msra.mxu0 0.0
      %2604 = vmatprep.subr.mxu0 0.0
      %2605 = vmatpush1.msra.mxu0 0.0
      %2606 = vmatprep.subr.mxu0 0.0
      %2607 = vmatpush1.msra.mxu0 0.0
      %2608 = vmatprep.subr.mxu0 0.0
      %2609 = vmatpush1.msra.mxu0 0.0
      %2610 = vmatprep.subr.mxu0 0.0
      %2611 = vmatpush1.msra.mxu0 0.0
      %2612 = vmatprep.subr.mxu0 0.0
      %2613 = vmatpush1.msra.mxu0 0.0
      %2614 = vmatprep.subr.mxu0 0.0
      %2615 = vmatpush1.msra.mxu0 0.0
      %2616 = vmatprep.subr.mxu0 0.0
      %2617 = vmatpush1.msra.mxu0 0.0
      %2618 = vmatprep.subr.mxu0 0.0
      %2619 = vmatpush1.msra.mxu0 0.0
      %2620 = vmatprep.subr.mxu0 0.0
      %2621 = vmatpush1.msra.mxu0 0.0
      %2622 = vmatprep.subr.mxu0 0.0
      %2623 = vmatpush1.msra.mxu0 0.0
      %2624 = vmatprep.subr.mxu0 0.0
      %2625 = vmatpush1.msra.mxu0 0.0
      %2626 = vmatprep.subr.mxu0 0.0
      %2627 = vmatpush1.msra.mxu0 0.0
      %2628 = vmatprep.subr.mxu0 0.0
      %2629 = vmatpush1.msra.mxu0 0.0
      %2630 = vmatprep.subr.mxu0 0.0
      %2631 = vmatpush1.msra.mxu0 0.0
      %2632 = vmatprep.subr.mxu0 0.0
      %2633 = vmatpush1.msra.mxu0 0.0
      %2634 = vmatprep.subr.mxu0 0.0
      %2635 = vmatpush1.msra.mxu0 0.0
      %2636 = vmatprep.subr.mxu0 0.0
      %2637 = vmatpush1.msra.mxu0 0.0
      %2638 = vmatprep.subr.mxu0 0.0
      %2639 = vmatpush1.msra.mxu0 0.0
      %2640 = vmatprep.mubr.f32.mxu0 0.0
      %2641 = vmatmul.mubr.f32.gmra.mrb[0].mxu0 %v2574
      %v2642 = vpop.f32.mrb[0].mxu0
      %v2643 = vadd.f32 0.0, %v2642
      %v2644 = vpop.f32.mrb[0].mxu0
      %2645 = vdwg.mxu0
      %v2646 = vadd.f32 %v2569, %v2643
      %v2647 = vmul.f32 %v2646, 0.5
      %v2648 = vtanh.pop %v2647
      %v2649 = vmul.f32 %v2648, 0.5
      %v2650 = vadd.f32 %v2649, 0.5
      %v2651 = vtanh.pop %v2646
      %v2652 = vsel %vm599, %v2651, %v2650
      %v2653 = vmul.f32 %v2652, %v2445
      %2655 = vrot.lane.b32.xlu0 %v2652, 64
      %v2656 = vpop.permute.xlu0 %2655
      %v2658 = vmul.f32 %v2652, %v2656
      %2660 = vrot.lane.b32.xlu0 %v2658, 32
      %v2661 = vpop.permute.xlu0 %2660
      %v2663 = vadd.f32 %v2653, %v2661
      %v2664 = vtanh.pop %v2663
      %2666 = vrot.lane.b32.xlu0 %v2664, 64
      %v2667 = vpop.permute.xlu0 %2666
      %v2669 = vmul.f32 %v2652, %v2667
      %2671 = vrot.lane.b32.xlu0 %v2669, 32
      %v2672 = vpop.permute.xlu0 %2671
      %2674 = vrot.lane.b32.xlu0 %v2563, 64
      %v2675 = vpop.permute.xlu0 %2674
      %v2677 = vsel %vm612, %v2672, %v2675
      %v2678 = vld [vmem:[%s4] sm:$0xff]
      %v2679 = vld [vmem:[%s4 + $0x8] sm:$0xff]
      %v2680 = vld [vmem:[%s4 + $0x10] sm:$0xff]
      %v2681 = vld [vmem:[%s4 + $0x18] sm:$0xff]
      %v2682 = vld [vmem:[%s4 + $0x20] sm:$0xff]
      %v2683 = vld [vmem:[%s4 + $0x28] sm:$0xff]
      %v2684 = vld [vmem:[%s4 + $0x30] sm:$0xff]
      %v2685 = vld [vmem:[%s4 + $0x38] sm:$0xff]
      %v2687 = vsel %vm723, %v2677, 0
      %2689 = vmatprep.subr.mxu0 0.0
      %2690 = vmatpush1.msra.mxu0 %v2678
      %2691 = vmatprep.subr.mxu0 0.0
      %2692 = vmatpush1.msra.mxu0 %v2679
      %2693 = vmatprep.subr.mxu0 0.0
      %2694 = vmatpush1.msra.mxu0 %v2680
      %2695 = vmatprep.subr.mxu0 0.0
      %2696 = vmatpush1.msra.mxu0 %v2681
      %2697 = vmatprep.subr.mxu0 0.0
      %2698 = vmatpush1.msra.mxu0 %v2682
      %2699 = vmatprep.subr.mxu0 0.0
      %2700 = vmatpush1.msra.mxu0 %v2683
      %2701 = vmatprep.subr.mxu0 0.0
      %2702 = vmatpush1.msra.mxu0 %v2684
      %2703 = vmatprep.subr.mxu0 0.0
      %2704 = vmatpush1.msra.mxu0 %v2685
      %2705 = vmatprep.subr.mxu0 0.0
      %2706 = vmatpush1.msra.mxu0 0.0
      %2707 = vmatprep.subr.mxu0 0.0
      %2708 = vmatpush1.msra.mxu0 0.0
      %2709 = vmatprep.subr.mxu0 0.0
      %2710 = vmatpush1.msra.mxu0 0.0
      %2711 = vmatprep.subr.mxu0 0.0
      %2712 = vmatpush1.msra.mxu0 0.0
      %2713 = vmatprep.subr.mxu0 0.0
      %2714 = vmatpush1.msra.mxu0 0.0
      %2715 = vmatprep.subr.mxu0 0.0
      %2716 = vmatpush1.msra.mxu0 0.0
      %2717 = vmatprep.subr.mxu0 0.0
      %2718 = vmatpush1.msra.mxu0 0.0
      %2719 = vmatprep.subr.mxu0 0.0
      %2720 = vmatpush1.msra.mxu0 0.0
      %2721 = vmatprep.subr.mxu0 0.0
      %2722 = vmatpush1.msra.mxu0 0.0
      %2723 = vmatprep.subr.mxu0 0.0
      %2724 = vmatpush1.msra.mxu0 0.0
      %2725 = vmatprep.subr.mxu0 0.0
      %2726 = vmatpush1.msra.mxu0 0.0
      %2727 = vmatprep.subr.mxu0 0.0
      %2728 = vmatpush1.msra.mxu0 0.0
      %2729 = vmatprep.subr.mxu0 0.0
      %2730 = vmatpush1.msra.mxu0 0.0
      %2731 = vmatprep.subr.mxu0 0.0
      %2732 = vmatpush1.msra.mxu0 0.0
      %2733 = vmatprep.subr.mxu0 0.0
      %2734 = vmatpush1.msra.mxu0 0.0
      %2735 = vmatprep.subr.mxu0 0.0
      %2736 = vmatpush1.msra.mxu0 0.0
      %2737 = vmatprep.subr.mxu0 0.0
      %2738 = vmatpush1.msra.mxu0 0.0
      %2739 = vmatprep.subr.mxu0 0.0
      %2740 = vmatpush1.msra.mxu0 0.0
      %2741 = vmatprep.subr.mxu0 0.0
      %2742 = vmatpush1.msra.mxu0 0.0
      %2743 = vmatprep.subr.mxu0 0.0
      %2744 = vmatpush1.msra.mxu0 0.0
      %2745 = vmatprep.subr.mxu0 0.0
      %2746 = vmatpush1.msra.mxu0 0.0
      %2747 = vmatprep.subr.mxu0 0.0
      %2748 = vmatpush1.msra.mxu0 0.0
      %2749 = vmatprep.subr.mxu0 0.0
      %2750 = vmatpush1.msra.mxu0 0.0
      %2751 = vmatprep.subr.mxu0 0.0
      %2752 = vmatpush1.msra.mxu0 0.0
      %2753 = vmatprep.mubr.f32.mxu0 0.0
      %2754 = vmatmul.mubr.f32.gmra.mrb[0].mxu0 %v2687
      %v2755 = vpop.f32.mrb[0].mxu0
      %v2756 = vadd.f32 %v605, %v2755
      %v2757 = vpop.f32.mrb[0].mxu0
      %2758 = vdwg.mxu0
      %v2759 = vmul.f32 %v2756, 0.5
      %v2760 = vtanh.pop %v2759
      %v2761 = vmul.f32 %v2760, 0.5
      %v2762 = vadd.f32 %v2761, 0.5
      %v2763 = vtanh.pop %v2756
      %v2764 = vsel %vm599, %v2763, %v2762
      %v2765 = vmul.f32 %v2764, %v2557
      %2767 = vrot.lane.b32.xlu0 %v2764, 64
      %v2768 = vpop.permute.xlu0 %2767
      %v2770 = vmul.f32 %v2764, %v2768
      %2772 = vrot.lane.b32.xlu0 %v2770, 32
      %v2773 = vpop.permute.xlu0 %2772
      %v2775 = vadd.f32 %v2765, %v2773
      %v2776 = vtanh.pop %v2775
      %2778 = vrot.lane.b32.xlu0 %v2776, 64
      %v2779 = vpop.permute.xlu0 %2778
      %v2781 = vmul.f32 %v2764, %v2779
      %2783 = vrot.lane.b32.xlu0 %v2781, 32
      %v2784 = vpop.permute.xlu0 %2783
      %2786 = vst.msk [vmem:[#allocation3 + $0x48] sm:$0xff] %vm612, %v2784
      %v2787 = vld [vmem:[#allocation2 + $0x50] sm:$0xff]
      %v2788 = vld [vmem:[%s3] sm:$0xff]
      %v2789 = vld [vmem:[%s3 + $0x8] sm:$0xff]
      %v2790 = vld [vmem:[%s3 + $0x10] sm:$0xff]
      %v2791 = vld [vmem:[%s3 + $0x18] sm:$0xff]
      %v2792 = vsel %vm612, %v2672, 0
      %2794 = vmatprep.subr.mxu0 0.0
      %2795 = vmatpush1.msra.mxu0 %v2788
      %2796 = vmatprep.subr.mxu0 0.0
      %2797 = vmatpush1.msra.mxu0 %v2789
      %2798 = vmatprep.subr.mxu0 0.0
      %2799 = vmatpush1.msra.mxu0 %v2790
      %2800 = vmatprep.subr.mxu0 0.0
      %2801 = vmatpush1.msra.mxu0 %v2791
      %2802 = vmatprep.subr.mxu0 0.0
      %2803 = vmatpush1.msra.mxu0 0.0
      %2804 = vmatprep.subr.mxu0 0.0
      %2805 = vmatpush1.msra.mxu0 0.0
      %2806 = vmatprep.subr.mxu0 0.0
      %2807 = vmatpush1.msra.mxu0 0.0
      %2808 = vmatprep.subr.mxu0 0.0
      %2809 = vmatpush1.msra.mxu0 0.0
      %2810 = vmatprep.subr.mxu0 0.0
      %2811 = vmatpush1.msra.mxu0 0.0
      %2812 = vmatprep.subr.mxu0 0.0
      %2813 = vmatpush1.msra.mxu0 0.0
      %2814 = vmatprep.subr.mxu0 0.0
      %2815 = vmatpush1.msra.mxu0 0.0
      %2816 = vmatprep.subr.mxu0 0.0
      %2817 = vmatpush1.msra.mxu0 0.0
      %2818 = vmatprep.subr.mxu0 0.0
      %2819 = vmatpush1.msra.mxu0 0.0
      %2820 = vmatprep.subr.mxu0 0.0
      %2821 = vmatpush1.msra.mxu0 0.0
      %2822 = vmatprep.subr.mxu0 0.0
      %2823 = vmatpush1.msra.mxu0 0.0
      %2824 = vmatprep.subr.mxu0 0.0
      %2825 = vmatpush1.msra.mxu0 0.0
      %2826 = vmatprep.subr.mxu0 0.0
      %2827 = vmatpush1.msra.mxu0 0.0
      %2828 = vmatprep.subr.mxu0 0.0
      %2829 = vmatpush1.msra.mxu0 0.0
      %2830 = vmatprep.subr.mxu0 0.0
      %2831 = vmatpush1.msra.mxu0 0.0
      %2832 = vmatprep.subr.mxu0 0.0
      %2833 = vmatpush1.msra.mxu0 0.0
      %2834 = vmatprep.subr.mxu0 0.0
      %2835 = vmatpush1.msra.mxu0 0.0
      %2836 = vmatprep.subr.mxu0 0.0
      %2837 = vmatpush1.msra.mxu0 0.0
      %2838 = vmatprep.subr.mxu0 0.0
      %2839 = vmatpush1.msra.mxu0 0.0
      %2840 = vmatprep.subr.mxu0 0.0
      %2841 = vmatpush1.msra.mxu0 0.0
      %2842 = vmatprep.subr.mxu0 0.0
      %2843 = vmatpush1.msra.mxu0 0.0
      %2844 = vmatprep.subr.mxu0 0.0
      %2845 = vmatpush1.msra.mxu0 0.0
      %2846 = vmatprep.subr.mxu0 0.0
      %2847 = vmatpush1.msra.mxu0 0.0
      %2848 = vmatprep.subr.mxu0 0.0
      %2849 = vmatpush1.msra.mxu0 0.0
      %2850 = vmatprep.subr.mxu0 0.0
      %2851 = vmatpush1.msra.mxu0 0.0
      %2852 = vmatprep.subr.mxu0 0.0
      %2853 = vmatpush1.msra.mxu0 0.0
      %2854 = vmatprep.subr.mxu0 0.0
      %2855 = vmatpush1.msra.mxu0 0.0
      %2856 = vmatprep.subr.mxu0 0.0
      %2857 = vmatpush1.msra.mxu0 0.0
      %2858 = vmatprep.mubr.f32.mxu0 0.0
      %2859 = vmatmul.mubr.f32.gmra.mrb[0].mxu0 %v2792
      %v2860 = vpop.f32.mrb[0].mxu0
      %v2861 = vadd.f32 0.0, %v2860
      %v2862 = vpop.f32.mrb[0].mxu0
      %2863 = vdwg.mxu0
      %v2864 = vadd.f32 %v2787, %v2861
      %v2865 = vmul.f32 %v2864, 0.5
      %v2866 = vtanh.pop %v2865
      %v2867 = vmul.f32 %v2866, 0.5
      %v2868 = vadd.f32 %v2867, 0.5
      %v2869 = vtanh.pop %v2864
      %v2870 = vsel %vm599, %v2869, %v2868
      %v2871 = vmul.f32 %v2870, %v2663
      %2873 = vrot.lane.b32.xlu0 %v2870, 64
      %v2874 = vpop.permute.xlu0 %2873
      %v2876 = vmul.f32 %v2870, %v2874
      %2878 = vrot.lane.b32.xlu0 %v2876, 32
      %v2879 = vpop.permute.xlu0 %2878
      %v2881 = vadd.f32 %v2871, %v2879
      %v2882 = vtanh.pop %v2881
      %2884 = vrot.lane.b32.xlu0 %v2882, 64
      %v2885 = vpop.permute.xlu0 %2884
      %v2887 = vmul.f32 %v2870, %v2885
      %2889 = vrot.lane.b32.xlu0 %v2887, 32
      %v2890 = vpop.permute.xlu0 %2889
      %2892 = vrot.lane.b32.xlu0 %v2781, 64
      %v2893 = vpop.permute.xlu0 %2892
      %v2895 = vsel %vm612, %v2890, %v2893
      %v2896 = vld [vmem:[%s4] sm:$0xff]
      %v2897 = vld [vmem:[%s4 + $0x8] sm:$0xff]
      %v2898 = vld [vmem:[%s4 + $0x10] sm:$0xff]
      %v2899 = vld [vmem:[%s4 + $0x18] sm:$0xff]
      %v2900 = vld [vmem:[%s4 + $0x20] sm:$0xff]
      %v2901 = vld [vmem:[%s4 + $0x28] sm:$0xff]
      %v2902 = vld [vmem:[%s4 + $0x30] sm:$0xff]
      %v2903 = vld [vmem:[%s4 + $0x38] sm:$0xff]
      %v2905 = vsel %vm723, %v2895, 0
      %2907 = vmatprep.subr.mxu0 0.0
      %2908 = vmatpush1.msra.mxu0 %v2896
      %2909 = vmatprep.subr.mxu0 0.0
      %2910 = vmatpush1.msra.mxu0 %v2897
      %2911 = vmatprep.subr.mxu0 0.0
      %2912 = vmatpush1.msra.mxu0 %v2898
      %2913 = vmatprep.subr.mxu0 0.0
      %2914 = vmatpush1.msra.mxu0 %v2899
      %2915 = vmatprep.subr.mxu0 0.0
      %2916 = vmatpush1.msra.mxu0 %v2900
      %2917 = vmatprep.subr.mxu0 0.0
      %2918 = vmatpush1.msra.mxu0 %v2901
      %2919 = vmatprep.subr.mxu0 0.0
      %2920 = vmatpush1.msra.mxu0 %v2902
      %2921 = vmatprep.subr.mxu0 0.0
      %2922 = vmatpush1.msra.mxu0 %v2903
      %2923 = vmatprep.subr.mxu0 0.0
      %2924 = vmatpush1.msra.mxu0 0.0
      %2925 = vmatprep.subr.mxu0 0.0
      %2926 = vmatpush1.msra.mxu0 0.0
      %2927 = vmatprep.subr.mxu0 0.0
      %2928 = vmatpush1.msra.mxu0 0.0
      %2929 = vmatprep.subr.mxu0 0.0
      %2930 = vmatpush1.msra.mxu0 0.0
      %2931 = vmatprep.subr.mxu0 0.0
      %2932 = vmatpush1.msra.mxu0 0.0
      %2933 = vmatprep.subr.mxu0 0.0
      %2934 = vmatpush1.msra.mxu0 0.0
      %2935 = vmatprep.subr.mxu0 0.0
      %2936 = vmatpush1.msra.mxu0 0.0
      %2937 = vmatprep.subr.mxu0 0.0
      %2938 = vmatpush1.msra.mxu0 0.0
      %2939 = vmatprep.subr.mxu0 0.0
      %2940 = vmatpush1.msra.mxu0 0.0
      %2941 = vmatprep.subr.mxu0 0.0
      %2942 = vmatpush1.msra.mxu0 0.0
      %2943 = vmatprep.subr.mxu0 0.0
      %2944 = vmatpush1.msra.mxu0 0.0
      %2945 = vmatprep.subr.mxu0 0.0
      %2946 = vmatpush1.msra.mxu0 0.0
      %2947 = vmatprep.subr.mxu0 0.0
      %2948 = vmatpush1.msra.mxu0 0.0
      %2949 = vmatprep.subr.mxu0 0.0
      %2950 = vmatpush1.msra.mxu0 0.0
      %2951 = vmatprep.subr.mxu0 0.0
      %2952 = vmatpush1.msra.mxu0 0.0
      %2953 = vmatprep.subr.mxu0 0.0
      %2954 = vmatpush1.msra.mxu0 0.0
      %2955 = vmatprep.subr.mxu0 0.0
      %2956 = vmatpush1.msra.mxu0 0.0
      %2957 = vmatprep.subr.mxu0 0.0
      %2958 = vmatpush1.msra.mxu0 0.0
      %2959 = vmatprep.subr.mxu0 0.0
      %2960 = vmatpush1.msra.mxu0 0.0
      %2961 = vmatprep.subr.mxu0 0.0
      %2962 = vmatpush1.msra.mxu0 0.0
      %2963 = vmatprep.subr.mxu0 0.0
      %2964 = vmatpush1.msra.mxu0 0.0
      %2965 = vmatprep.subr.mxu0 0.0
      %2966 = vmatpush1.msra.mxu0 0.0
      %2967 = vmatprep.subr.mxu0 0.0
      %2968 = vmatpush1.msra.mxu0 0.0
      %2969 = vmatprep.subr.mxu0 0.0
      %2970 = vmatpush1.msra.mxu0 0.0
      %2971 = vmatprep.mubr.f32.mxu0 0.0
      %2972 = vmatmul.mubr.f32.gmra.mrb[0].mxu0 %v2905
      %v2973 = vpop.f32.mrb[0].mxu0
      %v2974 = vadd.f32 %v605, %v2973
      %v2975 = vpop.f32.mrb[0].mxu0
      %2976 = vdwg.mxu0
      %v2977 = vmul.f32 %v2974, 0.5
      %v2978 = vtanh.pop %v2977
      %v2979 = vmul.f32 %v2978, 0.5
      %v2980 = vadd.f32 %v2979, 0.5
      %v2981 = vtanh.pop %v2974
      %v2982 = vsel %vm599, %v2981, %v2980
      %v2983 = vmul.f32 %v2982, %v2775
      %2985 = vrot.lane.b32.xlu0 %v2982, 64
      %v2986 = vpop.permute.xlu0 %2985
      %v2988 = vmul.f32 %v2982, %v2986
      %2990 = vrot.lane.b32.xlu0 %v2988, 32
      %v2991 = vpop.permute.xlu0 %2990
      %v2993 = vadd.f32 %v2983, %v2991
      %v2994 = vtanh.pop %v2993
      %2996 = vrot.lane.b32.xlu0 %v2994, 64
      %v2997 = vpop.permute.xlu0 %2996
      %v2999 = vmul.f32 %v2982, %v2997
      %3001 = vrot.lane.b32.xlu0 %v2999, 32
      %v3002 = vpop.permute.xlu0 %3001
      %3004 = vst.msk [vmem:[#allocation3 + $0x50] sm:$0xff] %vm612, %v3002
      %v3005 = vld [vmem:[#allocation2 + $0x58] sm:$0xff]
      %v3006 = vld [vmem:[%s3] sm:$0xff]
      %v3007 = vld [vmem:[%s3 + $0x8] sm:$0xff]
      %v3008 = vld [vmem:[%s3 + $0x10] sm:$0xff]
      %v3009 = vld [vmem:[%s3 + $0x18] sm:$0xff]
      %v3010 = vsel %vm612, %v2890, 0
      %3012 = vmatprep.subr.mxu0 0.0
      %3013 = vmatpush1.msra.mxu0 %v3006
      %3014 = vmatprep.subr.mxu0 0.0
      %3015 = vmatpush1.msra.mxu0 %v3007
      %3016 = vmatprep.subr.mxu0 0.0
      %3017 = vmatpush1.msra.mxu0 %v3008
      %3018 = vmatprep.subr.mxu0 0.0
      %3019 = vmatpush1.msra.mxu0 %v3009
      %3020 = vmatprep.subr.mxu0 0.0
      %3021 = vmatpush1.msra.mxu0 0.0
      %3022 = vmatprep.subr.mxu0 0.0
      %3023 = vmatpush1.msra.mxu0 0.0
      %3024 = vmatprep.subr.mxu0 0.0
      %3025 = vmatpush1.msra.mxu0 0.0
      %3026 = vmatprep.subr.mxu0 0.0
      %3027 = vmatpush1.msra.mxu0 0.0
      %3028 = vmatprep.subr.mxu0 0.0
      %3029 = vmatpush1.msra.mxu0 0.0
      %3030 = vmatprep.subr.mxu0 0.0
      %3031 = vmatpush1.msra.mxu0 0.0
      %3032 = vmatprep.subr.mxu0 0.0
      %3033 = vmatpush1.msra.mxu0 0.0
      %3034 = vmatprep.subr.mxu0 0.0
      %3035 = vmatpush1.msra.mxu0 0.0
      %3036 = vmatprep.subr.mxu0 0.0
      %3037 = vmatpush1.msra.mxu0 0.0
      %3038 = vmatprep.subr.mxu0 0.0
      %3039 = vmatpush1.msra.mxu0 0.0
      %3040 = vmatprep.subr.mxu0 0.0
      %3041 = vmatpush1.msra.mxu0 0.0
      %3042 = vmatprep.subr.mxu0 0.0
      %3043 = vmatpush1.msra.mxu0 0.0
      %3044 = vmatprep.subr.mxu0 0.0
      %3045 = vmatpush1.msra.mxu0 0.0
      %3046 = vmatprep.subr.mxu0 0.0
      %3047 = vmatpush1.msra.mxu0 0.0
      %3048 = vmatprep.subr.mxu0 0.0
      %3049 = vmatpush1.msra.mxu0 0.0
      %3050 = vmatprep.subr.mxu0 0.0
      %3051 = vmatpush1.msra.mxu0 0.0
      %3052 = vmatprep.subr.mxu0 0.0
      %3053 = vmatpush1.msra.mxu0 0.0
      %3054 = vmatprep.subr.mxu0 0.0
      %3055 = vmatpush1.msra.mxu0 0.0
      %3056 = vmatprep.subr.mxu0 0.0
      %3057 = vmatpush1.msra.mxu0 0.0
      %3058 = vmatprep.subr.mxu0 0.0
      %3059 = vmatpush1.msra.mxu0 0.0
      %3060 = vmatprep.subr.mxu0 0.0
      %3061 = vmatpush1.msra.mxu0 0.0
      %3062 = vmatprep.subr.mxu0 0.0
      %3063 = vmatpush1.msra.mxu0 0.0
      %3064 = vmatprep.subr.mxu0 0.0
      %3065 = vmatpush1.msra.mxu0 0.0
      %3066 = vmatprep.subr.mxu0 0.0
      %3067 = vmatpush1.msra.mxu0 0.0
      %3068 = vmatprep.subr.mxu0 0.0
      %3069 = vmatpush1.msra.mxu0 0.0
      %3070 = vmatprep.subr.mxu0 0.0
      %3071 = vmatpush1.msra.mxu0 0.0
      %3072 = vmatprep.subr.mxu0 0.0
      %3073 = vmatpush1.msra.mxu0 0.0
      %3074 = vmatprep.subr.mxu0 0.0
      %3075 = vmatpush1.msra.mxu0 0.0
      %3076 = vmatprep.mubr.f32.mxu0 0.0
      %3077 = vmatmul.mubr.f32.gmra.mrb[0].mxu0 %v3010
      %v3078 = vpop.f32.mrb[0].mxu0
      %v3079 = vadd.f32 0.0, %v3078
      %v3080 = vpop.f32.mrb[0].mxu0
      %3081 = vdwg.mxu0
      %v3082 = vadd.f32 %v3005, %v3079
      %v3083 = vmul.f32 %v3082, 0.5
      %v3084 = vtanh.pop %v3083
      %v3085 = vmul.f32 %v3084, 0.5
      %v3086 = vadd.f32 %v3085, 0.5
      %v3087 = vtanh.pop %v3082
      %v3088 = vsel %vm599, %v3087, %v3086
      %v3089 = vmul.f32 %v3088, %v2881
      %3091 = vrot.lane.b32.xlu0 %v3088, 64
      %v3092 = vpop.permute.xlu0 %3091
      %v3094 = vmul.f32 %v3088, %v3092
      %3096 = vrot.lane.b32.xlu0 %v3094, 32
      %v3097 = vpop.permute.xlu0 %3096
      %v3099 = vadd.f32 %v3089, %v3097
      %v3100 = vtanh.pop %v3099
      %3102 = vrot.lane.b32.xlu0 %v3100, 64
      %v3103 = vpop.permute.xlu0 %3102
      %v3105 = vmul.f32 %v3088, %v3103
      %3107 = vrot.lane.b32.xlu0 %v3105, 32
      %v3108 = vpop.permute.xlu0 %3107
      %3110 = vrot.lane.b32.xlu0 %v2999, 64
      %v3111 = vpop.permute.xlu0 %3110
      %v3113 = vsel %vm612, %v3108, %v3111
      %v3114 = vld [vmem:[%s4] sm:$0xff]
      %v3115 = vld [vmem:[%s4 + $0x8] sm:$0xff]
      %v3116 = vld [vmem:[%s4 + $0x10] sm:$0xff]
      %v3117 = vld [vmem:[%s4 + $0x18] sm:$0xff]
      %v3118 = vld [vmem:[%s4 + $0x20] sm:$0xff]
      %v3119 = vld [vmem:[%s4 + $0x28] sm:$0xff]
      %v3120 = vld [vmem:[%s4 + $0x30] sm:$0xff]
      %v3121 = vld [vmem:[%s4 + $0x38] sm:$0xff]
      %v3123 = vsel %vm723, %v3113, 0
      %3125 = vmatprep.subr.mxu0 0.0
      %3126 = vmatpush1.msra.mxu0 %v3114
      %3127 = vmatprep.subr.mxu0 0.0
      %3128 = vmatpush1.msra.mxu0 %v3115
      %3129 = vmatprep.subr.mxu0 0.0
      %3130 = vmatpush1.msra.mxu0 %v3116
      %3131 = vmatprep.subr.mxu0 0.0
      %3132 = vmatpush1.msra.mxu0 %v3117
      %3133 = vmatprep.subr.mxu0 0.0
      %3134 = vmatpush1.msra.mxu0 %v3118
      %3135 = vmatprep.subr.mxu0 0.0
      %3136 = vmatpush1.msra.mxu0 %v3119
      %3137 = vmatprep.subr.mxu0 0.0
      %3138 = vmatpush1.msra.mxu0 %v3120
      %3139 = vmatprep.subr.mxu0 0.0
      %3140 = vmatpush1.msra.mxu0 %v3121
      %3141 = vmatprep.subr.mxu0 0.0
      %3142 = vmatpush1.msra.mxu0 0.0
      %3143 = vmatprep.subr.mxu0 0.0
      %3144 = vmatpush1.msra.mxu0 0.0
      %3145 = vmatprep.subr.mxu0 0.0
      %3146 = vmatpush1.msra.mxu0 0.0
      %3147 = vmatprep.subr.mxu0 0.0
      %3148 = vmatpush1.msra.mxu0 0.0
      %3149 = vmatprep.subr.mxu0 0.0
      %3150 = vmatpush1.msra.mxu0 0.0
      %3151 = vmatprep.subr.mxu0 0.0
      %3152 = vmatpush1.msra.mxu0 0.0
      %3153 = vmatprep.subr.mxu0 0.0
      %3154 = vmatpush1.msra.mxu0 0.0
      %3155 = vmatprep.subr.mxu0 0.0
      %3156 = vmatpush1.msra.mxu0 0.0
      %3157 = vmatprep.subr.mxu0 0.0
      %3158 = vmatpush1.msra.mxu0 0.0
      %3159 = vmatprep.subr.mxu0 0.0
      %3160 = vmatpush1.msra.mxu0 0.0
      %3161 = vmatprep.subr.mxu0 0.0
      %3162 = vmatpush1.msra.mxu0 0.0
      %3163 = vmatprep.subr.mxu0 0.0
      %3164 = vmatpush1.msra.mxu0 0.0
      %3165 = vmatprep.subr.mxu0 0.0
      %3166 = vmatpush1.msra.mxu0 0.0
      %3167 = vmatprep.subr.mxu0 0.0
      %3168 = vmatpush1.msra.mxu0 0.0
      %3169 = vmatprep.subr.mxu0 0.0
      %3170 = vmatpush1.msra.mxu0 0.0
      %3171 = vmatprep.subr.mxu0 0.0
      %3172 = vmatpush1.msra.mxu0 0.0
      %3173 = vmatprep.subr.mxu0 0.0
      %3174 = vmatpush1.msra.mxu0 0.0
      %3175 = vmatprep.subr.mxu0 0.0
      %3176 = vmatpush1.msra.mxu0 0.0
      %3177 = vmatprep.subr.mxu0 0.0
      %3178 = vmatpush1.msra.mxu0 0.0
      %3179 = vmatprep.subr.mxu0 0.0
      %3180 = vmatpush1.msra.mxu0 0.0
      %3181 = vmatprep.subr.mxu0 0.0
      %3182 = vmatpush1.msra.mxu0 0.0
      %3183 = vmatprep.subr.mxu0 0.0
      %3184 = vmatpush1.msra.mxu0 0.0
      %3185 = vmatprep.subr.mxu0 0.0
      %3186 = vmatpush1.msra.mxu0 0.0
      %3187 = vmatprep.subr.mxu0 0.0
      %3188 = vmatpush1.msra.mxu0 0.0
      %3189 = vmatprep.mubr.f32.mxu0 0.0
      %3190 = vmatmul.mubr.f32.gmra.mrb[0].mxu0 %v3123
      %v3191 = vpop.f32.mrb[0].mxu0
      %v3192 = vadd.f32 %v605, %v3191
      %v3193 = vpop.f32.mrb[0].mxu0
      %3194 = vdwg.mxu0
      %v3195 = vmul.f32 %v3192, 0.5
      %v3196 = vtanh.pop %v3195
      %v3197 = vmul.f32 %v3196, 0.5
      %v3198 = vadd.f32 %v3197, 0.5
      %v3199 = vtanh.pop %v3192
      %v3200 = vsel %vm599, %v3199, %v3198
      %v3201 = vmul.f32 %v3200, %v2993
      %3203 = vrot.lane.b32.xlu0 %v3200, 64
      %v3204 = vpop.permute.xlu0 %3203
      %v3206 = vmul.f32 %v3200, %v3204
      %3208 = vrot.lane.b32.xlu0 %v3206, 32
      %v3209 = vpop.permute.xlu0 %3208
      %v3211 = vadd.f32 %v3201, %v3209
      %v3212 = vtanh.pop %v3211
      %3214 = vrot.lane.b32.xlu0 %v3212, 64
      %v3215 = vpop.permute.xlu0 %3214
      %v3217 = vmul.f32 %v3200, %v3215
      %3219 = vrot.lane.b32.xlu0 %v3217, 32
      %v3220 = vpop.permute.xlu0 %3219
      %3222 = vst.msk [vmem:[#allocation3 + $0x58] sm:$0xff] %vm612, %v3220
      %v3223 = vld [vmem:[#allocation2 + $0x60] sm:$0xff]
      %v3224 = vld [vmem:[%s3] sm:$0xff]
      %v3225 = vld [vmem:[%s3 + $0x8] sm:$0xff]
      %v3226 = vld [vmem:[%s3 + $0x10] sm:$0xff]
      %v3227 = vld [vmem:[%s3 + $0x18] sm:$0xff]
      %v3228 = vsel %vm612, %v3108, 0
      %3230 = vmatprep.subr.mxu0 0.0
      %3231 = vmatpush1.msra.mxu0 %v3224
      %3232 = vmatprep.subr.mxu0 0.0
      %3233 = vmatpush1.msra.mxu0 %v3225
      %3234 = vmatprep.subr.mxu0 0.0
      %3235 = vmatpush1.msra.mxu0 %v3226
      %3236 = vmatprep.subr.mxu0 0.0
      %3237 = vmatpush1.msra.mxu0 %v3227
      %3238 = vmatprep.subr.mxu0 0.0
      %3239 = vmatpush1.msra.mxu0 0.0
      %3240 = vmatprep.subr.mxu0 0.0
      %3241 = vmatpush1.msra.mxu0 0.0
      %3242 = vmatprep.subr.mxu0 0.0
      %3243 = vmatpush1.msra.mxu0 0.0
      %3244 = vmatprep.subr.mxu0 0.0
      %3245 = vmatpush1.msra.mxu0 0.0
      %3246 = vmatprep.subr.mxu0 0.0
      %3247 = vmatpush1.msra.mxu0 0.0
      %3248 = vmatprep.subr.mxu0 0.0
      %3249 = vmatpush1.msra.mxu0 0.0
      %3250 = vmatprep.subr.mxu0 0.0
      %3251 = vmatpush1.msra.mxu0 0.0
      %3252 = vmatprep.subr.mxu0 0.0
      %3253 = vmatpush1.msra.mxu0 0.0
      %3254 = vmatprep.subr.mxu0 0.0
      %3255 = vmatpush1.msra.mxu0 0.0
      %3256 = vmatprep.subr.mxu0 0.0
      %3257 = vmatpush1.msra.mxu0 0.0
      %3258 = vmatprep.subr.mxu0 0.0
      %3259 = vmatpush1.msra.mxu0 0.0
      %3260 = vmatprep.subr.mxu0 0.0
      %3261 = vmatpush1.msra.mxu0 0.0
      %3262 = vmatprep.subr.mxu0 0.0
      %3263 = vmatpush1.msra.mxu0 0.0
      %3264 = vmatprep.subr.mxu0 0.0
      %3265 = vmatpush1.msra.mxu0 0.0
      %3266 = vmatprep.subr.mxu0 0.0
      %3267 = vmatpush1.msra.mxu0 0.0
      %3268 = vmatprep.subr.mxu0 0.0
      %3269 = vmatpush1.msra.mxu0 0.0
      %3270 = vmatprep.subr.mxu0 0.0
      %3271 = vmatpush1.msra.mxu0 0.0
      %3272 = vmatprep.subr.mxu0 0.0
      %3273 = vmatpush1.msra.mxu0 0.0
      %3274 = vmatprep.subr.mxu0 0.0
      %3275 = vmatpush1.msra.mxu0 0.0
      %3276 = vmatprep.subr.mxu0 0.0
      %3277 = vmatpush1.msra.mxu0 0.0
      %3278 = vmatprep.subr.mxu0 0.0
      %3279 = vmatpush1.msra.mxu0 0.0
      %3280 = vmatprep.subr.mxu0 0.0
      %3281 = vmatpush1.msra.mxu0 0.0
      %3282 = vmatprep.subr.mxu0 0.0
      %3283 = vmatpush1.msra.mxu0 0.0
      %3284 = vmatprep.subr.mxu0 0.0
      %3285 = vmatpush1.msra.mxu0 0.0
      %3286 = vmatprep.subr.mxu0 0.0
      %3287 = vmatpush1.msra.mxu0 0.0
      %3288 = vmatprep.subr.mxu0 0.0
      %3289 = vmatpush1.msra.mxu0 0.0
      %3290 = vmatprep.subr.mxu0 0.0
      %3291 = vmatpush1.msra.mxu0 0.0
      %3292 = vmatprep.subr.mxu0 0.0
      %3293 = vmatpush1.msra.mxu0 0.0
      %3294 = vmatprep.mubr.f32.mxu0 0.0
      %3295 = vmatmul.mubr.f32.gmra.mrb[0].mxu0 %v3228
      %v3296 = vpop.f32.mrb[0].mxu0
      %v3297 = vadd.f32 0.0, %v3296
      %v3298 = vpop.f32.mrb[0].mxu0
      %3299 = vdwg.mxu0
      %v3300 = vadd.f32 %v3223, %v3297
      %v3301 = vmul.f32 %v3300, 0.5
      %v3302 = vtanh.pop %v3301
      %v3303 = vmul.f32 %v3302, 0.5
      %v3304 = vadd.f32 %v3303, 0.5
      %v3305 = vtanh.pop %v3300
      %v3306 = vsel %vm599, %v3305, %v3304
      %v3307 = vmul.f32 %v3306, %v3099
      %3309 = vrot.lane.b32.xlu0 %v3306, 64
      %v3310 = vpop.permute.xlu0 %3309
      %v3312 = vmul.f32 %v3306, %v3310
      %3314 = vrot.lane.b32.xlu0 %v3312, 32
      %v3315 = vpop.permute.xlu0 %3314
      %v3317 = vadd.f32 %v3307, %v3315
      %v3318 = vtanh.pop %v3317
      %3320 = vrot.lane.b32.xlu0 %v3318, 64
      %v3321 = vpop.permute.xlu0 %3320
      %v3323 = vmul.f32 %v3306, %v3321
      %3325 = vrot.lane.b32.xlu0 %v3323, 32
      %v3326 = vpop.permute.xlu0 %3325
      %3328 = vrot.lane.b32.xlu0 %v3217, 64
      %v3329 = vpop.permute.xlu0 %3328
      %v3331 = vsel %vm612, %v3326, %v3329
      %v3332 = vld [vmem:[%s4] sm:$0xff]
      %v3333 = vld [vmem:[%s4 + $0x8] sm:$0xff]
      %v3334 = vld [vmem:[%s4 + $0x10] sm:$0xff]
      %v3335 = vld [vmem:[%s4 + $0x18] sm:$0xff]
      %v3336 = vld [vmem:[%s4 + $0x20] sm:$0xff]
      %v3337 = vld [vmem:[%s4 + $0x28] sm:$0xff]
      %v3338 = vld [vmem:[%s4 + $0x30] sm:$0xff]
      %v3339 = vld [vmem:[%s4 + $0x38] sm:$0xff]
      %v3341 = vsel %vm723, %v3331, 0
      %3343 = vmatprep.subr.mxu0 0.0
      %3344 = vmatpush1.msra.mxu0 %v3332
      %3345 = vmatprep.subr.mxu0 0.0
      %3346 = vmatpush1.msra.mxu0 %v3333
      %3347 = vmatprep.subr.mxu0 0.0
      %3348 = vmatpush1.msra.mxu0 %v3334
      %3349 = vmatprep.subr.mxu0 0.0
      %3350 = vmatpush1.msra.mxu0 %v3335
      %3351 = vmatprep.subr.mxu0 0.0
      %3352 = vmatpush1.msra.mxu0 %v3336
      %3353 = vmatprep.subr.mxu0 0.0
      %3354 = vmatpush1.msra.mxu0 %v3337
      %3355 = vmatprep.subr.mxu0 0.0
      %3356 = vmatpush1.msra.mxu0 %v3338
      %3357 = vmatprep.subr.mxu0 0.0
      %3358 = vmatpush1.msra.mxu0 %v3339
      %3359 = vmatprep.subr.mxu0 0.0
      %3360 = vmatpush1.msra.mxu0 0.0
      %3361 = vmatprep.subr.mxu0 0.0
      %3362 = vmatpush1.msra.mxu0 0.0
      %3363 = vmatprep.subr.mxu0 0.0
      %3364 = vmatpush1.msra.mxu0 0.0
      %3365 = vmatprep.subr.mxu0 0.0
      %3366 = vmatpush1.msra.mxu0 0.0
      %3367 = vmatprep.subr.mxu0 0.0
      %3368 = vmatpush1.msra.mxu0 0.0
      %3369 = vmatprep.subr.mxu0 0.0
      %3370 = vmatpush1.msra.mxu0 0.0
      %3371 = vmatprep.subr.mxu0 0.0
      %3372 = vmatpush1.msra.mxu0 0.0
      %3373 = vmatprep.subr.mxu0 0.0
      %3374 = vmatpush1.msra.mxu0 0.0
      %3375 = vmatprep.subr.mxu0 0.0
      %3376 = vmatpush1.msra.mxu0 0.0
      %3377 = vmatprep.subr.mxu0 0.0
      %3378 = vmatpush1.msra.mxu0 0.0
      %3379 = vmatprep.subr.mxu0 0.0
      %3380 = vmatpush1.msra.mxu0 0.0
      %3381 = vmatprep.subr.mxu0 0.0
      %3382 = vmatpush1.msra.mxu0 0.0
      %3383 = vmatprep.subr.mxu0 0.0
      %3384 = vmatpush1.msra.mxu0 0.0
      %3385 = vmatprep.subr.mxu0 0.0
      %3386 = vmatpush1.msra.mxu0 0.0
      %3387 = vmatprep.subr.mxu0 0.0
      %3388 = vmatpush1.msra.mxu0 0.0
      %3389 = vmatprep.subr.mxu0 0.0
      %3390 = vmatpush1.msra.mxu0 0.0
      %3391 = vmatprep.subr.mxu0 0.0
      %3392 = vmatpush1.msra.mxu0 0.0
      %3393 = vmatprep.subr.mxu0 0.0
      %3394 = vmatpush1.msra.mxu0 0.0
      %3395 = vmatprep.subr.mxu0 0.0
      %3396 = vmatpush1.msra.mxu0 0.0
      %3397 = vmatprep.subr.mxu0 0.0
      %3398 = vmatpush1.msra.mxu0 0.0
      %3399 = vmatprep.subr.mxu0 0.0
      %3400 = vmatpush1.msra.mxu0 0.0
      %3401 = vmatprep.subr.mxu0 0.0
      %3402 = vmatpush1.msra.mxu0 0.0
      %3403 = vmatprep.subr.mxu0 0.0
      %3404 = vmatpush1.msra.mxu0 0.0
      %3405 = vmatprep.subr.mxu0 0.0
      %3406 = vmatpush1.msra.mxu0 0.0
      %3407 = vmatprep.mubr.f32.mxu0 0.0
      %3408 = vmatmul.mubr.f32.gmra.mrb[0].mxu0 %v3341
      %v3409 = vpop.f32.mrb[0].mxu0
      %v3410 = vadd.f32 %v605, %v3409
      %v3411 = vpop.f32.mrb[0].mxu0
      %3412 = vdwg.mxu0
      %v3413 = vmul.f32 %v3410, 0.5
      %v3414 = vtanh.pop %v3413
      %v3415 = vmul.f32 %v3414, 0.5
      %v3416 = vadd.f32 %v3415, 0.5
      %v3417 = vtanh.pop %v3410
      %v3418 = vsel %vm599, %v3417, %v3416
      %v3419 = vmul.f32 %v3418, %v3211
      %3421 = vrot.lane.b32.xlu0 %v3418, 64
      %v3422 = vpop.permute.xlu0 %3421
      %v3424 = vmul.f32 %v3418, %v3422
      %3426 = vrot.lane.b32.xlu0 %v3424, 32
      %v3427 = vpop.permute.xlu0 %3426
      %v3429 = vadd.f32 %v3419, %v3427
      %v3430 = vtanh.pop %v3429
      %3432 = vrot.lane.b32.xlu0 %v3430, 64
      %v3433 = vpop.permute.xlu0 %3432
      %v3435 = vmul.f32 %v3418, %v3433
      %3437 = vrot.lane.b32.xlu0 %v3435, 32
      %v3438 = vpop.permute.xlu0 %3437
      %3440 = vst.msk [vmem:[#allocation3 + $0x60] sm:$0xff] %vm612, %v3438
      %v3441 = vld [vmem:[#allocation2 + $0x68] sm:$0xff]
      %v3442 = vld [vmem:[%s3] sm:$0xff]
      %v3443 = vld [vmem:[%s3 + $0x8] sm:$0xff]
      %v3444 = vld [vmem:[%s3 + $0x10] sm:$0xff]
      %v3445 = vld [vmem:[%s3 + $0x18] sm:$0xff]
      %v3446 = vsel %vm612, %v3326, 0
      %3448 = vmatprep.subr.mxu0 0.0
      %3449 = vmatpush1.msra.mxu0 %v3442
      %3450 = vmatprep.subr.mxu0 0.0
      %3451 = vmatpush1.msra.mxu0 %v3443
      %3452 = vmatprep.subr.mxu0 0.0
      %3453 = vmatpush1.msra.mxu0 %v3444
      %3454 = vmatprep.subr.mxu0 0.0
      %3455 = vmatpush1.msra.mxu0 %v3445
      %3456 = vmatprep.subr.mxu0 0.0
      %3457 = vmatpush1.msra.mxu0 0.0
      %3458 = vmatprep.subr.mxu0 0.0
      %3459 = vmatpush1.msra.mxu0 0.0
      %3460 = vmatprep.subr.mxu0 0.0
      %3461 = vmatpush1.msra.mxu0 0.0
      %3462 = vmatprep.subr.mxu0 0.0
      %3463 = vmatpush1.msra.mxu0 0.0
      %3464 = vmatprep.subr.mxu0 0.0
      %3465 = vmatpush1.msra.mxu0 0.0
      %3466 = vmatprep.subr.mxu0 0.0
      %3467 = vmatpush1.msra.mxu0 0.0
      %3468 = vmatprep.subr.mxu0 0.0
      %3469 = vmatpush1.msra.mxu0 0.0
      %3470 = vmatprep.subr.mxu0 0.0
      %3471 = vmatpush1.msra.mxu0 0.0
      %3472 = vmatprep.subr.mxu0 0.0
      %3473 = vmatpush1.msra.mxu0 0.0
      %3474 = vmatprep.subr.mxu0 0.0
      %3475 = vmatpush1.msra.mxu0 0.0
      %3476 = vmatprep.subr.mxu0 0.0
      %3477 = vmatpush1.msra.mxu0 0.0
      %3478 = vmatprep.subr.mxu0 0.0
      %3479 = vmatpush1.msra.mxu0 0.0
      %3480 = vmatprep.subr.mxu0 0.0
      %3481 = vmatpush1.msra.mxu0 0.0
      %3482 = vmatprep.subr.mxu0 0.0
      %3483 = vmatpush1.msra.mxu0 0.0
      %3484 = vmatprep.subr.mxu0 0.0
      %3485 = vmatpush1.msra.mxu0 0.0
      %3486 = vmatprep.subr.mxu0 0.0
      %3487 = vmatpush1.msra.mxu0 0.0
      %3488 = vmatprep.subr.mxu0 0.0
      %3489 = vmatpush1.msra.mxu0 0.0
      %3490 = vmatprep.subr.mxu0 0.0
      %3491 = vmatpush1.msra.mxu0 0.0
      %3492 = vmatprep.subr.mxu0 0.0
      %3493 = vmatpush1.msra.mxu0 0.0
      %3494 = vmatprep.subr.mxu0 0.0
      %3495 = vmatpush1.msra.mxu0 0.0
      %3496 = vmatprep.subr.mxu0 0.0
      %3497 = vmatpush1.msra.mxu0 0.0
      %3498 = vmatprep.subr.mxu0 0.0
      %3499 = vmatpush1.msra.mxu0 0.0
      %3500 = vmatprep.subr.mxu0 0.0
      %3501 = vmatpush1.msra.mxu0 0.0
      %3502 = vmatprep.subr.mxu0 0.0
      %3503 = vmatpush1.msra.mxu0 0.0
      %3504 = vmatprep.subr.mxu0 0.0
      %3505 = vmatpush1.msra.mxu0 0.0
      %3506 = vmatprep.subr.mxu0 0.0
      %3507 = vmatpush1.msra.mxu0 0.0
      %3508 = vmatprep.subr.mxu0 0.0
      %3509 = vmatpush1.msra.mxu0 0.0
      %3510 = vmatprep.subr.mxu0 0.0
      %3511 = vmatpush1.msra.mxu0 0.0
      %3512 = vmatprep.mubr.f32.mxu0 0.0
      %3513 = vmatmul.mubr.f32.gmra.mrb[0].mxu0 %v3446
      %v3514 = vpop.f32.mrb[0].mxu0
      %v3515 = vadd.f32 0.0, %v3514
      %v3516 = vpop.f32.mrb[0].mxu0
      %3517 = vdwg.mxu0
      %v3518 = vadd.f32 %v3441, %v3515
      %v3519 = vmul.f32 %v3518, 0.5
      %v3520 = vtanh.pop %v3519
      %v3521 = vmul.f32 %v3520, 0.5
      %v3522 = vadd.f32 %v3521, 0.5
      %v3523 = vtanh.pop %v3518
      %v3524 = vsel %vm599, %v3523, %v3522
      %v3525 = vmul.f32 %v3524, %v3317
      %3527 = vrot.lane.b32.xlu0 %v3524, 64
      %v3528 = vpop.permute.xlu0 %3527
      %v3530 = vmul.f32 %v3524, %v3528
      %3532 = vrot.lane.b32.xlu0 %v3530, 32
      %v3533 = vpop.permute.xlu0 %3532
      %v3535 = vadd.f32 %v3525, %v3533
      %v3536 = vtanh.pop %v3535
      %3538 = vrot.lane.b32.xlu0 %v3536, 64
      %v3539 = vpop.permute.xlu0 %3538
      %v3541 = vmul.f32 %v3524, %v3539
      %3543 = vrot.lane.b32.xlu0 %v3541, 32
      %v3544 = vpop.permute.xlu0 %3543
      %3546 = vrot.lane.b32.xlu0 %v3435, 64
      %v3547 = vpop.permute.xlu0 %3546
      %v3549 = vsel %vm612, %v3544, %v3547
      %v3550 = vld [vmem:[%s4] sm:$0xff]
      %v3551 = vld [vmem:[%s4 + $0x8] sm:$0xff]
      %v3552 = vld [vmem:[%s4 + $0x10] sm:$0xff]
      %v3553 = vld [vmem:[%s4 + $0x18] sm:$0xff]
      %v3554 = vld [vmem:[%s4 + $0x20] sm:$0xff]
      %v3555 = vld [vmem:[%s4 + $0x28] sm:$0xff]
      %v3556 = vld [vmem:[%s4 + $0x30] sm:$0xff]
      %v3557 = vld [vmem:[%s4 + $0x38] sm:$0xff]
      %v3559 = vsel %vm723, %v3549, 0
      %3561 = vmatprep.subr.mxu0 0.0
      %3562 = vmatpush1.msra.mxu0 %v3550
      %3563 = vmatprep.subr.mxu0 0.0
      %3564 = vmatpush1.msra.mxu0 %v3551
      %3565 = vmatprep.subr.mxu0 0.0
      %3566 = vmatpush1.msra.mxu0 %v3552
      %3567 = vmatprep.subr.mxu0 0.0
      %3568 = vmatpush1.msra.mxu0 %v3553
      %3569 = vmatprep.subr.mxu0 0.0
      %3570 = vmatpush1.msra.mxu0 %v3554
      %3571 = vmatprep.subr.mxu0 0.0
      %3572 = vmatpush1.msra.mxu0 %v3555
      %3573 = vmatprep.subr.mxu0 0.0
      %3574 = vmatpush1.msra.mxu0 %v3556
      %3575 = vmatprep.subr.mxu0 0.0
      %3576 = vmatpush1.msra.mxu0 %v3557
      %3577 = vmatprep.subr.mxu0 0.0
      %3578 = vmatpush1.msra.mxu0 0.0
      %3579 = vmatprep.subr.mxu0 0.0
      %3580 = vmatpush1.msra.mxu0 0.0
      %3581 = vmatprep.subr.mxu0 0.0
      %3582 = vmatpush1.msra.mxu0 0.0
      %3583 = vmatprep.subr.mxu0 0.0
      %3584 = vmatpush1.msra.mxu0 0.0
      %3585 = vmatprep.subr.mxu0 0.0
      %3586 = vmatpush1.msra.mxu0 0.0
      %3587 = vmatprep.subr.mxu0 0.0
      %3588 = vmatpush1.msra.mxu0 0.0
      %3589 = vmatprep.subr.mxu0 0.0
      %3590 = vmatpush1.msra.mxu0 0.0
      %3591 = vmatprep.subr.mxu0 0.0
      %3592 = vmatpush1.msra.mxu0 0.0
      %3593 = vmatprep.subr.mxu0 0.0
      %3594 = vmatpush1.msra.mxu0 0.0
      %3595 = vmatprep.subr.mxu0 0.0
      %3596 = vmatpush1.msra.mxu0 0.0
      %3597 = vmatprep.subr.mxu0 0.0
      %3598 = vmatpush1.msra.mxu0 0.0
      %3599 = vmatprep.subr.mxu0 0.0
      %3600 = vmatpush1.msra.mxu0 0.0
      %3601 = vmatprep.subr.mxu0 0.0
      %3602 = vmatpush1.msra.mxu0 0.0
      %3603 = vmatprep.subr.mxu0 0.0
      %3604 = vmatpush1.msra.mxu0 0.0
      %3605 = vmatprep.subr.mxu0 0.0
      %3606 = vmatpush1.msra.mxu0 0.0
      %3607 = vmatprep.subr.mxu0 0.0
      %3608 = vmatpush1.msra.mxu0 0.0
      %3609 = vmatprep.subr.mxu0 0.0
      %3610 = vmatpush1.msra.mxu0 0.0
      %3611 = vmatprep.subr.mxu0 0.0
      %3612 = vmatpush1.msra.mxu0 0.0
      %3613 = vmatprep.subr.mxu0 0.0
      %3614 = vmatpush1.msra.mxu0 0.0
      %3615 = vmatprep.subr.mxu0 0.0
      %3616 = vmatpush1.msra.mxu0 0.0
      %3617 = vmatprep.subr.mxu0 0.0
      %3618 = vmatpush1.msra.mxu0 0.0
      %3619 = vmatprep.subr.mxu0 0.0
      %3620 = vmatpush1.msra.mxu0 0.0
      %3621 = vmatprep.subr.mxu0 0.0
      %3622 = vmatpush1.msra.mxu0 0.0
      %3623 = vmatprep.subr.mxu0 0.0
      %3624 = vmatpush1.msra.mxu0 0.0
      %3625 = vmatprep.mubr.f32.mxu0 0.0
      %3626 = vmatmul.mubr.f32.gmra.mrb[0].mxu0 %v3559
      %v3627 = vpop.f32.mrb[0].mxu0
      %v3628 = vadd.f32 %v605, %v3627
      %v3629 = vpop.f32.mrb[0].mxu0
      %3630 = vdwg.mxu0
      %v3631 = vmul.f32 %v3628, 0.5
      %v3632 = vtanh.pop %v3631
      %v3633 = vmul.f32 %v3632, 0.5
      %v3634 = vadd.f32 %v3633, 0.5
      %v3635 = vtanh.pop %v3628
      %v3636 = vsel %vm599, %v3635, %v3634
      %v3637 = vmul.f32 %v3636, %v3429
      %3639 = vrot.lane.b32.xlu0 %v3636, 64
      %v3640 = vpop.permute.xlu0 %3639
      %v3642 = vmul.f32 %v3636, %v3640
      %3644 = vrot.lane.b32.xlu0 %v3642, 32
      %v3645 = vpop.permute.xlu0 %3644
      %v3647 = vadd.f32 %v3637, %v3645
      %v3648 = vtanh.pop %v3647
      %3650 = vrot.lane.b32.xlu0 %v3648, 64
      %v3651 = vpop.permute.xlu0 %3650
      %v3653 = vmul.f32 %v3636, %v3651
      %3655 = vrot.lane.b32.xlu0 %v3653, 32
      %v3656 = vpop.permute.xlu0 %3655
      %3658 = vst.msk [vmem:[#allocation3 + $0x68] sm:$0xff] %vm612, %v3656
      %v3659 = vld [vmem:[#allocation2 + $0x70] sm:$0xff]
      %v3660 = vld [vmem:[%s3] sm:$0xff]
      %v3661 = vld [vmem:[%s3 + $0x8] sm:$0xff]
      %v3662 = vld [vmem:[%s3 + $0x10] sm:$0xff]
      %v3663 = vld [vmem:[%s3 + $0x18] sm:$0xff]
      %v3664 = vsel %vm612, %v3544, 0
      %3666 = vmatprep.subr.mxu0 0.0
      %3667 = vmatpush1.msra.mxu0 %v3660
      %3668 = vmatprep.subr.mxu0 0.0
      %3669 = vmatpush1.msra.mxu0 %v3661
      %3670 = vmatprep.subr.mxu0 0.0
      %3671 = vmatpush1.msra.mxu0 %v3662
      %3672 = vmatprep.subr.mxu0 0.0
      %3673 = vmatpush1.msra.mxu0 %v3663
      %3674 = vmatprep.subr.mxu0 0.0
      %3675 = vmatpush1.msra.mxu0 0.0
      %3676 = vmatprep.subr.mxu0 0.0
      %3677 = vmatpush1.msra.mxu0 0.0
      %3678 = vmatprep.subr.mxu0 0.0
      %3679 = vmatpush1.msra.mxu0 0.0
      %3680 = vmatprep.subr.mxu0 0.0
      %3681 = vmatpush1.msra.mxu0 0.0
      %3682 = vmatprep.subr.mxu0 0.0
      %3683 = vmatpush1.msra.mxu0 0.0
      %3684 = vmatprep.subr.mxu0 0.0
      %3685 = vmatpush1.msra.mxu0 0.0
      %3686 = vmatprep.subr.mxu0 0.0
      %3687 = vmatpush1.msra.mxu0 0.0
      %3688 = vmatprep.subr.mxu0 0.0
      %3689 = vmatpush1.msra.mxu0 0.0
      %3690 = vmatprep.subr.mxu0 0.0
      %3691 = vmatpush1.msra.mxu0 0.0
      %3692 = vmatprep.subr.mxu0 0.0
      %3693 = vmatpush1.msra.mxu0 0.0
      %3694 = vmatprep.subr.mxu0 0.0
      %3695 = vmatpush1.msra.mxu0 0.0
      %3696 = vmatprep.subr.mxu0 0.0
      %3697 = vmatpush1.msra.mxu0 0.0
      %3698 = vmatprep.subr.mxu0 0.0
      %3699 = vmatpush1.msra.mxu0 0.0
      %3700 = vmatprep.subr.mxu0 0.0
      %3701 = vmatpush1.msra.mxu0 0.0
      %3702 = vmatprep.subr.mxu0 0.0
      %3703 = vmatpush1.msra.mxu0 0.0
      %3704 = vmatprep.subr.mxu0 0.0
      %3705 = vmatpush1.msra.mxu0 0.0
      %3706 = vmatprep.subr.mxu0 0.0
      %3707 = vmatpush1.msra.mxu0 0.0
      %3708 = vmatprep.subr.mxu0 0.0
      %3709 = vmatpush1.msra.mxu0 0.0
      %3710 = vmatprep.subr.mxu0 0.0
      %3711 = vmatpush1.msra.mxu0 0.0
      %3712 = vmatprep.subr.mxu0 0.0
      %3713 = vmatpush1.msra.mxu0 0.0
      %3714 = vmatprep.subr.mxu0 0.0
      %3715 = vmatpush1.msra.mxu0 0.0
      %3716 = vmatprep.subr.mxu0 0.0
      %3717 = vmatpush1.msra.mxu0 0.0
      %3718 = vmatprep.subr.mxu0 0.0
      %3719 = vmatpush1.msra.mxu0 0.0
      %3720 = vmatprep.subr.mxu0 0.0
      %3721 = vmatpush1.msra.mxu0 0.0
      %3722 = vmatprep.subr.mxu0 0.0
      %3723 = vmatpush1.msra.mxu0 0.0
      %3724 = vmatprep.subr.mxu0 0.0
      %3725 = vmatpush1.msra.mxu0 0.0
      %3726 = vmatprep.subr.mxu0 0.0
      %3727 = vmatpush1.msra.mxu0 0.0
      %3728 = vmatprep.subr.mxu0 0.0
      %3729 = vmatpush1.msra.mxu0 0.0
      %3730 = vmatprep.mubr.f32.mxu0 0.0
      %3731 = vmatmul.mubr.f32.gmra.mrb[0].mxu0 %v3664
      %v3732 = vpop.f32.mrb[0].mxu0
      %v3733 = vadd.f32 0.0, %v3732
      %v3734 = vpop.f32.mrb[0].mxu0
      %3735 = vdwg.mxu0
      %v3736 = vadd.f32 %v3659, %v3733
      %v3737 = vmul.f32 %v3736, 0.5
      %v3738 = vtanh.pop %v3737
      %v3739 = vmul.f32 %v3738, 0.5
      %v3740 = vadd.f32 %v3739, 0.5
      %v3741 = vtanh.pop %v3736
      %v3742 = vsel %vm599, %v3741, %v3740
      %v3743 = vmul.f32 %v3742, %v3535
      %3745 = vrot.lane.b32.xlu0 %v3742, 64
      %v3746 = vpop.permute.xlu0 %3745
      %v3748 = vmul.f32 %v3742, %v3746
      %3750 = vrot.lane.b32.xlu0 %v3748, 32
      %v3751 = vpop.permute.xlu0 %3750
      %v3753 = vadd.f32 %v3743, %v3751
      %v3754 = vtanh.pop %v3753
      %3756 = vrot.lane.b32.xlu0 %v3754, 64
      %v3757 = vpop.permute.xlu0 %3756
      %v3759 = vmul.f32 %v3742, %v3757
      %3761 = vrot.lane.b32.xlu0 %v3759, 32
      %v3762 = vpop.permute.xlu0 %3761
      %3764 = vrot.lane.b32.xlu0 %v3653, 64
      %v3765 = vpop.permute.xlu0 %3764
      %v3767 = vsel %vm612, %v3762, %v3765
      %v3768 = vld [vmem:[%s4] sm:$0xff]
      %v3769 = vld [vmem:[%s4 + $0x8] sm:$0xff]
      %v3770 = vld [vmem:[%s4 + $0x10] sm:$0xff]
      %v3771 = vld [vmem:[%s4 + $0x18] sm:$0xff]
      %v3772 = vld [vmem:[%s4 + $0x20] sm:$0xff]
      %v3773 = vld [vmem:[%s4 + $0x28] sm:$0xff]
      %v3774 = vld [vmem:[%s4 + $0x30] sm:$0xff]
      %v3775 = vld [vmem:[%s4 + $0x38] sm:$0xff]
      %v3777 = vsel %vm723, %v3767, 0
      %3779 = vmatprep.subr.mxu0 0.0
      %3780 = vmatpush1.msra.mxu0 %v3768
      %3781 = vmatprep.subr.mxu0 0.0
      %3782 = vmatpush1.msra.mxu0 %v3769
      %3783 = vmatprep.subr.mxu0 0.0
      %3784 = vmatpush1.msra.mxu0 %v3770
      %3785 = vmatprep.subr.mxu0 0.0
      %3786 = vmatpush1.msra.mxu0 %v3771
      %3787 = vmatprep.subr.mxu0 0.0
      %3788 = vmatpush1.msra.mxu0 %v3772
      %3789 = vmatprep.subr.mxu0 0.0
      %3790 = vmatpush1.msra.mxu0 %v3773
      %3791 = vmatprep.subr.mxu0 0.0
      %3792 = vmatpush1.msra.mxu0 %v3774
      %3793 = vmatprep.subr.mxu0 0.0
      %3794 = vmatpush1.msra.mxu0 %v3775
      %3795 = vmatprep.subr.mxu0 0.0
      %3796 = vmatpush1.msra.mxu0 0.0
      %3797 = vmatprep.subr.mxu0 0.0
      %3798 = vmatpush1.msra.mxu0 0.0
      %3799 = vmatprep.subr.mxu0 0.0
      %3800 = vmatpush1.msra.mxu0 0.0
      %3801 = vmatprep.subr.mxu0 0.0
      %3802 = vmatpush1.msra.mxu0 0.0
      %3803 = vmatprep.subr.mxu0 0.0
      %3804 = vmatpush1.msra.mxu0 0.0
      %3805 = vmatprep.subr.mxu0 0.0
      %3806 = vmatpush1.msra.mxu0 0.0
      %3807 = vmatprep.subr.mxu0 0.0
      %3808 = vmatpush1.msra.mxu0 0.0
      %3809 = vmatprep.subr.mxu0 0.0
      %3810 = vmatpush1.msra.mxu0 0.0
      %3811 = vmatprep.subr.mxu0 0.0
      %3812 = vmatpush1.msra.mxu0 0.0
      %3813 = vmatprep.subr.mxu0 0.0
      %3814 = vmatpush1.msra.mxu0 0.0
      %3815 = vmatprep.subr.mxu0 0.0
      %3816 = vmatpush1.msra.mxu0 0.0
      %3817 = vmatprep.subr.mxu0 0.0
      %3818 = vmatpush1.msra.mxu0 0.0
      %3819 = vmatprep.subr.mxu0 0.0
      %3820 = vmatpush1.msra.mxu0 0.0
      %3821 = vmatprep.subr.mxu0 0.0
      %3822 = vmatpush1.msra.mxu0 0.0
      %3823 = vmatprep.subr.mxu0 0.0
      %3824 = vmatpush1.msra.mxu0 0.0
      %3825 = vmatprep.subr.mxu0 0.0
      %3826 = vmatpush1.msra.mxu0 0.0
      %3827 = vmatprep.subr.mxu0 0.0
      %3828 = vmatpush1.msra.mxu0 0.0
      %3829 = vmatprep.subr.mxu0 0.0
      %3830 = vmatpush1.msra.mxu0 0.0
      %3831 = vmatprep.subr.mxu0 0.0
      %3832 = vmatpush1.msra.mxu0 0.0
      %3833 = vmatprep.subr.mxu0 0.0
      %3834 = vmatpush1.msra.mxu0 0.0
      %3835 = vmatprep.subr.mxu0 0.0
      %3836 = vmatpush1.msra.mxu0 0.0
      %3837 = vmatprep.subr.mxu0 0.0
      %3838 = vmatpush1.msra.mxu0 0.0
      %3839 = vmatprep.subr.mxu0 0.0
      %3840 = vmatpush1.msra.mxu0 0.0
      %3841 = vmatprep.subr.mxu0 0.0
      %3842 = vmatpush1.msra.mxu0 0.0
      %3843 = vmatprep.mubr.f32.mxu0 0.0
      %3844 = vmatmul.mubr.f32.gmra.mrb[0].mxu0 %v3777
      %v3845 = vpop.f32.mrb[0].mxu0
      %v3846 = vadd.f32 %v605, %v3845
      %v3847 = vpop.f32.mrb[0].mxu0
      %3848 = vdwg.mxu0
      %v3849 = vmul.f32 %v3846, 0.5
      %v3850 = vtanh.pop %v3849
      %v3851 = vmul.f32 %v3850, 0.5
      %v3852 = vadd.f32 %v3851, 0.5
      %v3853 = vtanh.pop %v3846
      %v3854 = vsel %vm599, %v3853, %v3852
      %v3855 = vmul.f32 %v3854, %v3647
      %3857 = vrot.lane.b32.xlu0 %v3854, 64
      %v3858 = vpop.permute.xlu0 %3857
      %v3860 = vmul.f32 %v3854, %v3858
      %3862 = vrot.lane.b32.xlu0 %v3860, 32
      %v3863 = vpop.permute.xlu0 %3862
      %v3865 = vadd.f32 %v3855, %v3863
      %v3866 = vtanh.pop %v3865
      %3868 = vrot.lane.b32.xlu0 %v3866, 64
      %v3869 = vpop.permute.xlu0 %3868
      %v3871 = vmul.f32 %v3854, %v3869
      %3873 = vrot.lane.b32.xlu0 %v3871, 32
      %v3874 = vpop.permute.xlu0 %3873
      %3876 = vst.msk [vmem:[#allocation3 + $0x70] sm:$0xff] %vm612, %v3874
      %v3877 = vld [vmem:[#allocation2 + $0x78] sm:$0xff]
      %v3878 = vld [vmem:[%s3] sm:$0xff]
      %v3879 = vld [vmem:[%s3 + $0x8] sm:$0xff]
      %v3880 = vld [vmem:[%s3 + $0x10] sm:$0xff]
      %v3881 = vld [vmem:[%s3 + $0x18] sm:$0xff]
      %v3882 = vsel %vm612, %v3762, 0
      %3884 = vmatprep.subr.mxu0 0.0
      %3885 = vmatpush1.msra.mxu0 %v3878
      %3886 = vmatprep.subr.mxu0 0.0
      %3887 = vmatpush1.msra.mxu0 %v3879
      %3888 = vmatprep.subr.mxu0 0.0
      %3889 = vmatpush1.msra.mxu0 %v3880
      %3890 = vmatprep.subr.mxu0 0.0
      %3891 = vmatpush1.msra.mxu0 %v3881
      %3892 = vmatprep.subr.mxu0 0.0
      %3893 = vmatpush1.msra.mxu0 0.0
      %3894 = vmatprep.subr.mxu0 0.0
      %3895 = vmatpush1.msra.mxu0 0.0
      %3896 = vmatprep.subr.mxu0 0.0
      %3897 = vmatpush1.msra.mxu0 0.0
      %3898 = vmatprep.subr.mxu0 0.0
      %3899 = vmatpush1.msra.mxu0 0.0
      %3900 = vmatprep.subr.mxu0 0.0
      %3901 = vmatpush1.msra.mxu0 0.0
      %3902 = vmatprep.subr.mxu0 0.0
      %3903 = vmatpush1.msra.mxu0 0.0
      %3904 = vmatprep.subr.mxu0 0.0
      %3905 = vmatpush1.msra.mxu0 0.0
      %3906 = vmatprep.subr.mxu0 0.0
      %3907 = vmatpush1.msra.mxu0 0.0
      %3908 = vmatprep.subr.mxu0 0.0
      %3909 = vmatpush1.msra.mxu0 0.0
      %3910 = vmatprep.subr.mxu0 0.0
      %3911 = vmatpush1.msra.mxu0 0.0
      %3912 = vmatprep.subr.mxu0 0.0
      %3913 = vmatpush1.msra.mxu0 0.0
      %3914 = vmatprep.subr.mxu0 0.0
      %3915 = vmatpush1.msra.mxu0 0.0
      %3916 = vmatprep.subr.mxu0 0.0
      %3917 = vmatpush1.msra.mxu0 0.0
      %3918 = vmatprep.subr.mxu0 0.0
      %3919 = vmatpush1.msra.mxu0 0.0
      %3920 = vmatprep.subr.mxu0 0.0
      %3921 = vmatpush1.msra.mxu0 0.0
      %3922 = vmatprep.subr.mxu0 0.0
      %3923 = vmatpush1.msra.mxu0 0.0
      %3924 = vmatprep.subr.mxu0 0.0
      %3925 = vmatpush1.msra.mxu0 0.0
      %3926 = vmatprep.subr.mxu0 0.0
      %3927 = vmatpush1.msra.mxu0 0.0
      %3928 = vmatprep.subr.mxu0 0.0
      %3929 = vmatpush1.msra.mxu0 0.0
      %3930 = vmatprep.subr.mxu0 0.0
      %3931 = vmatpush1.msra.mxu0 0.0
      %3932 = vmatprep.subr.mxu0 0.0
      %3933 = vmatpush1.msra.mxu0 0.0
      %3934 = vmatprep.subr.mxu0 0.0
      %3935 = vmatpush1.msra.mxu0 0.0
      %3936 = vmatprep.subr.mxu0 0.0
      %3937 = vmatpush1.msra.mxu0 0.0
      %3938 = vmatprep.subr.mxu0 0.0
      %3939 = vmatpush1.msra.mxu0 0.0
      %3940 = vmatprep.subr.mxu0 0.0
      %3941 = vmatpush1.msra.mxu0 0.0
      %3942 = vmatprep.subr.mxu0 0.0
      %3943 = vmatpush1.msra.mxu0 0.0
      %3944 = vmatprep.subr.mxu0 0.0
      %3945 = vmatpush1.msra.mxu0 0.0
      %3946 = vmatprep.subr.mxu0 0.0
      %3947 = vmatpush1.msra.mxu0 0.0
      %3948 = vmatprep.mubr.f32.mxu0 0.0
      %3949 = vmatmul.mubr.f32.gmra.mrb[0].mxu0 %v3882
      %v3950 = vpop.f32.mrb[0].mxu0
      %v3951 = vadd.f32 0.0, %v3950
      %v3952 = vpop.f32.mrb[0].mxu0
      %3953 = vdwg.mxu0
      %v3954 = vadd.f32 %v3877, %v3951
      %v3955 = vmul.f32 %v3954, 0.5
      %v3956 = vtanh.pop %v3955
      %v3957 = vmul.f32 %v3956, 0.5
      %v3958 = vadd.f32 %v3957, 0.5
      %v3959 = vtanh.pop %v3954
      %v3960 = vsel %vm599, %v3959, %v3958
      %v3961 = vmul.f32 %v3960, %v3753
      %3963 = vrot.lane.b32.xlu0 %v3960, 64
      %v3964 = vpop.permute.xlu0 %3963
      %v3966 = vmul.f32 %v3960, %v3964
      %3968 = vrot.lane.b32.xlu0 %v3966, 32
      %v3969 = vpop.permute.xlu0 %3968
      %v3971 = vadd.f32 %v3961, %v3969
      %v3972 = vtanh.pop %v3971
      %3974 = vrot.lane.b32.xlu0 %v3972, 64
      %v3975 = vpop.permute.xlu0 %3974
      %v3977 = vmul.f32 %v3960, %v3975
      %3979 = vrot.lane.b32.xlu0 %v3977, 32
      %v3980 = vpop.permute.xlu0 %3979
      %3982 = vrot.lane.b32.xlu0 %v3871, 64
      %v3983 = vpop.permute.xlu0 %3982
      %v3985 = vsel %vm612, %v3980, %v3983
      %v3986 = vld [vmem:[%s4] sm:$0xff]
      %v3987 = vld [vmem:[%s4 + $0x8] sm:$0xff]
      %v3988 = vld [vmem:[%s4 + $0x10] sm:$0xff]
      %v3989 = vld [vmem:[%s4 + $0x18] sm:$0xff]
      %v3990 = vld [vmem:[%s4 + $0x20] sm:$0xff]
      %v3991 = vld [vmem:[%s4 + $0x28] sm:$0xff]
      %v3992 = vld [vmem:[%s4 + $0x30] sm:$0xff]
      %v3993 = vld [vmem:[%s4 + $0x38] sm:$0xff]
      %v3995 = vsel %vm723, %v3985, 0
      %3997 = vmatprep.subr.mxu0 0.0
      %3998 = vmatpush1.msra.mxu0 %v3986
      %3999 = vmatprep.subr.mxu0 0.0
      %4000 = vmatpush1.msra.mxu0 %v3987
      %4001 = vmatprep.subr.mxu0 0.0
      %4002 = vmatpush1.msra.mxu0 %v3988
      %4003 = vmatprep.subr.mxu0 0.0
      %4004 = vmatpush1.msra.mxu0 %v3989
      %4005 = vmatprep.subr.mxu0 0.0
      %4006 = vmatpush1.msra.mxu0 %v3990
      %4007 = vmatprep.subr.mxu0 0.0
      %4008 = vmatpush1.msra.mxu0 %v3991
      %4009 = vmatprep.subr.mxu0 0.0
      %4010 = vmatpush1.msra.mxu0 %v3992
      %4011 = vmatprep.subr.mxu0 0.0
      %4012 = vmatpush1.msra.mxu0 %v3993
      %4013 = vmatprep.subr.mxu0 0.0
      %4014 = vmatpush1.msra.mxu0 0.0
      %4015 = vmatprep.subr.mxu0 0.0
      %4016 = vmatpush1.msra.mxu0 0.0
      %4017 = vmatprep.subr.mxu0 0.0
      %4018 = vmatpush1.msra.mxu0 0.0
      %4019 = vmatprep.subr.mxu0 0.0
      %4020 = vmatpush1.msra.mxu0 0.0
      %4021 = vmatprep.subr.mxu0 0.0
      %4022 = vmatpush1.msra.mxu0 0.0
      %4023 = vmatprep.subr.mxu0 0.0
      %4024 = vmatpush1.msra.mxu0 0.0
      %4025 = vmatprep.subr.mxu0 0.0
      %4026 = vmatpush1.msra.mxu0 0.0
      %4027 = vmatprep.subr.mxu0 0.0
      %4028 = vmatpush1.msra.mxu0 0.0
      %4029 = vmatprep.subr.mxu0 0.0
      %4030 = vmatpush1.msra.mxu0 0.0
      %4031 = vmatprep.subr.mxu0 0.0
      %4032 = vmatpush1.msra.mxu0 0.0
      %4033 = vmatprep.subr.mxu0 0.0
      %4034 = vmatpush1.msra.mxu0 0.0
      %4035 = vmatprep.subr.mxu0 0.0
      %4036 = vmatpush1.msra.mxu0 0.0
      %4037 = vmatprep.subr.mxu0 0.0
      %4038 = vmatpush1.msra.mxu0 0.0
      %4039 = vmatprep.subr.mxu0 0.0
      %4040 = vmatpush1.msra.mxu0 0.0
      %4041 = vmatprep.subr.mxu0 0.0
      %4042 = vmatpush1.msra.mxu0 0.0
      %4043 = vmatprep.subr.mxu0 0.0
      %4044 = vmatpush1.msra.mxu0 0.0
      %4045 = vmatprep.subr.mxu0 0.0
      %4046 = vmatpush1.msra.mxu0 0.0
      %4047 = vmatprep.subr.mxu0 0.0
      %4048 = vmatpush1.msra.mxu0 0.0
      %4049 = vmatprep.subr.mxu0 0.0
      %4050 = vmatpush1.msra.mxu0 0.0
      %4051 = vmatprep.subr.mxu0 0.0
      %4052 = vmatpush1.msra.mxu0 0.0
      %4053 = vmatprep.subr.mxu0 0.0
      %4054 = vmatpush1.msra.mxu0 0.0
      %4055 = vmatprep.subr.mxu0 0.0
      %4056 = vmatpush1.msra.mxu0 0.0
      %4057 = vmatprep.subr.mxu0 0.0
      %4058 = vmatpush1.msra.mxu0 0.0
      %4059 = vmatprep.subr.mxu0 0.0
      %4060 = vmatpush1.msra.mxu0 0.0
      %4061 = vmatprep.mubr.f32.mxu0 0.0
      %4062 = vmatmul.mubr.f32.gmra.mrb[0].mxu0 %v3995
      %v4063 = vpop.f32.mrb[0].mxu0
      %v4064 = vadd.f32 %v605, %v4063
      %v4065 = vpop.f32.mrb[0].mxu0
      %4066 = vdwg.mxu0
      %v4067 = vmul.f32 %v4064, 0.5
      %v4068 = vtanh.pop %v4067
      %v4069 = vmul.f32 %v4068, 0.5
      %v4070 = vadd.f32 %v4069, 0.5
      %v4071 = vtanh.pop %v4064
      %v4072 = vsel %vm599, %v4071, %v4070
      %v4073 = vmul.f32 %v4072, %v3865
      %4075 = vrot.lane.b32.xlu0 %v4072, 64
      %v4076 = vpop.permute.xlu0 %4075
      %v4078 = vmul.f32 %v4072, %v4076
      %4080 = vrot.lane.b32.xlu0 %v4078, 32
      %v4081 = vpop.permute.xlu0 %4080
      %v4083 = vadd.f32 %v4073, %v4081
      %v4084 = vtanh.pop %v4083
      %4086 = vrot.lane.b32.xlu0 %v4084, 64
      %v4087 = vpop.permute.xlu0 %4086
      %v4089 = vmul.f32 %v4072, %v4087
      %4091 = vrot.lane.b32.xlu0 %v4089, 32
      %v4092 = vpop.permute.xlu0 %4091
      %4094 = vst.msk [vmem:[#allocation3 + $0x78] sm:$0xff] %vm612, %v4092
      %v4095 = vld [vmem:[#allocation3] sm:$0xff]
      %v4096 = vld [vmem:[#allocation3 + $0x8] sm:$0xff]
      %v4097 = vld [vmem:[#allocation3 + $0x10] sm:$0xff]
      %v4098 = vld [vmem:[#allocation3 + $0x18] sm:$0xff]
      %v4099 = vld [vmem:[#allocation3 + $0x20] sm:$0xff]
      %v4100 = vld [vmem:[#allocation3 + $0x28] sm:$0xff]
      %v4101 = vld [vmem:[#allocation3 + $0x30] sm:$0xff]
      %v4102 = vld [vmem:[#allocation3 + $0x38] sm:$0xff]
      %v4103 = vld [vmem:[#allocation3 + $0x40] sm:$0xff]
      %v4104 = vld [vmem:[#allocation3 + $0x48] sm:$0xff]
      %v4105 = vld [vmem:[#allocation3 + $0x50] sm:$0xff]
      %v4106 = vld [vmem:[#allocation3 + $0x58] sm:$0xff]
      %v4107 = vld [vmem:[#allocation3 + $0x60] sm:$0xff]
      %v4108 = vld [vmem:[#allocation3 + $0x68] sm:$0xff]
      %v4109 = vld [vmem:[#allocation3 + $0x70] sm:$0xff]
      %v4110 = vld [vmem:[#allocation3 + $0x78] sm:$0xff]
      %v4111 = vld [vmem:[%s6] sm:$0xff]
      %v4112 = vld [vmem:[%s6 + $0x8] sm:$0xff]
      %v4113 = vld [vmem:[%s6 + $0x10] sm:$0xff]
      %v4114 = vld [vmem:[%s6 + $0x18] sm:$0xff]
      %v4115 = vld [vmem:[%s7] sm:$0x1]
      %v4117 = vlaneseq
      %v4118 = vshrl.u32 %v4117, 7
      %v4119 = vsub.s32 0, %v4118
      %v4120 = vrot.slane %v4115, %v4119
      %v4123 = vsel %vm612, %v4095, 0
      %v4126 = vsel %vm612, %v4096, 0
      %v4129 = vsel %vm612, %v4097, 0
      %v4132 = vsel %vm612, %v4098, 0
      %v4135 = vsel %vm612, %v4099, 0
      %v4138 = vsel %vm612, %v4100, 0
      %v4141 = vsel %vm612, %v4101, 0
      %v4144 = vsel %vm612, %v4102, 0
      %v4147 = vsel %vm612, %v4103, 0
      %v4150 = vsel %vm612, %v4104, 0
      %v4153 = vsel %vm612, %v4105, 0
      %v4156 = vsel %vm612, %v4106, 0
      %v4159 = vsel %vm612, %v4107, 0
      %v4162 = vsel %vm612, %v4108, 0
      %v4165 = vsel %vm612, %v4109, 0
      %v4168 = vsel %vm612, %v4110, 0
      %4170 = vmatprep.subr.mxu0 0.0
      %4171 = vmatpush1.msra.mxu0 %v4111
      %4172 = vmatprep.subr.mxu0 0.0
      %4173 = vmatpush1.msra.mxu0 %v4112
      %4174 = vmatprep.subr.mxu0 0.0
      %4175 = vmatpush1.msra.mxu0 %v4113
      %4176 = vmatprep.subr.mxu0 0.0
      %4177 = vmatpush1.msra.mxu0 %v4114
      %4178 = vmatprep.subr.mxu0 0.0
      %4179 = vmatpush1.msra.mxu0 0.0
      %4180 = vmatprep.subr.mxu0 0.0
      %4181 = vmatpush1.msra.mxu0 0.0
      %4182 = vmatprep.subr.mxu0 0.0
      %4183 = vmatpush1.msra.mxu0 0.0
      %4184 = vmatprep.subr.mxu0 0.0
      %4185 = vmatpush1.msra.mxu0 0.0
      %4186 = vmatprep.subr.mxu0 0.0
      %4187 = vmatpush1.msra.mxu0 0.0
      %4188 = vmatprep.subr.mxu0 0.0
      %4189 = vmatpush1.msra.mxu0 0.0
      %4190 = vmatprep.subr.mxu0 0.0
      %4191 = vmatpush1.msra.mxu0 0.0
      %4192 = vmatprep.subr.mxu0 0.0
      %4193 = vmatpush1.msra.mxu0 0.0
      %4194 = vmatprep.subr.mxu0 0.0
      %4195 = vmatpush1.msra.mxu0 0.0
      %4196 = vmatprep.subr.mxu0 0.0
      %4197 = vmatpush1.msra.mxu0 0.0
      %4198 = vmatprep.subr.mxu0 0.0
      %4199 = vmatpush1.msra.mxu0 0.0
      %4200 = vmatprep.subr.mxu0 0.0
      %4201 = vmatpush1.msra.mxu0 0.0
      %4202 = vmatprep.subr.mxu0 0.0
      %4203 = vmatpush1.msra.mxu0 0.0
      %4204 = vmatprep.subr.mxu0 0.0
      %4205 = vmatpush1.msra.mxu0 0.0
      %4206 = vmatprep.subr.mxu0 0.0
      %4207 = vmatpush1.msra.mxu0 0.0
      %4208 = vmatprep.subr.mxu0 0.0
      %4209 = vmatpush1.msra.mxu0 0.0
      %4210 = vmatprep.subr.mxu0 0.0
      %4211 = vmatpush1.msra.mxu0 0.0
      %4212 = vmatprep.subr.mxu0 0.0
      %4213 = vmatpush1.msra.mxu0 0.0
      %4214 = vmatprep.subr.mxu0 0.0
      %4215 = vmatpush1.msra.mxu0 0.0
      %4216 = vmatprep.subr.mxu0 0.0
      %4217 = vmatpush1.msra.mxu0 0.0
      %4218 = vmatprep.subr.mxu0 0.0
      %4219 = vmatpush1.msra.mxu0 0.0
      %4220 = vmatprep.subr.mxu0 0.0
      %4221 = vmatpush1.msra.mxu0 0.0
      %4222 = vmatprep.subr.mxu0 0.0
      %4223 = vmatpush1.msra.mxu0 0.0
      %4224 = vmatprep.subr.mxu0 0.0
      %4225 = vmatpush1.msra.mxu0 0.0
      %4226 = vmatprep.subr.mxu0 0.0
      %4227 = vmatpush1.msra.mxu0 0.0
      %4228 = vmatprep.subr.mxu0 0.0
      %4229 = vmatpush1.msra.mxu0 0.0
      %4230 = vmatprep.subr.mxu0 0.0
      %4231 = vmatpush1.msra.mxu0 0.0
      %4232 = vmatprep.subr.mxu0 0.0
      %4233 = vmatpush1.msra.mxu0 0.0
      %4234 = vmatprep.mubr.f32.mxu0 0.0
      %4235 = vmatmul.mubr.f32.gmra.mrb[0].mxu0 %v4123
      %v4236 = vpop.f32.mrb[0].mxu0
      %v4237 = vadd.f32 %v4120, %v4236
      %v4238 = vpop.f32.mrb[0].mxu0
      %4239 = vmatprep.mubr.f32.mxu0 0.0
      %4240 = vmatmul.mubr.f32.gmra.mrb[0].mxu0 %v4126
      %v4241 = vpop.f32.mrb[0].mxu0
      %v4242 = vadd.f32 %v4120, %v4241
      %v4243 = vpop.f32.mrb[0].mxu0
      %4244 = vmatprep.mubr.f32.mxu0 0.0
      %4245 = vmatmul.mubr.f32.gmra.mrb[0].mxu0 %v4129
      %v4246 = vpop.f32.mrb[0].mxu0
      %v4247 = vadd.f32 %v4120, %v4246
      %v4248 = vpop.f32.mrb[0].mxu0
      %4249 = vmatprep.mubr.f32.mxu0 0.0
      %4250 = vmatmul.mubr.f32.gmra.mrb[0].mxu0 %v4132
      %v4251 = vpop.f32.mrb[0].mxu0
      %v4252 = vadd.f32 %v4120, %v4251
      %v4253 = vpop.f32.mrb[0].mxu0
      %4254 = vmatprep.mubr.f32.mxu0 0.0
      %4255 = vmatmul.mubr.f32.gmra.mrb[0].mxu0 %v4135
      %v4256 = vpop.f32.mrb[0].mxu0
      %v4257 = vadd.f32 %v4120, %v4256
      %v4258 = vpop.f32.mrb[0].mxu0
      %4259 = vmatprep.mubr.f32.mxu0 0.0
      %4260 = vmatmul.mubr.f32.gmra.mrb[0].mxu0 %v4138
      %v4261 = vpop.f32.mrb[0].mxu0
      %v4262 = vadd.f32 %v4120, %v4261
      %v4263 = vpop.f32.mrb[0].mxu0
      %4264 = vmatprep.mubr.f32.mxu0 0.0
      %4265 = vmatmul.mubr.f32.gmra.mrb[0].mxu0 %v4141
      %v4266 = vpop.f32.mrb[0].mxu0
      %v4267 = vadd.f32 %v4120, %v4266
      %v4268 = vpop.f32.mrb[0].mxu0
      %4269 = vmatprep.mubr.f32.mxu0 0.0
      %4270 = vmatmul.mubr.f32.gmra.mrb[0].mxu0 %v4144
      %v4271 = vpop.f32.mrb[0].mxu0
      %v4272 = vadd.f32 %v4120, %v4271
      %v4273 = vpop.f32.mrb[0].mxu0
      %4274 = vmatprep.mubr.f32.mxu0 0.0
      %4275 = vmatmul.mubr.f32.gmra.mrb[0].mxu0 %v4147
      %v4276 = vpop.f32.mrb[0].mxu0
      %v4277 = vadd.f32 %v4120, %v4276
      %v4278 = vpop.f32.mrb[0].mxu0
      %4279 = vmatprep.mubr.f32.mxu0 0.0
      %4280 = vmatmul.mubr.f32.gmra.mrb[0].mxu0 %v4150
      %v4281 = vpop.f32.mrb[0].mxu0
      %v4282 = vadd.f32 %v4120, %v4281
      %v4283 = vpop.f32.mrb[0].mxu0
      %4284 = vmatprep.mubr.f32.mxu0 0.0
      %4285 = vmatmul.mubr.f32.gmra.mrb[0].mxu0 %v4153
      %v4286 = vpop.f32.mrb[0].mxu0
      %v4287 = vadd.f32 %v4120, %v4286
      %v4288 = vpop.f32.mrb[0].mxu0
      %4289 = vmatprep.mubr.f32.mxu0 0.0
      %4290 = vmatmul.mubr.f32.gmra.mrb[0].mxu0 %v4156
      %v4291 = vpop.f32.mrb[0].mxu0
      %v4292 = vadd.f32 %v4120, %v4291
      %v4293 = vpop.f32.mrb[0].mxu0
      %4294 = vmatprep.mubr.f32.mxu0 0.0
      %4295 = vmatmul.mubr.f32.gmra.mrb[0].mxu0 %v4159
      %v4296 = vpop.f32.mrb[0].mxu0
      %v4297 = vadd.f32 %v4120, %v4296
      %v4298 = vpop.f32.mrb[0].mxu0
      %4299 = vmatprep.mubr.f32.mxu0 0.0
      %4300 = vmatmul.mubr.f32.gmra.mrb[0].mxu0 %v4162
      %v4301 = vpop.f32.mrb[0].mxu0
      %v4302 = vadd.f32 %v4120, %v4301
      %v4303 = vpop.f32.mrb[0].mxu0
      %4304 = vmatprep.mubr.f32.mxu0 0.0
      %4305 = vmatmul.mubr.f32.gmra.mrb[0].mxu0 %v4165
      %v4306 = vpop.f32.mrb[0].mxu0
      %v4307 = vadd.f32 %v4120, %v4306
      %v4308 = vpop.f32.mrb[0].mxu0
      %4309 = vmatprep.mubr.f32.mxu0 0.0
      %4310 = vmatmul.mubr.f32.gmra.mrb[0].mxu0 %v4168
      %v4311 = vpop.f32.mrb[0].mxu0
      %v4312 = vadd.f32 %v4120, %v4311
      %v4313 = vpop.f32.mrb[0].mxu0
      %4314 = vdwg.mxu0
      %v4315 = vld [vmem:[%s8] sm:$0xff]
      %v4316 = vld [vmem:[%s8 + $0x8] sm:$0xff]
      %v4317 = vld [vmem:[%s8 + $0x10] sm:$0xff]
      %v4318 = vld [vmem:[%s8 + $0x18] sm:$0xff]
      %v4319 = vld [vmem:[%s8 + $0x20] sm:$0xff]
      %v4320 = vld [vmem:[%s8 + $0x28] sm:$0xff]
      %v4321 = vld [vmem:[%s9] sm:$0x1]
      %v4323 = vlaneseq
      %v4324 = vshrl.u32 %v4323, 7
      %v4325 = vsub.s32 0, %v4324
      %v4326 = vrot.slane %v4321, %v4325
      %vm4328 = vcmask 392192
      %v4330 = vsel %vm4328, %v4237, 0
      %v4333 = vsel %vm4328, %v4242, 0
      %v4336 = vsel %vm4328, %v4247, 0
      %v4339 = vsel %vm4328, %v4252, 0
      %v4342 = vsel %vm4328, %v4257, 0
      %v4345 = vsel %vm4328, %v4262, 0
      %v4348 = vsel %vm4328, %v4267, 0
      %v4351 = vsel %vm4328, %v4272, 0
      %v4354 = vsel %vm4328, %v4277, 0
      %v4357 = vsel %vm4328, %v4282, 0
      %v4360 = vsel %vm4328, %v4287, 0
      %v4363 = vsel %vm4328, %v4292, 0
      %v4366 = vsel %vm4328, %v4297, 0
      %v4369 = vsel %vm4328, %v4302, 0
      %v4372 = vsel %vm4328, %v4307, 0
      %v4375 = vsel %vm4328, %v4312, 0
      %4377 = vmatprep.subr.mxu0 0.0
      %4378 = vmatpush1.msra.mxu0 %v4315
      %4379 = vmatprep.subr.mxu0 0.0
      %4380 = vmatpush1.msra.mxu0 %v4316
      %4381 = vmatprep.subr.mxu0 0.0
      %4382 = vmatpush1.msra.mxu0 %v4317
      %4383 = vmatprep.subr.mxu0 0.0
      %4384 = vmatpush1.msra.mxu0 %v4318
      %4385 = vmatprep.subr.mxu0 0.0
      %4386 = vmatpush1.msra.mxu0 %v4319
      %4387 = vmatprep.subr.mxu0 0.0
      %4388 = vmatpush1.msra.mxu0 %v4320
      %4389 = vmatprep.subr.mxu0 0.0
      %4390 = vmatpush1.msra.mxu0 0.0
      %4391 = vmatprep.subr.mxu0 0.0
      %4392 = vmatpush1.msra.mxu0 0.0
      %4393 = vmatprep.subr.mxu0 0.0
      %4394 = vmatpush1.msra.mxu0 0.0
      %4395 = vmatprep.subr.mxu0 0.0
      %4396 = vmatpush1.msra.mxu0 0.0
      %4397 = vmatprep.subr.mxu0 0.0
      %4398 = vmatpush1.msra.mxu0 0.0
      %4399 = vmatprep.subr.mxu0 0.0
      %4400 = vmatpush1.msra.mxu0 0.0
      %4401 = vmatprep.subr.mxu0 0.0
      %4402 = vmatpush1.msra.mxu0 0.0
      %4403 = vmatprep.subr.mxu0 0.0
      %4404 = vmatpush1.msra.mxu0 0.0
      %4405 = vmatprep.subr.mxu0 0.0
      %4406 = vmatpush1.msra.mxu0 0.0
      %4407 = vmatprep.subr.mxu0 0.0
      %4408 = vmatpush1.msra.mxu0 0.0
      %4409 = vmatprep.subr.mxu0 0.0
      %4410 = vmatpush1.msra.mxu0 0.0
      %4411 = vmatprep.subr.mxu0 0.0
      %4412 = vmatpush1.msra.mxu0 0.0
      %4413 = vmatprep.subr.mxu0 0.0
      %4414 = vmatpush1.msra.mxu0 0.0
      %4415 = vmatprep.subr.mxu0 0.0
      %4416 = vmatpush1.msra.mxu0 0.0
      %4417 = vmatprep.subr.mxu0 0.0
      %4418 = vmatpush1.msra.mxu0 0.0
      %4419 = vmatprep.subr.mxu0 0.0
      %4420 = vmatpush1.msra.mxu0 0.0
      %4421 = vmatprep.subr.mxu0 0.0
      %4422 = vmatpush1.msra.mxu0 0.0
      %4423 = vmatprep.subr.mxu0 0.0
      %4424 = vmatpush1.msra.mxu0 0.0
      %4425 = vmatprep.subr.mxu0 0.0
      %4426 = vmatpush1.msra.mxu0 0.0
      %4427 = vmatprep.subr.mxu0 0.0
      %4428 = vmatpush1.msra.mxu0 0.0
      %4429 = vmatprep.subr.mxu0 0.0
      %4430 = vmatpush1.msra.mxu0 0.0
      %4431 = vmatprep.subr.mxu0 0.0
      %4432 = vmatpush1.msra.mxu0 0.0
      %4433 = vmatprep.subr.mxu0 0.0
      %4434 = vmatpush1.msra.mxu0 0.0
      %4435 = vmatprep.subr.mxu0 0.0
      %4436 = vmatpush1.msra.mxu0 0.0
      %4437 = vmatprep.subr.mxu0 0.0
      %4438 = vmatpush1.msra.mxu0 0.0
      %4439 = vmatprep.subr.mxu0 0.0
      %4440 = vmatpush1.msra.mxu0 0.0
      %4441 = vmatprep.mubr.f32.mxu0 0.0
      %4442 = vmatmul.mubr.f32.gmra.mrb[0].mxu0 %v4330
      %v4443 = vpop.f32.mrb[0].mxu0
      %v4444 = vadd.f32 %v4326, %v4443
      %v4445 = vpop.f32.mrb[0].mxu0
      %4446 = vmatprep.mubr.f32.mxu0 0.0
      %4447 = vmatmul.mubr.f32.gmra.mrb[0].mxu0 %v4333
      %v4448 = vpop.f32.mrb[0].mxu0
      %v4449 = vadd.f32 %v4326, %v4448
      %v4450 = vpop.f32.mrb[0].mxu0
      %4451 = vmatprep.mubr.f32.mxu0 0.0
      %4452 = vmatmul.mubr.f32.gmra.mrb[0].mxu0 %v4336
      %v4453 = vpop.f32.mrb[0].mxu0
      %v4454 = vadd.f32 %v4326, %v4453
      %v4455 = vpop.f32.mrb[0].mxu0
      %4456 = vmatprep.mubr.f32.mxu0 0.0
      %4457 = vmatmul.mubr.f32.gmra.mrb[0].mxu0 %v4339
      %v4458 = vpop.f32.mrb[0].mxu0
      %v4459 = vadd.f32 %v4326, %v4458
      %v4460 = vpop.f32.mrb[0].mxu0
      %4461 = vmatprep.mubr.f32.mxu0 0.0
      %4462 = vmatmul.mubr.f32.gmra.mrb[0].mxu0 %v4342
      %v4463 = vpop.f32.mrb[0].mxu0
      %v4464 = vadd.f32 %v4326, %v4463
      %v4465 = vpop.f32.mrb[0].mxu0
      %4466 = vmatprep.mubr.f32.mxu0 0.0
      %4467 = vmatmul.mubr.f32.gmra.mrb[0].mxu0 %v4345
      %v4468 = vpop.f32.mrb[0].mxu0
      %v4469 = vadd.f32 %v4326, %v4468
      %v4470 = vpop.f32.mrb[0].mxu0
      %4471 = vmatprep.mubr.f32.mxu0 0.0
      %4472 = vmatmul.mubr.f32.gmra.mrb[0].mxu0 %v4348
      %v4473 = vpop.f32.mrb[0].mxu0
      %v4474 = vadd.f32 %v4326, %v4473
      %v4475 = vpop.f32.mrb[0].mxu0
      %4476 = vmatprep.mubr.f32.mxu0 0.0
      %4477 = vmatmul.mubr.f32.gmra.mrb[0].mxu0 %v4351
      %v4478 = vpop.f32.mrb[0].mxu0
      %v4479 = vadd.f32 %v4326, %v4478
      %v4480 = vpop.f32.mrb[0].mxu0
      %4481 = vmatprep.mubr.f32.mxu0 0.0
      %4482 = vmatmul.mubr.f32.gmra.mrb[0].mxu0 %v4354
      %v4483 = vpop.f32.mrb[0].mxu0
      %v4484 = vadd.f32 %v4326, %v4483
      %v4485 = vpop.f32.mrb[0].mxu0
      %4486 = vmatprep.mubr.f32.mxu0 0.0
      %4487 = vmatmul.mubr.f32.gmra.mrb[0].mxu0 %v4357
      %v4488 = vpop.f32.mrb[0].mxu0
      %v4489 = vadd.f32 %v4326, %v4488
      %v4490 = vpop.f32.mrb[0].mxu0
      %4491 = vmatprep.mubr.f32.mxu0 0.0
      %4492 = vmatmul.mubr.f32.gmra.mrb[0].mxu0 %v4360
      %v4493 = vpop.f32.mrb[0].mxu0
      %v4494 = vadd.f32 %v4326, %v4493
      %v4495 = vpop.f32.mrb[0].mxu0
      %4496 = vmatprep.mubr.f32.mxu0 0.0
      %4497 = vmatmul.mubr.f32.gmra.mrb[0].mxu0 %v4363
      %v4498 = vpop.f32.mrb[0].mxu0
      %v4499 = vadd.f32 %v4326, %v4498
      %v4500 = vpop.f32.mrb[0].mxu0
      %4501 = vmatprep.mubr.f32.mxu0 0.0
      %4502 = vmatmul.mubr.f32.gmra.mrb[0].mxu0 %v4366
      %v4503 = vpop.f32.mrb[0].mxu0
      %v4504 = vadd.f32 %v4326, %v4503
      %v4505 = vpop.f32.mrb[0].mxu0
      %4506 = vmatprep.mubr.f32.mxu0 0.0
      %4507 = vmatmul.mubr.f32.gmra.mrb[0].mxu0 %v4369
      %v4508 = vpop.f32.mrb[0].mxu0
      %v4509 = vadd.f32 %v4326, %v4508
      %v4510 = vpop.f32.mrb[0].mxu0
      %4511 = vmatprep.mubr.f32.mxu0 0.0
      %4512 = vmatmul.mubr.f32.gmra.mrb[0].mxu0 %v4372
      %v4513 = vpop.f32.mrb[0].mxu0
      %v4514 = vadd.f32 %v4326, %v4513
      %v4515 = vpop.f32.mrb[0].mxu0
      %4516 = vmatprep.mubr.f32.mxu0 0.0
      %4517 = vmatmul.mubr.f32.gmra.mrb[0].mxu0 %v4375
      %v4518 = vpop.f32.mrb[0].mxu0
      %v4519 = vadd.f32 %v4326, %v4518
      %v4520 = vpop.f32.mrb[0].mxu0
      %4521 = vdwg.mxu0
      %4522 = vst [vmem:[%s359] sm:$0xff] %v4444
      %4523 = vst [vmem:[%s359 + $0x8] sm:$0xff] %v4449
      %4524 = vst [vmem:[%s359 + $0x10] sm:$0xff] %v4454
      %4525 = vst [vmem:[%s359 + $0x18] sm:$0xff] %v4459
      %4526 = vst [vmem:[%s359 + $0x20] sm:$0xff] %v4464
      %4527 = vst [vmem:[%s359 + $0x28] sm:$0xff] %v4469
      %4528 = vst [vmem:[%s359 + $0x30] sm:$0xff] %v4474
      %4529 = vst [vmem:[%s359 + $0x38] sm:$0xff] %v4479
      %4530 = vst [vmem:[%s359 + $0x40] sm:$0xff] %v4484
      %4531 = vst [vmem:[%s359 + $0x48] sm:$0xff] %v4489
      %4532 = vst [vmem:[%s359 + $0x50] sm:$0xff] %v4494
      %4533 = vst [vmem:[%s359 + $0x58] sm:$0xff] %v4499
      %4534 = vst [vmem:[%s359 + $0x60] sm:$0xff] %v4504
      %4535 = vst [vmem:[%s359 + $0x68] sm:$0xff] %v4509
      %4536 = vst [vmem:[%s359 + $0x70] sm:$0xff] %v4514
      %4537 = vst [vmem:[%s359 + $0x78] sm:$0xff] %v4519
      %p4538 = scmp.lt.s32.totalorder %s21, 1
      %s4539 = scalar_select %p4538, %s21, 1
      %s4540 = smul.addr %s4539, 16
      %s4541 = smul.addr %s4540, 8
      %s4542 = scalar_lea.vmem %s10, %s4541
      // Predicated region
      $region61: #{multinn_forward.1} parent=59 // pred_check
        %p4543 = pneg %p254
      $region62: #{multinn_forward.1} parent=59 // pred_check_branch
        %4545 = sbr.rel (%p4543) target = $region64
      $region63: #{multinn_forward.1} parent=59 // pred_region
        _
      $region64: #{multinn_forward.1} parent=59 // pred_fallthru
        _
    $region60: #{multinn_forward.1} parent=5 // pred_fallthru
      _
    %p4546 = scmp.le.s32.totalorder 2, %s16
    // Predicated region
    $region65: #{multinn_forward.1} parent=5 // pred_check
      %p4547 = pneg %p4546
    $region66: #{multinn_forward.1} parent=5 // pred_check_branch
      %4549 = sbr.rel (%p4547) target = $region68
    $region67: #{multinn_forward.1} parent=5 // pred_region
      %s4550 = ssub.s32 %s16, 2
      // Predicated region
      $region69: #{multinn_forward.1} parent=67 // pred_check
        %p4551 = pneg %p260
      $region70: #{multinn_forward.1} parent=67 // pred_check_branch
        %4553 = sbr.rel (%p4551) target = $region72
      $region71: #{multinn_forward.1} parent=67 // pred_region
        %p4554 = scmp.lt.s32.totalorder %s22, 1
        %s4555 = scalar_select %p4554, %s22, 1
        %s4556 = smul.addr %s4555, 16
        %s4557 = smul.addr %s4556, 8
        %s4558 = scalar_lea.vmem %s10, %s4557
      $region72: #{multinn_forward.1} parent=67 // pred_fallthru
        _
    $region68: #{multinn_forward.1} parent=5 // pred_fallthru
      _
  $region6: #{multinn_forward.1} parent=0 // loop_footer
    %s20 = sadd.s32 1, %s16
  $region7: #{multinn_forward.1} parent=0 // loop_footer_branch
    %15 = sbr.rel target = $region3
  $region8: #{multinn_forward.1} parent=0 // loop_exit
    _

</llo_original>
